<compile_context>
chip_gen: v7x
topology: tpu7x:2x2x1
jax: 0.10.0
libtpu: 0.0.40
codegen_flags: <defaults>
</compile_context>

<pallas_src>
import jax
import jax.numpy as jnp
from jax.experimental import pallas as pl
from jax.experimental.pallas import tpu as pltpu


def _basic_block_kernel(x_ref, w1_ref, b1_ref, w2_ref, b2_ref, out_ref,
                        xpad_ref, ypad_ref):
    """Fused BasicBlock forward for one image (NHWC), stride=1, downsample=None."""
    H, W, _ = out_ref.shape

    def conv3x3(pad_ref, w_ref):
        # im2col: concatenate the 9 shifted windows along channels and contract them against
        # the (9*Cin, Cout) weight matrix in ONE MXU matmul (bf16 inputs, f32 accumulation).
        cols = [pad_ref[kh:kh + H, kw:kw + W, :]
                for kh in range(3) for kw in range(3)]
        patches = jnp.concatenate(cols, axis=-1)                  # (H, W, 9*Cin) bf16
        return jnp.einsum('hwk,kc->hwc', patches, w_ref[...],
                          preferred_element_type=jnp.float32)     # (H, W, Cout) f32

    x = x_ref[...]                                                # (H, W, Cin) f32 (residual)

    # In-kernel halo handling: zero-bordered VMEM scratch, interior overwritten each step.
    xpad_ref[...] = jnp.zeros_like(xpad_ref)
    xpad_ref[1:H + 1, 1:W + 1, :] = x.astype(xpad_ref.dtype)

    # conv1 + (folded) BN1 + ReLU -- intermediate stays in VMEM.
    y = jnp.maximum(conv3x3(xpad_ref, w1_ref) + b1_ref[...], 0.0)
    ypad_ref[...] = jnp.zeros_like(ypad_ref)
    ypad_ref[1:H + 1, 1:W + 1, :] = y.astype(ypad_ref.dtype)

    # conv2 + (folded) BN2 + residual add + ReLU.
    z = conv3x3(ypad_ref, w2_ref) + b2_ref[...] + x
    out_ref[...] = jnp.maximum(z, 0.0)


def _fused_basic_block(x_nhwc, w1_mat, b1, w2_mat, b2):
    N, H, W, Cin = x_nhwc.shape
    Cmid = w1_mat.shape[1]
    Cout = w2_mat.shape[1]
    return pl.pallas_call(
        _basic_block_kernel,
        out_shape=jax.ShapeDtypeStruct((N, H, W, Cout), jnp.float32),
        grid=(N,),
        in_specs=[
            pl.BlockSpec((pl.Squeezed(), H, W, Cin), lambda n: (n, 0, 0, 0)),   # x (f32)
            pl.BlockSpec((9 * Cin, Cmid), lambda n: (0, 0)),                    # w1 (bf16, BN-folded)
            pl.BlockSpec((1, Cmid), lambda n: (0, 0)),                          # b1 (f32)
            pl.BlockSpec((9 * Cmid, Cout), lambda n: (0, 0)),                   # w2 (bf16, BN-folded)
            pl.BlockSpec((1, Cout), lambda n: (0, 0)),                          # b2 (f32)
        ],
        out_specs=pl.BlockSpec((pl.Squeezed(), H, W, Cout), lambda n: (n, 0, 0, 0)),
        scratch_shapes=[
            pltpu.VMEM((H + 2, W + 2, Cin), jnp.bfloat16),    # zero-bordered padded x
            pltpu.VMEM((H + 2, W + 2, Cmid), jnp.bfloat16),   # zero-bordered padded y
        ],
        compiler_params=pltpu.CompilerParams(dimension_semantics=("parallel",)),
    )(x_nhwc, w1_mat, b1, w2_mat, b2)


def _fold_conv_bn(w_oihw, scale):
    """PyTorch OIHW -> (kh, kw, cin)-major (9*Cin, Cout) matrix with BN scale folded in, bf16."""
    cout, cin = w_oihw.shape[0], w_oihw.shape[1]
    w_mat = jnp.transpose(w_oihw, (2, 3, 1, 0)).reshape(9 * cin, cout)
    return (w_mat * scale[None, :]).astype(jnp.bfloat16)


def basic_block_forward(x_nhwc, w1_oihw, w2_oihw, scale1, bias1, scale2, bias2):
    """BasicBlock.forward with downsample=None, stride=1 (BN in eval mode, folded)."""
    w1 = _fold_conv_bn(w1_oihw, scale1)
    w2 = _fold_conv_bn(w2_oihw, scale2)
    b1 = bias1.reshape(1, -1).astype(jnp.float32)
    b2 = bias2.reshape(1, -1).astype(jnp.float32)
    return _fused_basic_block(x_nhwc, w1, b1, w2, b2)


def _reference_basic_block(x_nhwc, w1_mat, b1, w2_mat, b2):
    """Pure-JAX reference using the same folded bf16 weights and f32 accumulation."""
    def conv(a, w_mat):
        cin = a.shape[-1]
        w_hwio = w_mat.reshape(3, 3, cin, -1)
        return jax.lax.conv_general_dilated(
            a.astype(jnp.bfloat16), w_hwio, (1, 1), 'SAME',
            dimension_numbers=('NHWC', 'HWIO', 'NHWC'),
            preferred_element_type=jnp.float32)
    y = jnp.maximum(conv(x_nhwc, w1_mat) + b1, 0.0)
    z = conv(y, w2_mat) + b2 + x_nhwc
    return jnp.maximum(z, 0.0)


if __name__ == "__main__":
    N, C, H, W = 2, 8, 16, 16          # inplanes == planes (downsample=None), stride=1
    key = jax.random.PRNGKey(0)
    ks = jax.random.split(key, 11)

    # PyTorch-convention NCHW input, transposed to NHWC for the kernel.
    x_nchw = jax.random.normal(ks[0], (N, C, H, W), jnp.float32)
    x = jnp.transpose(x_nchw, (0, 2, 3, 1))

    # Conv weights in PyTorch OIHW layout (out, in, 3, 3), deterministic init.
    w1_oihw = 0.1 * jax.random.normal(ks[1], (C, C, 3, 3), jnp.float32)
    w2_oihw = 0.1 * jax.random.normal(ks[2], (C, C, 3, 3), jnp.float32)

    # BatchNorm parameters (eval-mode), folded into per-channel scale/bias.
    eps = 1e-5
    g1 = 1.0 + 0.1 * jax.random.normal(ks[3], (C,), jnp.float32)
    b1 = 0.1 * jax.random.normal(ks[4], (C,), jnp.float32)
    m1 = 0.1 * jax.random.normal(ks[5], (C,), jnp.float32)
    v1 = jnp.abs(jax.random.normal(ks[6], (C,), jnp.float32)) + 0.5
    g2 = 1.0 + 0.1 * jax.random.normal(ks[7], (C,), jnp.float32)
    b2 = 0.1 * jax.random.normal(ks[8], (C,), jnp.float32)
    m2 = 0.1 * jax.random.normal(ks[9], (C,), jnp.float32)
    v2 = jnp.abs(jax.random.normal(ks[10], (C,), jnp.float32)) + 0.5
    scale1 = g1 / jnp.sqrt(v1 + eps)
    bias1 = b1 - m1 * scale1
    scale2 = g2 / jnp.sqrt(v2 + eps)
    bias2 = b2 - m2 * scale2

    out = basic_block_forward(x, w1_oihw, w2_oihw, scale1, bias1, scale2, bias2)
    out = jax.block_until_ready(out)

    # Reference uses the same folded bf16 weights / f32 accumulation as the kernel; the only
    # differences are accumulation order and XLA's own conv lowering, so a loose-but-meaningful
    # tolerance is used (values are O(1)).
    w1_mat = _fold_conv_bn(w1_oihw, scale1)
    w2_mat = _fold_conv_bn(w2_oihw, scale2)
    ref = _reference_basic_block(x, w1_mat, bias1.reshape(1, -1), w2_mat, bias2.reshape(1, -1))
    err = float(jnp.max(jnp.abs(out - ref)))
    assert err < 2e-2, f"mismatch vs reference: {err}"

    print("KERNEL_OK")
</pallas_src>

<mosaic_0001>
module attributes {stable_mosaic.version = 11 : i64} {
  func.func @_basic_block_kernel(%arg0: i32, %arg1: memref<1x16x16x8xf32, #tpu.memory_space<vmem>>, %arg2: memref<72x8xbf16, #tpu.memory_space<vmem>>, %arg3: memref<1x8xf32, #tpu.memory_space<vmem>>, %arg4: memref<72x8xbf16, #tpu.memory_space<vmem>>, %arg5: memref<1x8xf32, #tpu.memory_space<vmem>>, %arg6: memref<1x16x16x8xf32, #tpu.memory_space<vmem>>, %arg7: memref<18x18x8xbf16, #tpu.memory_space<vmem>>, %arg8: memref<18x18x8xbf16, #tpu.memory_space<vmem>>) attributes {dimension_semantics = [#tpu.dimension_semantics<parallel>], iteration_bounds = array<i64: 2>, scalar_prefetch = 0 : i64, scratch_operands = 2 : i64, tpu.core_type = #tpu.core_type<tc>, window_params = [{transform_indices = @transform_0, window_bounds = array<i64: 1, 16, 16, 8>}, {pipeline_mode = #tpu.pipeline_mode<synchronous>, transform_indices = @transform_1, window_bounds = array<i64: 72, 8>}, {pipeline_mode = #tpu.pipeline_mode<synchronous>, transform_indices = @transform_2, window_bounds = array<i64: 1, 8>}, {pipeline_mode = #tpu.pipeline_mode<synchronous>, transform_indices = @transform_3, window_bounds = array<i64: 72, 8>}, {pipeline_mode = #tpu.pipeline_mode<synchronous>, transform_indices = @transform_4, window_bounds = array<i64: 1, 8>}, {transform_indices = @transform_5, window_bounds = array<i64: 1, 16, 16, 8>}]} {
    %c0 = arith.constant 0 : index
    %c0_0 = arith.constant 0 : index
    %c0_1 = arith.constant 0 : index
    %c0_2 = arith.constant 0 : index
    %0 = vector.load %arg1[%c0, %c0_0, %c0_1, %c0_2] : memref<1x16x16x8xf32, #tpu.memory_space<vmem>>, vector<1x16x16x8xf32>
    %1 = vector.shape_cast %0 : vector<1x16x16x8xf32> to vector<16x16x8xf32>
    %cst = arith.constant 0.000000e+00 : bf16
    %2 = vector.broadcast %cst : bf16 to vector<18x18x8xbf16>
    %c0_3 = arith.constant 0 : index
    %c0_4 = arith.constant 0 : index
    %c0_5 = arith.constant 0 : index
    %3 = vector.load %arg7[%c0_3, %c0_4, %c0_5] : memref<18x18x8xbf16, #tpu.memory_space<vmem>>, vector<18x18x8xbf16>
    tpu.vector_store %arg7[%c0_3, %c0_4, %c0_5], %2 {strides = array<i32>} : memref<18x18x8xbf16, #tpu.memory_space<vmem>>, vector<18x18x8xbf16>,
    %4 = arith.truncf %1 : vector<16x16x8xf32> to vector<16x16x8xbf16>
    %c1 = arith.constant 1 : index
    %c1_6 = arith.constant 1 : index
    %c0_7 = arith.constant 0 : index
    %5 = vector.load %arg7[%c1, %c1_6, %c0_7] : memref<18x18x8xbf16, #tpu.memory_space<vmem>>, vector<16x16x8xbf16>
    tpu.vector_store %arg7[%c1, %c1_6, %c0_7], %4 {strides = array<i32>} : memref<18x18x8xbf16, #tpu.memory_space<vmem>>, vector<16x16x8xbf16>,
    %c0_8 = arith.constant 0 : index
    %c0_9 = arith.constant 0 : index
    %c0_10 = arith.constant 0 : index
    %6 = vector.load %arg7[%c0_8, %c0_9, %c0_10] : memref<18x18x8xbf16, #tpu.memory_space<vmem>>, vector<16x16x8xbf16>
    %c0_11 = arith.constant 0 : index
    %c1_12 = arith.constant 1 : index
    %c0_13 = arith.constant 0 : index
    %7 = vector.load %arg7[%c0_11, %c1_12, %c0_13] : memref<18x18x8xbf16, #tpu.memory_space<vmem>>, vector<16x16x8xbf16>
    %c0_14 = arith.constant 0 : index
    %c2 = arith.constant 2 : index
    %c0_15 = arith.constant 0 : index
    %8 = vector.load %arg7[%c0_14, %c2, %c0_15] : memref<18x18x8xbf16, #tpu.memory_space<vmem>>, vector<16x16x8xbf16>
    %c1_16 = arith.constant 1 : index
    %c0_17 = arith.constant 0 : index
    %c0_18 = arith.constant 0 : index
    %9 = vector.load %arg7[%c1_16, %c0_17, %c0_18] : memref<18x18x8xbf16, #tpu.memory_space<vmem>>, vector<16x16x8xbf16>
    %c1_19 = arith.constant 1 : index
    %c1_20 = arith.constant 1 : index
    %c0_21 = arith.constant 0 : index
    %10 = vector.load %arg7[%c1_19, %c1_20, %c0_21] : memref<18x18x8xbf16, #tpu.memory_space<vmem>>, vector<16x16x8xbf16>
    %c1_22 = arith.constant 1 : index
    %c2_23 = arith.constant 2 : index
    %c0_24 = arith.constant 0 : index
    %11 = vector.load %arg7[%c1_22, %c2_23, %c0_24] : memref<18x18x8xbf16, #tpu.memory_space<vmem>>, vector<16x16x8xbf16>
    %c2_25 = arith.constant 2 : index
    %c0_26 = arith.constant 0 : index
    %c0_27 = arith.constant 0 : index
    %12 = vector.load %arg7[%c2_25, %c0_26, %c0_27] : memref<18x18x8xbf16, #tpu.memory_space<vmem>>, vector<16x16x8xbf16>
    %c2_28 = arith.constant 2 : index
    %c1_29 = arith.constant 1 : index
    %c0_30 = arith.constant 0 : index
    %13 = vector.load %arg7[%c2_28, %c1_29, %c0_30] : memref<18x18x8xbf16, #tpu.memory_space<vmem>>, vector<16x16x8xbf16>
    %c2_31 = arith.constant 2 : index
    %c2_32 = arith.constant 2 : index
    %c0_33 = arith.constant 0 : index
    %14 = vector.load %arg7[%c2_31, %c2_32, %c0_33] : memref<18x18x8xbf16, #tpu.memory_space<vmem>>, vector<16x16x8xbf16>
    %15 = tpu.concatenate %6, %7, %8, %9, %10, %11, %12, %13, %14 in 2 : vector<16x16x8xbf16>, vector<16x16x8xbf16>, vector<16x16x8xbf16>, vector<16x16x8xbf16>, vector<16x16x8xbf16>, vector<16x16x8xbf16>, vector<16x16x8xbf16>, vector<16x16x8xbf16>, vector<16x16x8xbf16> -> vector<16x16x72xbf16>
    %c0_34 = arith.constant 0 : index
    %c0_35 = arith.constant 0 : index
    %16 = vector.load %arg2[%c0_34, %c0_35] : memref<72x8xbf16, #tpu.memory_space<vmem>>, vector<72x8xbf16>
    "tpu.trace_start"() <{level = 10 : i32, message = "hwk,kc->hwc"}> : () -> ()
    %cst_36 = arith.constant dense<0.000000e+00> : vector<16x16x8xf32>
    %17 = tpu.matmul %15, %16, %cst_36 {dimension_numbers = #tpu.dot_dimension_numbers<[2], [0], [0, 1], [1], [0, 0, 0, 1, 1, 1], [], []>} : vector<16x16x72xbf16>, vector<72x8xbf16>, vector<16x16x8xf32> -> vector<16x16x8xf32>
    "tpu.trace_stop"() : () -> ()
    %c0_37 = arith.constant 0 : index
    %c0_38 = arith.constant 0 : index
    %18 = vector.load %arg3[%c0_37, %c0_38] : memref<1x8xf32, #tpu.memory_space<vmem>>, vector<1x8xf32>
    %19 = vector.shape_cast %18 : vector<1x8xf32> to vector<1x1x8xf32>
    %20 = vector.broadcast %19 : vector<1x1x8xf32> to vector<16x16x8xf32>
    %21 = arith.addf %17, %20 : vector<16x16x8xf32>
    %cst_39 = arith.constant 0.000000e+00 : f32
    %22 = vector.broadcast %cst_39 : f32 to vector<16x16x8xf32>
    %23 = arith.maximumf %21, %22 : vector<16x16x8xf32>
    %cst_40 = arith.constant 0.000000e+00 : bf16
    %24 = vector.broadcast %cst_40 : bf16 to vector<18x18x8xbf16>
    %c0_41 = arith.constant 0 : index
    %c0_42 = arith.constant 0 : index
    %c0_43 = arith.constant 0 : index
    %25 = vector.load %arg8[%c0_41, %c0_42, %c0_43] : memref<18x18x8xbf16, #tpu.memory_space<vmem>>, vector<18x18x8xbf16>
    tpu.vector_store %arg8[%c0_41, %c0_42, %c0_43], %24 {strides = array<i32>} : memref<18x18x8xbf16, #tpu.memory_space<vmem>>, vector<18x18x8xbf16>,
    %26 = arith.truncf %23 : vector<16x16x8xf32> to vector<16x16x8xbf16>
    %c1_44 = arith.constant 1 : index
    %c1_45 = arith.constant 1 : index
    %c0_46 = arith.constant 0 : index
    %27 = vector.load %arg8[%c1_44, %c1_45, %c0_46] : memref<18x18x8xbf16, #tpu.memory_space<vmem>>, vector<16x16x8xbf16>
    tpu.vector_store %arg8[%c1_44, %c1_45, %c0_46], %26 {strides = array<i32>} : memref<18x18x8xbf16, #tpu.memory_space<vmem>>, vector<16x16x8xbf16>,
    %c0_47 = arith.constant 0 : index
    %c0_48 = arith.constant 0 : index
    %c0_49 = arith.constant 0 : index
    %28 = vector.load %arg8[%c0_47, %c0_48, %c0_49] : memref<18x18x8xbf16, #tpu.memory_space<vmem>>, vector<16x16x8xbf16>
    %c0_50 = arith.constant 0 : index
    %c1_51 = arith.constant 1 : index
    %c0_52 = arith.constant 0 : index
    %29 = vector.load %arg8[%c0_50, %c1_51, %c0_52] : memref<18x18x8xbf16, #tpu.memory_space<vmem>>, vector<16x16x8xbf16>
    %c0_53 = arith.constant 0 : index
    %c2_54 = arith.constant 2 : index
    %c0_55 = arith.constant 0 : index
    %30 = vector.load %arg8[%c0_53, %c2_54, %c0_55] : memref<18x18x8xbf16, #tpu.memory_space<vmem>>, vector<16x16x8xbf16>
    %c1_56 = arith.constant 1 : index
    %c0_57 = arith.constant 0 : index
    %c0_58 = arith.constant 0 : index
    %31 = vector.load %arg8[%c1_56, %c0_57, %c0_58] : memref<18x18x8xbf16, #tpu.memory_space<vmem>>, vector<16x16x8xbf16>
    %c1_59 = arith.constant 1 : index
    %c1_60 = arith.constant 1 : index
    %c0_61 = arith.constant 0 : index
    %32 = vector.load %arg8[%c1_59, %c1_60, %c0_61] : memref<18x18x8xbf16, #tpu.memory_space<vmem>>, vector<16x16x8xbf16>
    %c1_62 = arith.constant 1 : index
    %c2_63 = arith.constant 2 : index
    %c0_64 = arith.constant 0 : index
    %33 = vector.load %arg8[%c1_62, %c2_63, %c0_64] : memref<18x18x8xbf16, #tpu.memory_space<vmem>>, vector<16x16x8xbf16>
    %c2_65 = arith.constant 2 : index
    %c0_66 = arith.constant 0 : index
    %c0_67 = arith.constant 0 : index
    %34 = vector.load %arg8[%c2_65, %c0_66, %c0_67] : memref<18x18x8xbf16, #tpu.memory_space<vmem>>, vector<16x16x8xbf16>
    %c2_68 = arith.constant 2 : index
    %c1_69 = arith.constant 1 : index
    %c0_70 = arith.constant 0 : index
    %35 = vector.load %arg8[%c2_68, %c1_69, %c0_70] : memref<18x18x8xbf16, #tpu.memory_space<vmem>>, vector<16x16x8xbf16>
    %c2_71 = arith.constant 2 : index
    %c2_72 = arith.constant 2 : index
    %c0_73 = arith.constant 0 : index
    %36 = vector.load %arg8[%c2_71, %c2_72, %c0_73] : memref<18x18x8xbf16, #tpu.memory_space<vmem>>, vector<16x16x8xbf16>
    %37 = tpu.concatenate %28, %29, %30, %31, %32, %33, %34, %35, %36 in 2 : vector<16x16x8xbf16>, vector<16x16x8xbf16>, vector<16x16x8xbf16>, vector<16x16x8xbf16>, vector<16x16x8xbf16>, vector<16x16x8xbf16>, vector<16x16x8xbf16>, vector<16x16x8xbf16>, vector<16x16x8xbf16> -> vector<16x16x72xbf16>
    %c0_74 = arith.constant 0 : index
    %c0_75 = arith.constant 0 : index
    %38 = vector.load %arg4[%c0_74, %c0_75] : memref<72x8xbf16, #tpu.memory_space<vmem>>, vector<72x8xbf16>
    "tpu.trace_start"() <{level = 10 : i32, message = "hwk,kc->hwc"}> : () -> ()
    %cst_76 = arith.constant dense<0.000000e+00> : vector<16x16x8xf32>
    %39 = tpu.matmul %37, %38, %cst_76 {dimension_numbers = #tpu.dot_dimension_numbers<[2], [0], [0, 1], [1], [0, 0, 0, 1, 1, 1], [], []>} : vector<16x16x72xbf16>, vector<72x8xbf16>, vector<16x16x8xf32> -> vector<16x16x8xf32>
    "tpu.trace_stop"() : () -> ()
    %c0_77 = arith.constant 0 : index
    %c0_78 = arith.constant 0 : index
    %40 = vector.load %arg5[%c0_77, %c0_78] : memref<1x8xf32, #tpu.memory_space<vmem>>, vector<1x8xf32>
    %41 = vector.shape_cast %40 : vector<1x8xf32> to vector<1x1x8xf32>
    %42 = vector.broadcast %41 : vector<1x1x8xf32> to vector<16x16x8xf32>
    %43 = arith.addf %39, %42 : vector<16x16x8xf32>
    %44 = arith.addf %43, %1 : vector<16x16x8xf32>
    %cst_79 = arith.constant 0.000000e+00 : f32
    %45 = vector.broadcast %cst_79 : f32 to vector<16x16x8xf32>
    %46 = arith.maximumf %44, %45 : vector<16x16x8xf32>
    %c0_80 = arith.constant 0 : index
    %c0_81 = arith.constant 0 : index
    %c0_82 = arith.constant 0 : index
    %c0_83 = arith.constant 0 : index
    %47 = vector.load %arg6[%c0_80, %c0_81, %c0_82, %c0_83] : memref<1x16x16x8xf32, #tpu.memory_space<vmem>>, vector<1x16x16x8xf32>
    %48 = vector.shape_cast %47 : vector<1x16x16x8xf32> to vector<16x16x8xf32>
    %49 = vector.shape_cast %46 : vector<16x16x8xf32> to vector<1x16x16x8xf32>
    tpu.vector_store %arg6[%c0_80, %c0_81, %c0_82, %c0_83], %49 {strides = array<i32>} : memref<1x16x16x8xf32, #tpu.memory_space<vmem>>, vector<1x16x16x8xf32>,
    return
  }
  func.func @transform_0(%arg0: i32) -> (i32, i32, i32, i32) {
    %c0_i32 = arith.constant 0 : i32
    %c0_i32_0 = arith.constant 0 : i32
    %c0_i32_1 = arith.constant 0 : i32
    %c0_i32_2 = arith.constant 0 : i32
    return %arg0, %c0_i32, %c0_i32_0, %c0_i32_1 : i32, i32, i32, i32
  }
  func.func @transform_1(%arg0: i32) -> (i32, i32) {
    %c0_i32 = arith.constant 0 : i32
    %c0_i32_0 = arith.constant 0 : i32
    %c0_i32_1 = arith.constant 0 : i32
    return %c0_i32, %c0_i32_0 : i32, i32
  }
  func.func @transform_2(%arg0: i32) -> (i32, i32) {
    %c0_i32 = arith.constant 0 : i32
    %c0_i32_0 = arith.constant 0 : i32
    %c0_i32_1 = arith.constant 0 : i32
    return %c0_i32, %c0_i32_0 : i32, i32
  }
  func.func @transform_3(%arg0: i32) -> (i32, i32) {
    %c0_i32 = arith.constant 0 : i32
    %c0_i32_0 = arith.constant 0 : i32
    %c0_i32_1 = arith.constant 0 : i32
    return %c0_i32, %c0_i32_0 : i32, i32
  }
  func.func @transform_4(%arg0: i32) -> (i32, i32) {
    %c0_i32 = arith.constant 0 : i32
    %c0_i32_0 = arith.constant 0 : i32
    %c0_i32_1 = arith.constant 0 : i32
    return %c0_i32, %c0_i32_0 : i32, i32
  }
  func.func @transform_5(%arg0: i32) -> (i32, i32, i32, i32) {
    %c0_i32 = arith.constant 0 : i32
    %c0_i32_0 = arith.constant 0 : i32
    %c0_i32_1 = arith.constant 0 : i32
    %c0_i32_2 = arith.constant 0 : i32
    return %arg0, %c0_i32, %c0_i32_0, %c0_i32_1 : i32, i32, i32, i32
  }
}

</mosaic_0001>

<llo_original>
// kernel: tpu_custom_call.1
$region0: #{tpu_custom_call.1}
  #allocation0 [shape = 'u32[]', space=smem, size = 0x4, offset = 0x4, fixed_abs, tag = 'smem constant byte address 0x4 - core index']
  #allocation1 [shape = 'u32[144,128]{1,0:T(1,128)}', space=vmem, size = 0x12000, scoped, tag = 'internal scratch']
  #allocation2 [shape = 'bf16[18,18,8]{2,1,0:T(8,128)(2,1)}', space=vmem, size = 0x1b000, scoped, tag = 'scratch operand']
  #allocation3 [shape = 'bf16[18,18,8]{2,1,0:T(8,128)(2,1)}', space=vmem, size = 0x1b000, scoped, tag = 'scratch operand']
  %s0 = inlined_call_operand.vmem [shape: f32[2,16,16,8], index: 0, kind: input, shape index: {}]
  %s1 = inlined_call_operand.vmem [shape: bf16[72,8], index: 1, kind: input, shape index: {}]
  %s2 = inlined_call_operand.vmem [shape: f32[1,8], index: 2, kind: input, shape index: {}]
  %s3 = inlined_call_operand.vmem [shape: bf16[72,8], index: 3, kind: input, shape index: {}]
  %s4 = inlined_call_operand.vmem [shape: f32[1,8], index: 4, kind: input, shape index: {}]
  %s5 = inlined_call_operand.vmem [shape: f32[2,16,16,8], index: 5, kind: output, shape index: {}]
  %s6 = sld [smem:[#allocation0]]
  $region53: #{tpu_custom_call.1} parent=0
    _
  %s8 = ssub.s32 1, %s6
  %s9 = scalar_select 0, %s8, %s6
  loop: start=0, step=1, limit=4
  $region2: #{tpu_custom_call.1} parent=0 // loop_pre_header
    _
  $region3: #{tpu_custom_call.1} parent=0 // loop_header
    %s11 = sphi 0, %s15
    %p12 = scmp.ge.s32.totalorder %s11, 4
    %s21 = sphi 0, %s23
    %s24 = sphi 0, %s21
    %s25 = sphi 0, %s24
    %s41 = sphi 0, %s25
    %s45 = sphi 0, %s45
    %s47 = sphi 0, %s45
    %s48 = sphi 0, %s47
    %s62 = sphi 0, %s48
    %s66 = sphi 0, %s66
    %s68 = sphi 0, %s66
    %s69 = sphi 0, %s68
    %s83 = sphi 0, %s69
    %s87 = sphi 0, %s87
    %s89 = sphi 0, %s87
    %s90 = sphi 0, %s89
    %s104 = sphi 0, %s90
    %s108 = sphi 0, %s108
    %s110 = sphi 0, %s108
    %s111 = sphi 0, %s110
    %s125 = sphi 0, %s111
    %s131 = sphi 0, %s133
    %s134 = sphi 0, %s131
    %s135 = sphi 0, %s134
    %s151 = sphi 0, %s135
  $region4: #{tpu_custom_call.1} parent=0 // loop_header_branch
    %14 = sbr.rel (%p12) target = $region8
  $region5: #{tpu_custom_call.1} parent=0 // loop_body
    %s16 = ssub.s32 %s11, 1
    %s17 = ssub.s32 %s11, 2
    %s18 = sadd.s32 %s11, 1
    %s19 = ssub.s32 %s11, %s18
    %p20 = scmp.eq.s32.totalorder %s19, 0
    %s22 = sadd.s32 %s21, 1
    %s23 = scalar_select %p20, %s21, %s22
    %p26 = pneg %p20
    %p27 = scmp.eq.s32.totalorder %s11, 1
    %p28 = por %p26, %p27
    %p29 = scmp.ne.s32.totalorder %s21, %s24
    %p30 = scmp.eq.s32.totalorder %s11, 0
    %p31 = por %p29, %p30
    %p32 = scmp.ne.s32.totalorder %s21, %s24
    %p33 = scmp.eq.s32.totalorder %s16, 1
    %p34 = por %p32, %p33
    %p35 = scmp.ne.s32.totalorder %s24, %s25
    %p36 = scmp.eq.s32.totalorder %s16, 0
    %p37 = por %p35, %p36
    %p38 = scmp.ne.s32.totalorder %s24, %s25
    %p39 = scmp.eq.s32.totalorder %s17, 1
    %p40 = por %p38, %p39
    %p42 = scmp.ne.s32.totalorder %s25, %s41
    %p43 = scmp.eq.s32.totalorder %s17, 0
    %p44 = por %p42, %p43
    %s46 = sadd.s32 %s45, 1
    %p49 = scmp.eq.s32.totalorder %s11, 1
    %p50 = scmp.ne.s32.totalorder %s45, %s47
    %p51 = scmp.eq.s32.totalorder %s11, 0
    %p52 = por %p50, %p51
    %p53 = scmp.ne.s32.totalorder %s45, %s47
    %p54 = scmp.eq.s32.totalorder %s16, 1
    %p55 = por %p53, %p54
    %p56 = scmp.ne.s32.totalorder %s47, %s48
    %p57 = scmp.eq.s32.totalorder %s16, 0
    %p58 = por %p56, %p57
    %p59 = scmp.ne.s32.totalorder %s47, %s48
    %p60 = scmp.eq.s32.totalorder %s17, 1
    %p61 = por %p59, %p60
    %p63 = scmp.ne.s32.totalorder %s48, %s62
    %p64 = scmp.eq.s32.totalorder %s17, 0
    %p65 = por %p63, %p64
    %s67 = sadd.s32 %s66, 1
    %p70 = scmp.eq.s32.totalorder %s11, 1
    %p71 = scmp.ne.s32.totalorder %s66, %s68
    %p72 = scmp.eq.s32.totalorder %s11, 0
    %p73 = por %p71, %p72
    %p74 = scmp.ne.s32.totalorder %s66, %s68
    %p75 = scmp.eq.s32.totalorder %s16, 1
    %p76 = por %p74, %p75
    %p77 = scmp.ne.s32.totalorder %s68, %s69
    %p78 = scmp.eq.s32.totalorder %s16, 0
    %p79 = por %p77, %p78
    %p80 = scmp.ne.s32.totalorder %s68, %s69
    %p81 = scmp.eq.s32.totalorder %s17, 1
    %p82 = por %p80, %p81
    %p84 = scmp.ne.s32.totalorder %s69, %s83
    %p85 = scmp.eq.s32.totalorder %s17, 0
    %p86 = por %p84, %p85
    %s88 = sadd.s32 %s87, 1
    %p91 = scmp.eq.s32.totalorder %s11, 1
    %p92 = scmp.ne.s32.totalorder %s87, %s89
    %p93 = scmp.eq.s32.totalorder %s11, 0
    %p94 = por %p92, %p93
    %p95 = scmp.ne.s32.totalorder %s87, %s89
    %p96 = scmp.eq.s32.totalorder %s16, 1
    %p97 = por %p95, %p96
    %p98 = scmp.ne.s32.totalorder %s89, %s90
    %p99 = scmp.eq.s32.totalorder %s16, 0
    %p100 = por %p98, %p99
    %p101 = scmp.ne.s32.totalorder %s89, %s90
    %p102 = scmp.eq.s32.totalorder %s17, 1
    %p103 = por %p101, %p102
    %p105 = scmp.ne.s32.totalorder %s90, %s104
    %p106 = scmp.eq.s32.totalorder %s17, 0
    %p107 = por %p105, %p106
    %s109 = sadd.s32 %s108, 1
    %p112 = scmp.eq.s32.totalorder %s11, 1
    %p113 = scmp.ne.s32.totalorder %s108, %s110
    %p114 = scmp.eq.s32.totalorder %s11, 0
    %p115 = por %p113, %p114
    %p116 = scmp.ne.s32.totalorder %s108, %s110
    %p117 = scmp.eq.s32.totalorder %s16, 1
    %p118 = por %p116, %p117
    %p119 = scmp.ne.s32.totalorder %s110, %s111
    %p120 = scmp.eq.s32.totalorder %s16, 0
    %p121 = por %p119, %p120
    %p122 = scmp.ne.s32.totalorder %s110, %s111
    %p123 = scmp.eq.s32.totalorder %s17, 1
    %p124 = por %p122, %p123
    %p126 = scmp.ne.s32.totalorder %s111, %s125
    %p127 = scmp.eq.s32.totalorder %s17, 0
    %p128 = por %p126, %p127
    %s129 = ssub.s32 %s11, %s18
    %p130 = scmp.eq.s32.totalorder %s129, 0
    %s132 = sadd.s32 %s131, 1
    %s133 = scalar_select %p130, %s131, %s132
    %p136 = pneg %p130
    %p137 = scmp.eq.s32.totalorder %s11, 1
    %p138 = por %p136, %p137
    %p139 = scmp.ne.s32.totalorder %s131, %s134
    %p140 = scmp.eq.s32.totalorder %s11, 0
    %p141 = por %p139, %p140
    %p142 = scmp.ne.s32.totalorder %s131, %s134
    %p143 = scmp.eq.s32.totalorder %s16, 1
    %p144 = por %p142, %p143
    %p145 = scmp.ne.s32.totalorder %s134, %s135
    %p146 = scmp.eq.s32.totalorder %s16, 0
    %p147 = por %p145, %p146
    %p148 = scmp.ne.s32.totalorder %s134, %s135
    %p149 = scmp.eq.s32.totalorder %s17, 1
    %p150 = por %p148, %p149
    %p152 = scmp.ne.s32.totalorder %s135, %s151
    %p153 = scmp.eq.s32.totalorder %s17, 0
    %p154 = por %p152, %p153
    %p155 = scmp.le.s32.totalorder 1, %s11
    %p156 = scmp.lt.s32.totalorder %s11, 3
    %p157 = pnand %p155, %p156
    %p158 = pneg %p157
    // Predicated region
    $region9: #{tpu_custom_call.1} parent=5 // pred_check
      _
    $region10: #{tpu_custom_call.1} parent=5 // pred_check_branch
      %160 = sbr.rel (%p157) target = $region12
    $region11: #{tpu_custom_call.1} parent=5 // pred_region
      %s161 = ssub.s32 %s11, 1
      // Predicated region
      $region13: #{tpu_custom_call.1} parent=11 // pred_check
        %p162 = pneg %p58
      $region14: #{tpu_custom_call.1} parent=11 // pred_check_branch
        %164 = sbr.rel (%p162) target = $region16
      $region15: #{tpu_custom_call.1} parent=11 // pred_region
        _
      $region16: #{tpu_custom_call.1} parent=11 // pred_fallthru
        _
      // Predicated region
      $region17: #{tpu_custom_call.1} parent=11 // pred_check
        %p165 = pneg %p79
      $region18: #{tpu_custom_call.1} parent=11 // pred_check_branch
        %167 = sbr.rel (%p165) target = $region20
      $region19: #{tpu_custom_call.1} parent=11 // pred_region
        _
      $region20: #{tpu_custom_call.1} parent=11 // pred_fallthru
        _
      // Predicated region
      $region21: #{tpu_custom_call.1} parent=11 // pred_check
        %p168 = pneg %p100
      $region22: #{tpu_custom_call.1} parent=11 // pred_check_branch
        %170 = sbr.rel (%p168) target = $region24
      $region23: #{tpu_custom_call.1} parent=11 // pred_region
        _
      $region24: #{tpu_custom_call.1} parent=11 // pred_fallthru
        _
      // Predicated region
      $region25: #{tpu_custom_call.1} parent=11 // pred_check
        %p171 = pneg %p121
      $region26: #{tpu_custom_call.1} parent=11 // pred_check_branch
        %173 = sbr.rel (%p171) target = $region28
      $region27: #{tpu_custom_call.1} parent=11 // pred_region
        _
      $region28: #{tpu_custom_call.1} parent=11 // pred_fallthru
        _
    $region12: #{tpu_custom_call.1} parent=5 // pred_fallthru
      _
    %p174 = scmp.lt.s32.totalorder %s11, 2
    // Predicated region
    $region29: #{tpu_custom_call.1} parent=5 // pred_check
      %p175 = pneg %p174
    $region30: #{tpu_custom_call.1} parent=5 // pred_check_branch
      %177 = sbr.rel (%p175) target = $region32
    $region31: #{tpu_custom_call.1} parent=5 // pred_region
      // Predicated region
      $region33: #{tpu_custom_call.1} parent=31 // pred_check
        %p178 = pneg %p31
      $region34: #{tpu_custom_call.1} parent=31 // pred_check_branch
        %180 = sbr.rel (%p178) target = $region36
      $region35: #{tpu_custom_call.1} parent=31 // pred_region
        %p181 = scmp.lt.s32.totalorder %s11, 1
        %s182 = scalar_select %p181, %s11, 1
        %s183 = smul.addr %s182, 32
        %s184 = smul.addr %s183, 8
        %s185 = scalar_lea.vmem %s0, %s184
      $region36: #{tpu_custom_call.1} parent=31 // pred_fallthru
        _
    $region32: #{tpu_custom_call.1} parent=5 // pred_fallthru
      _
    %p186 = scmp.le.s32.totalorder 1, %s11
    %p187 = scmp.lt.s32.totalorder %s11, 3
    %p188 = pnand %p186, %p187
    %p189 = pneg %p188
    // Predicated region
    $region37: #{tpu_custom_call.1} parent=5 // pred_check
      _
    $region38: #{tpu_custom_call.1} parent=5 // pred_check_branch
      %191 = sbr.rel (%p188) target = $region40
    $region39: #{tpu_custom_call.1} parent=5 // pred_region
      %s192 = ssub.s32 %s11, 1
      %p193 = scmp.lt.s32.totalorder %s16, 1
      %s194 = scalar_select %p193, %s16, 1
      %s195 = smul.addr %s194, 32
      %s196 = smul.addr %s195, 8
      %s197 = scalar_lea.vmem %s0, %s196
      %p198 = pneg %p37
      %p199 = pneg %p34
      %p200 = pneg %p58
      %p201 = pneg %p55
      %p202 = pneg %p79
      %p203 = pneg %p76
      %p204 = pneg %p100
      %p205 = pneg %p97
      %p206 = pneg %p121
      %p207 = pneg %p118
      %p208 = pneg %p147
      %p209 = pneg %p144
      %p210 = scmp.lt.s32.totalorder %s16, 1
      %s211 = scalar_select %p210, %s16, 1
      %s212 = smul.addr %s211, 32
      %s213 = smul.addr %s212, 8
      %s214 = scalar_lea.vmem %s5, %s213
      %p215 = scmp.lt.s32.totalorder %s16, 1
      %s216 = scalar_select %p215, %s16, 1
      %s217 = smul.addr %s216, 32
      %s218 = smul.addr %s217, 8
      %s219 = scalar_lea.vmem %s0, %s218
      %p220 = scmp.lt.s32.totalorder %s16, 1
      %s221 = scalar_select %p220, %s16, 1
      %s222 = smul.addr %s221, 32
      %s223 = smul.addr %s222, 8
      %s224 = scalar_lea.vmem %s5, %s223
      %v226 = vld [vmem:[%s219] sm:$0xff]
      %v227 = vld [vmem:[%s219 + $0x8] sm:$0xff]
      %v228 = vld [vmem:[%s219 + $0x10] sm:$0xff]
      %v229 = vld [vmem:[%s219 + $0x18] sm:$0xff]
      %v230 = vld [vmem:[%s219 + $0x20] sm:$0xff]
      %v231 = vld [vmem:[%s219 + $0x28] sm:$0xff]
      %v232 = vld [vmem:[%s219 + $0x30] sm:$0xff]
      %v233 = vld [vmem:[%s219 + $0x38] sm:$0xff]
      %v234 = vld [vmem:[%s219 + $0x40] sm:$0xff]
      %v235 = vld [vmem:[%s219 + $0x48] sm:$0xff]
      %v236 = vld [vmem:[%s219 + $0x50] sm:$0xff]
      %v237 = vld [vmem:[%s219 + $0x58] sm:$0xff]
      %v238 = vld [vmem:[%s219 + $0x60] sm:$0xff]
      %v239 = vld [vmem:[%s219 + $0x68] sm:$0xff]
      %v240 = vld [vmem:[%s219 + $0x70] sm:$0xff]
      %v241 = vld [vmem:[%s219 + $0x78] sm:$0xff]
      %v242 = vld [vmem:[%s219 + $0x80] sm:$0xff]
      %v243 = vld [vmem:[%s219 + $0x88] sm:$0xff]
      %v244 = vld [vmem:[%s219 + $0x90] sm:$0xff]
      %v245 = vld [vmem:[%s219 + $0x98] sm:$0xff]
      %v246 = vld [vmem:[%s219 + $0xa0] sm:$0xff]
      %v247 = vld [vmem:[%s219 + $0xa8] sm:$0xff]
      %v248 = vld [vmem:[%s219 + $0xb0] sm:$0xff]
      %v249 = vld [vmem:[%s219 + $0xb8] sm:$0xff]
      %v250 = vld [vmem:[%s219 + $0xc0] sm:$0xff]
      %v251 = vld [vmem:[%s219 + $0xc8] sm:$0xff]
      %v252 = vld [vmem:[%s219 + $0xd0] sm:$0xff]
      %v253 = vld [vmem:[%s219 + $0xd8] sm:$0xff]
      %v254 = vld [vmem:[%s219 + $0xe0] sm:$0xff]
      %v255 = vld [vmem:[%s219 + $0xe8] sm:$0xff]
      %v256 = vld [vmem:[%s219 + $0xf0] sm:$0xff]
      %v257 = vld [vmem:[%s219 + $0xf8] sm:$0xff]
      %vm258 = vcmask 60416
      %259 = vst.msk [vmem:[#allocation2] sm:$0xf] %vm258, 0
      %260 = vst.msk [vmem:[#allocation2 + $0x4] sm:$0xf] %vm258, 0
      %vm261 = vcmask 57344
      %262 = vst.msk [vmem:[#allocation2 + $0x8] sm:$0x1] %vm261, 0
      %263 = vst.msk [vmem:[#allocation2 + $0xc] sm:$0xf] %vm258, 0
      %264 = vst.msk [vmem:[#allocation2 + $0x10] sm:$0xf] %vm258, 0
      %265 = vst.msk [vmem:[#allocation2 + $0x14] sm:$0x1] %vm261, 0
      %266 = vst.msk [vmem:[#allocation2 + $0x18] sm:$0xf] %vm258, 0
      %267 = vst.msk [vmem:[#allocation2 + $0x1c] sm:$0xf] %vm258, 0
      %268 = vst.msk [vmem:[#allocation2 + $0x20] sm:$0x1] %vm261, 0
      %269 = vst.msk [vmem:[#allocation2 + $0x24] sm:$0xf] %vm258, 0
      %270 = vst.msk [vmem:[#allocation2 + $0x28] sm:$0xf] %vm258, 0
      %271 = vst.msk [vmem:[#allocation2 + $0x2c] sm:$0x1] %vm261, 0
      %272 = vst.msk [vmem:[#allocation2 + $0x30] sm:$0xf] %vm258, 0
      %273 = vst.msk [vmem:[#allocation2 + $0x34] sm:$0xf] %vm258, 0
      %274 = vst.msk [vmem:[#allocation2 + $0x38] sm:$0x1] %vm261, 0
      %275 = vst.msk [vmem:[#allocation2 + $0x3c] sm:$0xf] %vm258, 0
      %276 = vst.msk [vmem:[#allocation2 + $0x40] sm:$0xf] %vm258, 0
      %277 = vst.msk [vmem:[#allocation2 + $0x44] sm:$0x1] %vm261, 0
      %278 = vst.msk [vmem:[#allocation2 + $0x48] sm:$0xf] %vm258, 0
      %279 = vst.msk [vmem:[#allocation2 + $0x4c] sm:$0xf] %vm258, 0
      %280 = vst.msk [vmem:[#allocation2 + $0x50] sm:$0x1] %vm261, 0
      %281 = vst.msk [vmem:[#allocation2 + $0x54] sm:$0xf] %vm258, 0
      %282 = vst.msk [vmem:[#allocation2 + $0x58] sm:$0xf] %vm258, 0
      %283 = vst.msk [vmem:[#allocation2 + $0x5c] sm:$0x1] %vm261, 0
      %284 = vst.msk [vmem:[#allocation2 + $0x60] sm:$0xf] %vm258, 0
      %285 = vst.msk [vmem:[#allocation2 + $0x64] sm:$0xf] %vm258, 0
      %286 = vst.msk [vmem:[#allocation2 + $0x68] sm:$0x1] %vm261, 0
      %287 = vst.msk [vmem:[#allocation2 + $0x6c] sm:$0xf] %vm258, 0
      %288 = vst.msk [vmem:[#allocation2 + $0x70] sm:$0xf] %vm258, 0
      %289 = vst.msk [vmem:[#allocation2 + $0x74] sm:$0x1] %vm261, 0
      %290 = vst.msk [vmem:[#allocation2 + $0x78] sm:$0xf] %vm258, 0
      %291 = vst.msk [vmem:[#allocation2 + $0x7c] sm:$0xf] %vm258, 0
      %292 = vst.msk [vmem:[#allocation2 + $0x80] sm:$0x1] %vm261, 0
      %293 = vst.msk [vmem:[#allocation2 + $0x84] sm:$0xf] %vm258, 0
      %294 = vst.msk [vmem:[#allocation2 + $0x88] sm:$0xf] %vm258, 0
      %295 = vst.msk [vmem:[#allocation2 + $0x8c] sm:$0x1] %vm261, 0
      %296 = vst.msk [vmem:[#allocation2 + $0x90] sm:$0xf] %vm258, 0
      %297 = vst.msk [vmem:[#allocation2 + $0x94] sm:$0xf] %vm258, 0
      %298 = vst.msk [vmem:[#allocation2 + $0x98] sm:$0x1] %vm261, 0
      %299 = vst.msk [vmem:[#allocation2 + $0x9c] sm:$0xf] %vm258, 0
      %300 = vst.msk [vmem:[#allocation2 + $0xa0] sm:$0xf] %vm258, 0
      %301 = vst.msk [vmem:[#allocation2 + $0xa4] sm:$0x1] %vm261, 0
      %302 = vst.msk [vmem:[#allocation2 + $0xa8] sm:$0xf] %vm258, 0
      %303 = vst.msk [vmem:[#allocation2 + $0xac] sm:$0xf] %vm258, 0
      %304 = vst.msk [vmem:[#allocation2 + $0xb0] sm:$0x1] %vm261, 0
      %305 = vst.msk [vmem:[#allocation2 + $0xb4] sm:$0xf] %vm258, 0
      %306 = vst.msk [vmem:[#allocation2 + $0xb8] sm:$0xf] %vm258, 0
      %307 = vst.msk [vmem:[#allocation2 + $0xbc] sm:$0x1] %vm261, 0
      %308 = vst.msk [vmem:[#allocation2 + $0xc0] sm:$0xf] %vm258, 0
      %309 = vst.msk [vmem:[#allocation2 + $0xc4] sm:$0xf] %vm258, 0
      %310 = vst.msk [vmem:[#allocation2 + $0xc8] sm:$0x1] %vm261, 0
      %311 = vst.msk [vmem:[#allocation2 + $0xcc] sm:$0xf] %vm258, 0
      %312 = vst.msk [vmem:[#allocation2 + $0xd0] sm:$0xf] %vm258, 0
      %313 = vst.msk [vmem:[#allocation2 + $0xd4] sm:$0x1] %vm261, 0
      %v314 = vpack.c.bf16 %v227, %v226
      %v315 = vpack.c.bf16 %v229, %v228
      %v316 = vpack.c.bf16 %v231, %v230
      %v317 = vpack.c.bf16 %v233, %v232
      %v318 = vpack.c.bf16 %v235, %v234
      %v319 = vpack.c.bf16 %v237, %v236
      %v320 = vpack.c.bf16 %v239, %v238
      %v321 = vpack.c.bf16 %v241, %v240
      %v322 = vpack.c.bf16 %v243, %v242
      %v323 = vpack.c.bf16 %v245, %v244
      %v324 = vpack.c.bf16 %v247, %v246
      %v325 = vpack.c.bf16 %v249, %v248
      %v326 = vpack.c.bf16 %v251, %v250
      %v327 = vpack.c.bf16 %v253, %v252
      %v328 = vpack.c.bf16 %v255, %v254
      %v329 = vpack.c.bf16 %v257, %v256
      %v346 = vunpack.c.l.b16 %v314
      %v347 = vunpack.c.h.b16 %v314
      %v348 = vunpack.c.l.b16 %v315
      %v349 = vunpack.c.h.b16 %v315
      %v350 = vunpack.c.l.b16 %v316
      %v351 = vunpack.c.h.b16 %v316
      %v352 = vunpack.c.l.b16 %v317
      %v353 = vunpack.c.h.b16 %v317
      %v354 = vunpack.c.l.b16 %v318
      %v355 = vunpack.c.h.b16 %v318
      %v356 = vunpack.c.l.b16 %v319
      %v357 = vunpack.c.h.b16 %v319
      %v358 = vunpack.c.l.b16 %v320
      %v359 = vunpack.c.h.b16 %v320
      %v360 = vunpack.c.l.b16 %v321
      %v361 = vunpack.c.h.b16 %v321
      %v362 = vunpack.c.l.b16 %v322
      %v363 = vunpack.c.h.b16 %v322
      %v364 = vunpack.c.l.b16 %v323
      %v365 = vunpack.c.h.b16 %v323
      %v366 = vunpack.c.l.b16 %v324
      %v367 = vunpack.c.h.b16 %v324
      %v368 = vunpack.c.l.b16 %v325
      %v369 = vunpack.c.h.b16 %v325
      %v370 = vunpack.c.l.b16 %v326
      %v371 = vunpack.c.h.b16 %v326
      %v372 = vunpack.c.l.b16 %v327
      %v373 = vunpack.c.h.b16 %v327
      %v374 = vunpack.c.l.b16 %v328
      %v375 = vunpack.c.h.b16 %v328
      %v376 = vunpack.c.l.b16 %v329
      %v377 = vunpack.c.h.b16 %v329
      %v378 = vpack.c.b16 %v346, %v346
      %v379 = vpack.c.b16 %v347, %v347
      %v380 = vpack.c.b16 %v348, %v348
      %v381 = vpack.c.b16 %v349, %v349
      %v382 = vpack.c.b16 %v350, %v350
      %v383 = vpack.c.b16 %v351, %v351
      %v384 = vpack.c.b16 %v352, %v352
      %v385 = vpack.c.b16 %v353, %v353
      %v386 = vpack.c.b16 %v354, %v354
      %v387 = vpack.c.b16 %v355, %v355
      %v388 = vpack.c.b16 %v356, %v356
      %v389 = vpack.c.b16 %v357, %v357
      %v390 = vpack.c.b16 %v358, %v358
      %v391 = vpack.c.b16 %v359, %v359
      %v392 = vpack.c.b16 %v360, %v360
      %v393 = vpack.c.b16 %v361, %v361
      %v394 = vpack.c.b16 %v362, %v362
      %v395 = vpack.c.b16 %v363, %v363
      %v396 = vpack.c.b16 %v364, %v364
      %v397 = vpack.c.b16 %v365, %v365
      %v398 = vpack.c.b16 %v366, %v366
      %v399 = vpack.c.b16 %v367, %v367
      %v400 = vpack.c.b16 %v368, %v368
      %v401 = vpack.c.b16 %v369, %v369
      %v402 = vpack.c.b16 %v370, %v370
      %v403 = vpack.c.b16 %v371, %v371
      %v404 = vpack.c.b16 %v372, %v372
      %v405 = vpack.c.b16 %v373, %v373
      %v406 = vpack.c.b16 %v374, %v374
      %v407 = vpack.c.b16 %v375, %v375
      %v408 = vpack.c.b16 %v376, %v376
      %v409 = vpack.c.b16 %v377, %v377
      %vm410 = vsmask.f32 256
      %vm411 = vsmask.f32 4368
      %vm412 = vmor %vm410, %vm411
      %v414 = vshrl.u32 %v378, 16
      %v416 = vrot.slane %v414, 7
      %v417 = vshll.u32 %v378, 16
      %v419 = vor.u32 %v416, %v417
      %v420 = vrot.slane %v416, 4
      %v422 = vshrl.u32 %v379, 16
      %v424 = vrot.slane %v422, 7
      %v425 = vshll.u32 %v379, 16
      %v427 = vor.u32 %v424, %v425
      %v428 = vsel %vm412, %v420, %v427
      %v429 = vrot.slane %v424, 4
      %v431 = vshrl.u32 %v380, 16
      %v433 = vrot.slane %v431, 7
      %v434 = vshll.u32 %v380, 16
      %v436 = vor.u32 %v433, %v434
      %v437 = vrot.slane %v433, 4
      %v439 = vshrl.u32 %v381, 16
      %v441 = vrot.slane %v439, 7
      %v442 = vshll.u32 %v381, 16
      %v444 = vor.u32 %v441, %v442
      %v445 = vsel %vm412, %v437, %v444
      %v446 = vrot.slane %v441, 4
      %v448 = vshrl.u32 %v382, 16
      %v450 = vrot.slane %v448, 7
      %v451 = vshll.u32 %v382, 16
      %v453 = vor.u32 %v450, %v451
      %v454 = vrot.slane %v450, 4
      %v456 = vshrl.u32 %v383, 16
      %v458 = vrot.slane %v456, 7
      %v459 = vshll.u32 %v383, 16
      %v461 = vor.u32 %v458, %v459
      %v462 = vsel %vm412, %v454, %v461
      %v463 = vrot.slane %v458, 4
      %v465 = vshrl.u32 %v384, 16
      %v467 = vrot.slane %v465, 7
      %v468 = vshll.u32 %v384, 16
      %v470 = vor.u32 %v467, %v468
      %v471 = vrot.slane %v467, 4
      %v473 = vshrl.u32 %v385, 16
      %v475 = vrot.slane %v473, 7
      %v476 = vshll.u32 %v385, 16
      %v478 = vor.u32 %v475, %v476
      %v479 = vsel %vm412, %v471, %v478
      %v480 = vrot.slane %v475, 4
      %v482 = vshrl.u32 %v386, 16
      %v484 = vrot.slane %v482, 7
      %v485 = vshll.u32 %v386, 16
      %v487 = vor.u32 %v484, %v485
      %v488 = vrot.slane %v484, 4
      %v490 = vshrl.u32 %v387, 16
      %v492 = vrot.slane %v490, 7
      %v493 = vshll.u32 %v387, 16
      %v495 = vor.u32 %v492, %v493
      %v496 = vsel %vm412, %v488, %v495
      %v497 = vrot.slane %v492, 4
      %v499 = vshrl.u32 %v388, 16
      %v501 = vrot.slane %v499, 7
      %v502 = vshll.u32 %v388, 16
      %v504 = vor.u32 %v501, %v502
      %v505 = vrot.slane %v501, 4
      %v507 = vshrl.u32 %v389, 16
      %v509 = vrot.slane %v507, 7
      %v510 = vshll.u32 %v389, 16
      %v512 = vor.u32 %v509, %v510
      %v513 = vsel %vm412, %v505, %v512
      %v514 = vrot.slane %v509, 4
      %v516 = vshrl.u32 %v390, 16
      %v518 = vrot.slane %v516, 7
      %v519 = vshll.u32 %v390, 16
      %v521 = vor.u32 %v518, %v519
      %v522 = vrot.slane %v518, 4
      %v524 = vshrl.u32 %v391, 16
      %v526 = vrot.slane %v524, 7
      %v527 = vshll.u32 %v391, 16
      %v529 = vor.u32 %v526, %v527
      %v530 = vsel %vm412, %v522, %v529
      %v531 = vrot.slane %v526, 4
      %v533 = vshrl.u32 %v392, 16
      %v535 = vrot.slane %v533, 7
      %v536 = vshll.u32 %v392, 16
      %v538 = vor.u32 %v535, %v536
      %v539 = vrot.slane %v535, 4
      %v541 = vshrl.u32 %v393, 16
      %v543 = vrot.slane %v541, 7
      %v544 = vshll.u32 %v393, 16
      %v546 = vor.u32 %v543, %v544
      %v547 = vsel %vm412, %v539, %v546
      %v548 = vrot.slane %v543, 4
      %v550 = vshrl.u32 %v394, 16
      %v552 = vrot.slane %v550, 7
      %v553 = vshll.u32 %v394, 16
      %v555 = vor.u32 %v552, %v553
      %v556 = vrot.slane %v552, 4
      %v558 = vshrl.u32 %v395, 16
      %v560 = vrot.slane %v558, 7
      %v561 = vshll.u32 %v395, 16
      %v563 = vor.u32 %v560, %v561
      %v564 = vsel %vm412, %v556, %v563
      %v565 = vrot.slane %v560, 4
      %v567 = vshrl.u32 %v396, 16
      %v569 = vrot.slane %v567, 7
      %v570 = vshll.u32 %v396, 16
      %v572 = vor.u32 %v569, %v570
      %v573 = vrot.slane %v569, 4
      %v575 = vshrl.u32 %v397, 16
      %v577 = vrot.slane %v575, 7
      %v578 = vshll.u32 %v397, 16
      %v580 = vor.u32 %v577, %v578
      %v581 = vsel %vm412, %v573, %v580
      %v582 = vrot.slane %v577, 4
      %v584 = vshrl.u32 %v398, 16
      %v586 = vrot.slane %v584, 7
      %v587 = vshll.u32 %v398, 16
      %v589 = vor.u32 %v586, %v587
      %v590 = vrot.slane %v586, 4
      %v592 = vshrl.u32 %v399, 16
      %v594 = vrot.slane %v592, 7
      %v595 = vshll.u32 %v399, 16
      %v597 = vor.u32 %v594, %v595
      %v598 = vsel %vm412, %v590, %v597
      %v599 = vrot.slane %v594, 4
      %v601 = vshrl.u32 %v400, 16
      %v603 = vrot.slane %v601, 7
      %v604 = vshll.u32 %v400, 16
      %v606 = vor.u32 %v603, %v604
      %v607 = vrot.slane %v603, 4
      %v609 = vshrl.u32 %v401, 16
      %v611 = vrot.slane %v609, 7
      %v612 = vshll.u32 %v401, 16
      %v614 = vor.u32 %v611, %v612
      %v615 = vsel %vm412, %v607, %v614
      %v616 = vrot.slane %v611, 4
      %v618 = vshrl.u32 %v402, 16
      %v620 = vrot.slane %v618, 7
      %v621 = vshll.u32 %v402, 16
      %v623 = vor.u32 %v620, %v621
      %v624 = vrot.slane %v620, 4
      %v626 = vshrl.u32 %v403, 16
      %v628 = vrot.slane %v626, 7
      %v629 = vshll.u32 %v403, 16
      %v631 = vor.u32 %v628, %v629
      %v632 = vsel %vm412, %v624, %v631
      %v633 = vrot.slane %v628, 4
      %v635 = vshrl.u32 %v404, 16
      %v637 = vrot.slane %v635, 7
      %v638 = vshll.u32 %v404, 16
      %v640 = vor.u32 %v637, %v638
      %v641 = vrot.slane %v637, 4
      %v643 = vshrl.u32 %v405, 16
      %v645 = vrot.slane %v643, 7
      %v646 = vshll.u32 %v405, 16
      %v648 = vor.u32 %v645, %v646
      %v649 = vsel %vm412, %v641, %v648
      %v650 = vrot.slane %v645, 4
      %v652 = vshrl.u32 %v406, 16
      %v654 = vrot.slane %v652, 7
      %v655 = vshll.u32 %v406, 16
      %v657 = vor.u32 %v654, %v655
      %v658 = vrot.slane %v654, 4
      %v660 = vshrl.u32 %v407, 16
      %v662 = vrot.slane %v660, 7
      %v663 = vshll.u32 %v407, 16
      %v665 = vor.u32 %v662, %v663
      %v666 = vsel %vm412, %v658, %v665
      %v667 = vrot.slane %v662, 4
      %v669 = vshrl.u32 %v408, 16
      %v671 = vrot.slane %v669, 7
      %v672 = vshll.u32 %v408, 16
      %v674 = vor.u32 %v671, %v672
      %v675 = vrot.slane %v671, 4
      %v677 = vshrl.u32 %v409, 16
      %v679 = vrot.slane %v677, 7
      %v680 = vshll.u32 %v409, 16
      %v682 = vor.u32 %v679, %v680
      %v683 = vsel %vm412, %v675, %v682
      %v684 = vrot.slane %v679, 4
      %s733 = scalar_lea.vmem [#allocation2], 12
      %vm734 = vcmask 60416
      %vm735 = vsmask.f32 7938
      %vm736 = vmand %vm734, %vm735
      %v737 = vld [vmem:[%s733] sm:$0xf]
      %v738 = vsel %vm736, %v419, %v737
      %739 = vst [vmem:[%s733] sm:$0xf] %v738
      %740 = vst.msk [vmem:[%s733 + $0x4] sm:$0xf] %vm258, %v428
      %vm741 = vcmask 57344
      %vm742 = vmand %vm741, %vm410
      %v743 = vld [vmem:[%s733 + $0x8] sm:$0x1]
      %v744 = vsel %vm742, %v429, %v743
      %745 = vst [vmem:[%s733 + $0x8] sm:$0x1] %v744
      %v746 = vld [vmem:[%s733 + $0xc] sm:$0xf]
      %v747 = vsel %vm736, %v436, %v746
      %748 = vst [vmem:[%s733 + $0xc] sm:$0xf] %v747
      %749 = vst.msk [vmem:[%s733 + $0x10] sm:$0xf] %vm258, %v445
      %v750 = vld [vmem:[%s733 + $0x14] sm:$0x1]
      %v751 = vsel %vm742, %v446, %v750
      %752 = vst [vmem:[%s733 + $0x14] sm:$0x1] %v751
      %v753 = vld [vmem:[%s733 + $0x18] sm:$0xf]
      %v754 = vsel %vm736, %v453, %v753
      %755 = vst [vmem:[%s733 + $0x18] sm:$0xf] %v754
      %756 = vst.msk [vmem:[%s733 + $0x1c] sm:$0xf] %vm258, %v462
      %v757 = vld [vmem:[%s733 + $0x20] sm:$0x1]
      %v758 = vsel %vm742, %v463, %v757
      %759 = vst [vmem:[%s733 + $0x20] sm:$0x1] %v758
      %v760 = vld [vmem:[%s733 + $0x24] sm:$0xf]
      %v761 = vsel %vm736, %v470, %v760
      %762 = vst [vmem:[%s733 + $0x24] sm:$0xf] %v761
      %763 = vst.msk [vmem:[%s733 + $0x28] sm:$0xf] %vm258, %v479
      %v764 = vld [vmem:[%s733 + $0x2c] sm:$0x1]
      %v765 = vsel %vm742, %v480, %v764
      %766 = vst [vmem:[%s733 + $0x2c] sm:$0x1] %v765
      %v767 = vld [vmem:[%s733 + $0x30] sm:$0xf]
      %v768 = vsel %vm736, %v487, %v767
      %769 = vst [vmem:[%s733 + $0x30] sm:$0xf] %v768
      %770 = vst.msk [vmem:[%s733 + $0x34] sm:$0xf] %vm258, %v496
      %v771 = vld [vmem:[%s733 + $0x38] sm:$0x1]
      %v772 = vsel %vm742, %v497, %v771
      %773 = vst [vmem:[%s733 + $0x38] sm:$0x1] %v772
      %v774 = vld [vmem:[%s733 + $0x3c] sm:$0xf]
      %v775 = vsel %vm736, %v504, %v774
      %776 = vst [vmem:[%s733 + $0x3c] sm:$0xf] %v775
      %777 = vst.msk [vmem:[%s733 + $0x40] sm:$0xf] %vm258, %v513
      %v778 = vld [vmem:[%s733 + $0x44] sm:$0x1]
      %v779 = vsel %vm742, %v514, %v778
      %780 = vst [vmem:[%s733 + $0x44] sm:$0x1] %v779
      %v781 = vld [vmem:[%s733 + $0x48] sm:$0xf]
      %v782 = vsel %vm736, %v521, %v781
      %783 = vst [vmem:[%s733 + $0x48] sm:$0xf] %v782
      %784 = vst.msk [vmem:[%s733 + $0x4c] sm:$0xf] %vm258, %v530
      %v785 = vld [vmem:[%s733 + $0x50] sm:$0x1]
      %v786 = vsel %vm742, %v531, %v785
      %787 = vst [vmem:[%s733 + $0x50] sm:$0x1] %v786
      %v788 = vld [vmem:[%s733 + $0x54] sm:$0xf]
      %v789 = vsel %vm736, %v538, %v788
      %790 = vst [vmem:[%s733 + $0x54] sm:$0xf] %v789
      %791 = vst.msk [vmem:[%s733 + $0x58] sm:$0xf] %vm258, %v547
      %v792 = vld [vmem:[%s733 + $0x5c] sm:$0x1]
      %v793 = vsel %vm742, %v548, %v792
      %794 = vst [vmem:[%s733 + $0x5c] sm:$0x1] %v793
      %v795 = vld [vmem:[%s733 + $0x60] sm:$0xf]
      %v796 = vsel %vm736, %v555, %v795
      %797 = vst [vmem:[%s733 + $0x60] sm:$0xf] %v796
      %798 = vst.msk [vmem:[%s733 + $0x64] sm:$0xf] %vm258, %v564
      %v799 = vld [vmem:[%s733 + $0x68] sm:$0x1]
      %v800 = vsel %vm742, %v565, %v799
      %801 = vst [vmem:[%s733 + $0x68] sm:$0x1] %v800
      %v802 = vld [vmem:[%s733 + $0x6c] sm:$0xf]
      %v803 = vsel %vm736, %v572, %v802
      %804 = vst [vmem:[%s733 + $0x6c] sm:$0xf] %v803
      %805 = vst.msk [vmem:[%s733 + $0x70] sm:$0xf] %vm258, %v581
      %v806 = vld [vmem:[%s733 + $0x74] sm:$0x1]
      %v807 = vsel %vm742, %v582, %v806
      %808 = vst [vmem:[%s733 + $0x74] sm:$0x1] %v807
      %v809 = vld [vmem:[%s733 + $0x78] sm:$0xf]
      %v810 = vsel %vm736, %v589, %v809
      %811 = vst [vmem:[%s733 + $0x78] sm:$0xf] %v810
      %812 = vst.msk [vmem:[%s733 + $0x7c] sm:$0xf] %vm258, %v598
      %v813 = vld [vmem:[%s733 + $0x80] sm:$0x1]
      %v814 = vsel %vm742, %v599, %v813
      %815 = vst [vmem:[%s733 + $0x80] sm:$0x1] %v814
      %v816 = vld [vmem:[%s733 + $0x84] sm:$0xf]
      %v817 = vsel %vm736, %v606, %v816
      %818 = vst [vmem:[%s733 + $0x84] sm:$0xf] %v817
      %819 = vst.msk [vmem:[%s733 + $0x88] sm:$0xf] %vm258, %v615
      %v820 = vld [vmem:[%s733 + $0x8c] sm:$0x1]
      %v821 = vsel %vm742, %v616, %v820
      %822 = vst [vmem:[%s733 + $0x8c] sm:$0x1] %v821
      %v823 = vld [vmem:[%s733 + $0x90] sm:$0xf]
      %v824 = vsel %vm736, %v623, %v823
      %825 = vst [vmem:[%s733 + $0x90] sm:$0xf] %v824
      %826 = vst.msk [vmem:[%s733 + $0x94] sm:$0xf] %vm258, %v632
      %v827 = vld [vmem:[%s733 + $0x98] sm:$0x1]
      %v828 = vsel %vm742, %v633, %v827
      %829 = vst [vmem:[%s733 + $0x98] sm:$0x1] %v828
      %v830 = vld [vmem:[%s733 + $0x9c] sm:$0xf]
      %v831 = vsel %vm736, %v640, %v830
      %832 = vst [vmem:[%s733 + $0x9c] sm:$0xf] %v831
      %833 = vst.msk [vmem:[%s733 + $0xa0] sm:$0xf] %vm258, %v649
      %v834 = vld [vmem:[%s733 + $0xa4] sm:$0x1]
      %v835 = vsel %vm742, %v650, %v834
      %836 = vst [vmem:[%s733 + $0xa4] sm:$0x1] %v835
      %v837 = vld [vmem:[%s733 + $0xa8] sm:$0xf]
      %v838 = vsel %vm736, %v657, %v837
      %839 = vst [vmem:[%s733 + $0xa8] sm:$0xf] %v838
      %840 = vst.msk [vmem:[%s733 + $0xac] sm:$0xf] %vm258, %v666
      %v841 = vld [vmem:[%s733 + $0xb0] sm:$0x1]
      %v842 = vsel %vm742, %v667, %v841
      %843 = vst [vmem:[%s733 + $0xb0] sm:$0x1] %v842
      %v844 = vld [vmem:[%s733 + $0xb4] sm:$0xf]
      %v845 = vsel %vm736, %v674, %v844
      %846 = vst [vmem:[%s733 + $0xb4] sm:$0xf] %v845
      %847 = vst.msk [vmem:[%s733 + $0xb8] sm:$0xf] %vm258, %v683
      %v848 = vld [vmem:[%s733 + $0xbc] sm:$0x1]
      %v849 = vsel %vm742, %v684, %v848
      %850 = vst [vmem:[%s733 + $0xbc] sm:$0x1] %v849
      %v851 = vld [vmem:[#allocation2] sm:$0xf]
      %v852 = vld [vmem:[#allocation2 + $0x4] sm:$0xf]
      %v853 = vld [vmem:[#allocation2 + $0xc] sm:$0xf]
      %v854 = vld [vmem:[#allocation2 + $0x10] sm:$0xf]
      %v855 = vld [vmem:[#allocation2 + $0x18] sm:$0xf]
      %v856 = vld [vmem:[#allocation2 + $0x1c] sm:$0xf]
      %v857 = vld [vmem:[#allocation2 + $0x24] sm:$0xf]
      %v858 = vld [vmem:[#allocation2 + $0x28] sm:$0xf]
      %v859 = vld [vmem:[#allocation2 + $0x30] sm:$0xf]
      %v860 = vld [vmem:[#allocation2 + $0x34] sm:$0xf]
      %v861 = vld [vmem:[#allocation2 + $0x3c] sm:$0xf]
      %v862 = vld [vmem:[#allocation2 + $0x40] sm:$0xf]
      %v863 = vld [vmem:[#allocation2 + $0x48] sm:$0xf]
      %v864 = vld [vmem:[#allocation2 + $0x4c] sm:$0xf]
      %v865 = vld [vmem:[#allocation2 + $0x54] sm:$0xf]
      %v866 = vld [vmem:[#allocation2 + $0x58] sm:$0xf]
      %v867 = vld [vmem:[#allocation2 + $0x60] sm:$0xf]
      %v868 = vld [vmem:[#allocation2 + $0x64] sm:$0xf]
      %v869 = vld [vmem:[#allocation2 + $0x6c] sm:$0xf]
      %v870 = vld [vmem:[#allocation2 + $0x70] sm:$0xf]
      %v871 = vld [vmem:[#allocation2 + $0x78] sm:$0xf]
      %v872 = vld [vmem:[#allocation2 + $0x7c] sm:$0xf]
      %v873 = vld [vmem:[#allocation2 + $0x84] sm:$0xf]
      %v874 = vld [vmem:[#allocation2 + $0x88] sm:$0xf]
      %v875 = vld [vmem:[#allocation2 + $0x90] sm:$0xf]
      %v876 = vld [vmem:[#allocation2 + $0x94] sm:$0xf]
      %v877 = vld [vmem:[#allocation2 + $0x9c] sm:$0xf]
      %v878 = vld [vmem:[#allocation2 + $0xa0] sm:$0xf]
      %v879 = vld [vmem:[#allocation2 + $0xa8] sm:$0xf]
      %v880 = vld [vmem:[#allocation2 + $0xac] sm:$0xf]
      %v881 = vld [vmem:[#allocation2 + $0xb4] sm:$0xf]
      %v882 = vld [vmem:[#allocation2 + $0xb8] sm:$0xf]
      %v883 = vld [vmem:[#allocation2 + $0x8] sm:$0x1]
      %v884 = vld [vmem:[#allocation2 + $0x14] sm:$0x1]
      %v885 = vld [vmem:[#allocation2 + $0x20] sm:$0x1]
      %v886 = vld [vmem:[#allocation2 + $0x2c] sm:$0x1]
      %v887 = vld [vmem:[#allocation2 + $0x38] sm:$0x1]
      %v888 = vld [vmem:[#allocation2 + $0x44] sm:$0x1]
      %v889 = vld [vmem:[#allocation2 + $0x50] sm:$0x1]
      %v890 = vld [vmem:[#allocation2 + $0x5c] sm:$0x1]
      %v891 = vld [vmem:[#allocation2 + $0x68] sm:$0x1]
      %v892 = vld [vmem:[#allocation2 + $0x74] sm:$0x1]
      %v893 = vld [vmem:[#allocation2 + $0x80] sm:$0x1]
      %v894 = vld [vmem:[#allocation2 + $0x8c] sm:$0x1]
      %v895 = vld [vmem:[#allocation2 + $0x98] sm:$0x1]
      %v896 = vld [vmem:[#allocation2 + $0xa4] sm:$0x1]
      %v897 = vld [vmem:[#allocation2 + $0xb0] sm:$0x1]
      %v898 = vld [vmem:[#allocation2 + $0xbc] sm:$0x1]
      %v899 = vld [vmem:[#allocation2] sm:$0xe]
      %v900 = vld [vmem:[#allocation2 + $0xc] sm:$0xe]
      %v901 = vld [vmem:[#allocation2 + $0x18] sm:$0xe]
      %v902 = vld [vmem:[#allocation2 + $0x24] sm:$0xe]
      %v903 = vld [vmem:[#allocation2 + $0x30] sm:$0xe]
      %v904 = vld [vmem:[#allocation2 + $0x3c] sm:$0xe]
      %v905 = vld [vmem:[#allocation2 + $0x48] sm:$0xe]
      %v906 = vld [vmem:[#allocation2 + $0x54] sm:$0xe]
      %v907 = vld [vmem:[#allocation2 + $0x60] sm:$0xe]
      %v908 = vld [vmem:[#allocation2 + $0x6c] sm:$0xe]
      %v909 = vld [vmem:[#allocation2 + $0x78] sm:$0xe]
      %v910 = vld [vmem:[#allocation2 + $0x84] sm:$0xe]
      %v911 = vld [vmem:[#allocation2 + $0x90] sm:$0xe]
      %v912 = vld [vmem:[#allocation2 + $0x9c] sm:$0xe]
      %v913 = vld [vmem:[#allocation2 + $0xa8] sm:$0xe]
      %v914 = vld [vmem:[#allocation2 + $0xb4] sm:$0xe]
      %v915 = vld [vmem:[%s733] sm:$0xf]
      %v916 = vld [vmem:[%s733 + $0x4] sm:$0xf]
      %v917 = vld [vmem:[%s733 + $0xc] sm:$0xf]
      %v918 = vld [vmem:[%s733 + $0x10] sm:$0xf]
      %v919 = vld [vmem:[%s733 + $0x18] sm:$0xf]
      %v920 = vld [vmem:[%s733 + $0x1c] sm:$0xf]
      %v921 = vld [vmem:[%s733 + $0x24] sm:$0xf]
      %v922 = vld [vmem:[%s733 + $0x28] sm:$0xf]
      %v923 = vld [vmem:[%s733 + $0x30] sm:$0xf]
      %v924 = vld [vmem:[%s733 + $0x34] sm:$0xf]
      %v925 = vld [vmem:[%s733 + $0x3c] sm:$0xf]
      %v926 = vld [vmem:[%s733 + $0x40] sm:$0xf]
      %v927 = vld [vmem:[%s733 + $0x48] sm:$0xf]
      %v928 = vld [vmem:[%s733 + $0x4c] sm:$0xf]
      %v929 = vld [vmem:[%s733 + $0x54] sm:$0xf]
      %v930 = vld [vmem:[%s733 + $0x58] sm:$0xf]
      %v931 = vld [vmem:[%s733 + $0x60] sm:$0xf]
      %v932 = vld [vmem:[%s733 + $0x64] sm:$0xf]
      %v933 = vld [vmem:[%s733 + $0x6c] sm:$0xf]
      %v934 = vld [vmem:[%s733 + $0x70] sm:$0xf]
      %v935 = vld [vmem:[%s733 + $0x78] sm:$0xf]
      %v936 = vld [vmem:[%s733 + $0x7c] sm:$0xf]
      %v937 = vld [vmem:[%s733 + $0x84] sm:$0xf]
      %v938 = vld [vmem:[%s733 + $0x88] sm:$0xf]
      %v939 = vld [vmem:[%s733 + $0x90] sm:$0xf]
      %v940 = vld [vmem:[%s733 + $0x94] sm:$0xf]
      %v941 = vld [vmem:[%s733 + $0x9c] sm:$0xf]
      %v942 = vld [vmem:[%s733 + $0xa0] sm:$0xf]
      %v943 = vld [vmem:[%s733 + $0xa8] sm:$0xf]
      %v944 = vld [vmem:[%s733 + $0xac] sm:$0xf]
      %v945 = vld [vmem:[%s733 + $0xb4] sm:$0xf]
      %v946 = vld [vmem:[%s733 + $0xb8] sm:$0xf]
      %v947 = vld [vmem:[%s733 + $0x8] sm:$0x1]
      %v948 = vld [vmem:[%s733 + $0x14] sm:$0x1]
      %v949 = vld [vmem:[%s733 + $0x20] sm:$0x1]
      %v950 = vld [vmem:[%s733 + $0x2c] sm:$0x1]
      %v951 = vld [vmem:[%s733 + $0x38] sm:$0x1]
      %v952 = vld [vmem:[%s733 + $0x44] sm:$0x1]
      %v953 = vld [vmem:[%s733 + $0x50] sm:$0x1]
      %v954 = vld [vmem:[%s733 + $0x5c] sm:$0x1]
      %v955 = vld [vmem:[%s733 + $0x68] sm:$0x1]
      %v956 = vld [vmem:[%s733 + $0x74] sm:$0x1]
      %v957 = vld [vmem:[%s733 + $0x80] sm:$0x1]
      %v958 = vld [vmem:[%s733 + $0x8c] sm:$0x1]
      %v959 = vld [vmem:[%s733 + $0x98] sm:$0x1]
      %v960 = vld [vmem:[%s733 + $0xa4] sm:$0x1]
      %v961 = vld [vmem:[%s733 + $0xb0] sm:$0x1]
      %v962 = vld [vmem:[%s733 + $0xbc] sm:$0x1]
      %v963 = vld [vmem:[%s733] sm:$0xe]
      %v964 = vld [vmem:[%s733 + $0xc] sm:$0xe]
      %v965 = vld [vmem:[%s733 + $0x18] sm:$0xe]
      %v966 = vld [vmem:[%s733 + $0x24] sm:$0xe]
      %v967 = vld [vmem:[%s733 + $0x30] sm:$0xe]
      %v968 = vld [vmem:[%s733 + $0x3c] sm:$0xe]
      %v969 = vld [vmem:[%s733 + $0x48] sm:$0xe]
      %v970 = vld [vmem:[%s733 + $0x54] sm:$0xe]
      %v971 = vld [vmem:[%s733 + $0x60] sm:$0xe]
      %v972 = vld [vmem:[%s733 + $0x6c] sm:$0xe]
      %v973 = vld [vmem:[%s733 + $0x78] sm:$0xe]
      %v974 = vld [vmem:[%s733 + $0x84] sm:$0xe]
      %v975 = vld [vmem:[%s733 + $0x90] sm:$0xe]
      %v976 = vld [vmem:[%s733 + $0x9c] sm:$0xe]
      %v977 = vld [vmem:[%s733 + $0xa8] sm:$0xe]
      %v978 = vld [vmem:[%s733 + $0xb4] sm:$0xe]
      %s979 = scalar_lea.vmem [#allocation2], 24
      %v980 = vld [vmem:[%s979] sm:$0xf]
      %v981 = vld [vmem:[%s979 + $0x4] sm:$0xf]
      %v982 = vld [vmem:[%s979 + $0xc] sm:$0xf]
      %v983 = vld [vmem:[%s979 + $0x10] sm:$0xf]
      %v984 = vld [vmem:[%s979 + $0x18] sm:$0xf]
      %v985 = vld [vmem:[%s979 + $0x1c] sm:$0xf]
      %v986 = vld [vmem:[%s979 + $0x24] sm:$0xf]
      %v987 = vld [vmem:[%s979 + $0x28] sm:$0xf]
      %v988 = vld [vmem:[%s979 + $0x30] sm:$0xf]
      %v989 = vld [vmem:[%s979 + $0x34] sm:$0xf]
      %v990 = vld [vmem:[%s979 + $0x3c] sm:$0xf]
      %v991 = vld [vmem:[%s979 + $0x40] sm:$0xf]
      %v992 = vld [vmem:[%s979 + $0x48] sm:$0xf]
      %v993 = vld [vmem:[%s979 + $0x4c] sm:$0xf]
      %v994 = vld [vmem:[%s979 + $0x54] sm:$0xf]
      %v995 = vld [vmem:[%s979 + $0x58] sm:$0xf]
      %v996 = vld [vmem:[%s979 + $0x60] sm:$0xf]
      %v997 = vld [vmem:[%s979 + $0x64] sm:$0xf]
      %v998 = vld [vmem:[%s979 + $0x6c] sm:$0xf]
      %v999 = vld [vmem:[%s979 + $0x70] sm:$0xf]
      %v1000 = vld [vmem:[%s979 + $0x78] sm:$0xf]
      %v1001 = vld [vmem:[%s979 + $0x7c] sm:$0xf]
      %v1002 = vld [vmem:[%s979 + $0x84] sm:$0xf]
      %v1003 = vld [vmem:[%s979 + $0x88] sm:$0xf]
      %v1004 = vld [vmem:[%s979 + $0x90] sm:$0xf]
      %v1005 = vld [vmem:[%s979 + $0x94] sm:$0xf]
      %v1006 = vld [vmem:[%s979 + $0x9c] sm:$0xf]
      %v1007 = vld [vmem:[%s979 + $0xa0] sm:$0xf]
      %v1008 = vld [vmem:[%s979 + $0xa8] sm:$0xf]
      %v1009 = vld [vmem:[%s979 + $0xac] sm:$0xf]
      %v1010 = vld [vmem:[%s979 + $0xb4] sm:$0xf]
      %v1011 = vld [vmem:[%s979 + $0xb8] sm:$0xf]
      %v1012 = vld [vmem:[%s979 + $0x8] sm:$0x1]
      %v1013 = vld [vmem:[%s979 + $0x14] sm:$0x1]
      %v1014 = vld [vmem:[%s979 + $0x20] sm:$0x1]
      %v1015 = vld [vmem:[%s979 + $0x2c] sm:$0x1]
      %v1016 = vld [vmem:[%s979 + $0x38] sm:$0x1]
      %v1017 = vld [vmem:[%s979 + $0x44] sm:$0x1]
      %v1018 = vld [vmem:[%s979 + $0x50] sm:$0x1]
      %v1019 = vld [vmem:[%s979 + $0x5c] sm:$0x1]
      %v1020 = vld [vmem:[%s979 + $0x68] sm:$0x1]
      %v1021 = vld [vmem:[%s979 + $0x74] sm:$0x1]
      %v1022 = vld [vmem:[%s979 + $0x80] sm:$0x1]
      %v1023 = vld [vmem:[%s979 + $0x8c] sm:$0x1]
      %v1024 = vld [vmem:[%s979 + $0x98] sm:$0x1]
      %v1025 = vld [vmem:[%s979 + $0xa4] sm:$0x1]
      %v1026 = vld [vmem:[%s979 + $0xb0] sm:$0x1]
      %v1027 = vld [vmem:[%s979 + $0xbc] sm:$0x1]
      %v1028 = vld [vmem:[%s979] sm:$0xe]
      %v1029 = vld [vmem:[%s979 + $0xc] sm:$0xe]
      %v1030 = vld [vmem:[%s979 + $0x18] sm:$0xe]
      %v1031 = vld [vmem:[%s979 + $0x24] sm:$0xe]
      %v1032 = vld [vmem:[%s979 + $0x30] sm:$0xe]
      %v1033 = vld [vmem:[%s979 + $0x3c] sm:$0xe]
      %v1034 = vld [vmem:[%s979 + $0x48] sm:$0xe]
      %v1035 = vld [vmem:[%s979 + $0x54] sm:$0xe]
      %v1036 = vld [vmem:[%s979 + $0x60] sm:$0xe]
      %v1037 = vld [vmem:[%s979 + $0x6c] sm:$0xe]
      %v1038 = vld [vmem:[%s979 + $0x78] sm:$0xe]
      %v1039 = vld [vmem:[%s979 + $0x84] sm:$0xe]
      %v1040 = vld [vmem:[%s979 + $0x90] sm:$0xe]
      %v1041 = vld [vmem:[%s979 + $0x9c] sm:$0xe]
      %v1042 = vld [vmem:[%s979 + $0xa8] sm:$0xe]
      %v1043 = vld [vmem:[%s979 + $0xb4] sm:$0xe]
      %v1076 = vunpack.c.l.b16 %v851
      %v1077 = vunpack.c.l.b16 %v852
      %v1078 = vunpack.c.l.b16 %v853
      %v1079 = vunpack.c.l.b16 %v854
      %v1080 = vunpack.c.l.b16 %v855
      %v1081 = vunpack.c.l.b16 %v856
      %v1082 = vunpack.c.l.b16 %v857
      %v1083 = vunpack.c.l.b16 %v858
      %v1084 = vunpack.c.l.b16 %v859
      %v1085 = vunpack.c.l.b16 %v860
      %v1086 = vunpack.c.l.b16 %v861
      %v1087 = vunpack.c.l.b16 %v862
      %v1088 = vunpack.c.l.b16 %v863
      %v1089 = vunpack.c.l.b16 %v864
      %v1090 = vunpack.c.l.b16 %v865
      %v1091 = vunpack.c.l.b16 %v866
      %v1092 = vunpack.c.l.b16 %v867
      %v1093 = vunpack.c.l.b16 %v868
      %v1094 = vunpack.c.l.b16 %v869
      %v1095 = vunpack.c.l.b16 %v870
      %v1096 = vunpack.c.l.b16 %v871
      %v1097 = vunpack.c.l.b16 %v872
      %v1098 = vunpack.c.l.b16 %v873
      %v1099 = vunpack.c.l.b16 %v874
      %v1100 = vunpack.c.l.b16 %v875
      %v1101 = vunpack.c.l.b16 %v876
      %v1102 = vunpack.c.l.b16 %v877
      %v1103 = vunpack.c.l.b16 %v878
      %v1104 = vunpack.c.l.b16 %v879
      %v1105 = vunpack.c.l.b16 %v880
      %v1106 = vunpack.c.l.b16 %v881
      %v1107 = vunpack.c.l.b16 %v882
      %v1108 = vpack.c.b16 %v1077, %v1076
      %v1109 = vpack.c.b16 %v1079, %v1078
      %v1110 = vpack.c.b16 %v1081, %v1080
      %v1111 = vpack.c.b16 %v1083, %v1082
      %v1112 = vpack.c.b16 %v1085, %v1084
      %v1113 = vpack.c.b16 %v1087, %v1086
      %v1114 = vpack.c.b16 %v1089, %v1088
      %v1115 = vpack.c.b16 %v1091, %v1090
      %v1116 = vpack.c.b16 %v1093, %v1092
      %v1117 = vpack.c.b16 %v1095, %v1094
      %v1118 = vpack.c.b16 %v1097, %v1096
      %v1119 = vpack.c.b16 %v1099, %v1098
      %v1120 = vpack.c.b16 %v1101, %v1100
      %v1121 = vpack.c.b16 %v1103, %v1102
      %v1122 = vpack.c.b16 %v1105, %v1104
      %v1123 = vpack.c.b16 %v1107, %v1106
      %v1140 = vunpack.c.l.b16 %v883
      %v1141 = vunpack.c.l.b16 %v884
      %v1142 = vunpack.c.l.b16 %v885
      %v1143 = vunpack.c.l.b16 %v886
      %v1144 = vunpack.c.l.b16 %v887
      %v1145 = vunpack.c.l.b16 %v888
      %v1146 = vunpack.c.l.b16 %v889
      %v1147 = vunpack.c.l.b16 %v890
      %v1148 = vunpack.c.l.b16 %v891
      %v1149 = vunpack.c.l.b16 %v892
      %v1150 = vunpack.c.l.b16 %v893
      %v1151 = vunpack.c.l.b16 %v894
      %v1152 = vunpack.c.l.b16 %v895
      %v1153 = vunpack.c.l.b16 %v896
      %v1154 = vunpack.c.l.b16 %v897
      %v1155 = vunpack.c.l.b16 %v898
      %v1156 = vpack.c.b16 %v1140, %v1140
      %v1157 = vpack.c.b16 %v1141, %v1141
      %v1158 = vpack.c.b16 %v1142, %v1142
      %v1159 = vpack.c.b16 %v1143, %v1143
      %v1160 = vpack.c.b16 %v1144, %v1144
      %v1161 = vpack.c.b16 %v1145, %v1145
      %v1162 = vpack.c.b16 %v1146, %v1146
      %v1163 = vpack.c.b16 %v1147, %v1147
      %v1164 = vpack.c.b16 %v1148, %v1148
      %v1165 = vpack.c.b16 %v1149, %v1149
      %v1166 = vpack.c.b16 %v1150, %v1150
      %v1167 = vpack.c.b16 %v1151, %v1151
      %v1168 = vpack.c.b16 %v1152, %v1152
      %v1169 = vpack.c.b16 %v1153, %v1153
      %v1170 = vpack.c.b16 %v1154, %v1154
      %v1171 = vpack.c.b16 %v1155, %v1155
      %vm1172 = vsmask.f32 7424
      %v1174 = vshrl.u32 %v1108, 16
      %v1176 = vshll.u32 %v1108, 16
      %v1178 = vrot.slane %v1176, 1
      %v1179 = vor.u32 %v1174, %v1178
      %v1181 = vshll.u32 %v1156, 16
      %v1183 = vrot.slane %v1181, 1
      %v1184 = vsel %vm1172, %v1179, %v1183
      %v1186 = vshrl.u32 %v1109, 16
      %v1188 = vshll.u32 %v1109, 16
      %v1190 = vrot.slane %v1188, 1
      %v1191 = vor.u32 %v1186, %v1190
      %v1193 = vshll.u32 %v1157, 16
      %v1195 = vrot.slane %v1193, 1
      %v1196 = vsel %vm1172, %v1191, %v1195
      %v1198 = vshrl.u32 %v1110, 16
      %v1200 = vshll.u32 %v1110, 16
      %v1202 = vrot.slane %v1200, 1
      %v1203 = vor.u32 %v1198, %v1202
      %v1205 = vshll.u32 %v1158, 16
      %v1207 = vrot.slane %v1205, 1
      %v1208 = vsel %vm1172, %v1203, %v1207
      %v1210 = vshrl.u32 %v1111, 16
      %v1212 = vshll.u32 %v1111, 16
      %v1214 = vrot.slane %v1212, 1
      %v1215 = vor.u32 %v1210, %v1214
      %v1217 = vshll.u32 %v1159, 16
      %v1219 = vrot.slane %v1217, 1
      %v1220 = vsel %vm1172, %v1215, %v1219
      %v1222 = vshrl.u32 %v1112, 16
      %v1224 = vshll.u32 %v1112, 16
      %v1226 = vrot.slane %v1224, 1
      %v1227 = vor.u32 %v1222, %v1226
      %v1229 = vshll.u32 %v1160, 16
      %v1231 = vrot.slane %v1229, 1
      %v1232 = vsel %vm1172, %v1227, %v1231
      %v1234 = vshrl.u32 %v1113, 16
      %v1236 = vshll.u32 %v1113, 16
      %v1238 = vrot.slane %v1236, 1
      %v1239 = vor.u32 %v1234, %v1238
      %v1241 = vshll.u32 %v1161, 16
      %v1243 = vrot.slane %v1241, 1
      %v1244 = vsel %vm1172, %v1239, %v1243
      %v1246 = vshrl.u32 %v1114, 16
      %v1248 = vshll.u32 %v1114, 16
      %v1250 = vrot.slane %v1248, 1
      %v1251 = vor.u32 %v1246, %v1250
      %v1253 = vshll.u32 %v1162, 16
      %v1255 = vrot.slane %v1253, 1
      %v1256 = vsel %vm1172, %v1251, %v1255
      %v1258 = vshrl.u32 %v1115, 16
      %v1260 = vshll.u32 %v1115, 16
      %v1262 = vrot.slane %v1260, 1
      %v1263 = vor.u32 %v1258, %v1262
      %v1265 = vshll.u32 %v1163, 16
      %v1267 = vrot.slane %v1265, 1
      %v1268 = vsel %vm1172, %v1263, %v1267
      %v1270 = vshrl.u32 %v1116, 16
      %v1272 = vshll.u32 %v1116, 16
      %v1274 = vrot.slane %v1272, 1
      %v1275 = vor.u32 %v1270, %v1274
      %v1277 = vshll.u32 %v1164, 16
      %v1279 = vrot.slane %v1277, 1
      %v1280 = vsel %vm1172, %v1275, %v1279
      %v1282 = vshrl.u32 %v1117, 16
      %v1284 = vshll.u32 %v1117, 16
      %v1286 = vrot.slane %v1284, 1
      %v1287 = vor.u32 %v1282, %v1286
      %v1289 = vshll.u32 %v1165, 16
      %v1291 = vrot.slane %v1289, 1
      %v1292 = vsel %vm1172, %v1287, %v1291
      %v1294 = vshrl.u32 %v1118, 16
      %v1296 = vshll.u32 %v1118, 16
      %v1298 = vrot.slane %v1296, 1
      %v1299 = vor.u32 %v1294, %v1298
      %v1301 = vshll.u32 %v1166, 16
      %v1303 = vrot.slane %v1301, 1
      %v1304 = vsel %vm1172, %v1299, %v1303
      %v1306 = vshrl.u32 %v1119, 16
      %v1308 = vshll.u32 %v1119, 16
      %v1310 = vrot.slane %v1308, 1
      %v1311 = vor.u32 %v1306, %v1310
      %v1313 = vshll.u32 %v1167, 16
      %v1315 = vrot.slane %v1313, 1
      %v1316 = vsel %vm1172, %v1311, %v1315
      %v1318 = vshrl.u32 %v1120, 16
      %v1320 = vshll.u32 %v1120, 16
      %v1322 = vrot.slane %v1320, 1
      %v1323 = vor.u32 %v1318, %v1322
      %v1325 = vshll.u32 %v1168, 16
      %v1327 = vrot.slane %v1325, 1
      %v1328 = vsel %vm1172, %v1323, %v1327
      %v1330 = vshrl.u32 %v1121, 16
      %v1332 = vshll.u32 %v1121, 16
      %v1334 = vrot.slane %v1332, 1
      %v1335 = vor.u32 %v1330, %v1334
      %v1337 = vshll.u32 %v1169, 16
      %v1339 = vrot.slane %v1337, 1
      %v1340 = vsel %vm1172, %v1335, %v1339
      %v1342 = vshrl.u32 %v1122, 16
      %v1344 = vshll.u32 %v1122, 16
      %v1346 = vrot.slane %v1344, 1
      %v1347 = vor.u32 %v1342, %v1346
      %v1349 = vshll.u32 %v1170, 16
      %v1351 = vrot.slane %v1349, 1
      %v1352 = vsel %vm1172, %v1347, %v1351
      %v1354 = vshrl.u32 %v1123, 16
      %v1356 = vshll.u32 %v1123, 16
      %v1358 = vrot.slane %v1356, 1
      %v1359 = vor.u32 %v1354, %v1358
      %v1361 = vshll.u32 %v1171, 16
      %v1363 = vrot.slane %v1361, 1
      %v1364 = vsel %vm1172, %v1359, %v1363
      %1365 = vrot.lane.b32.xlu0 %v1184, 8
      %v1366 = vpop.permute.xlu0 %1365
      %1367 = vrot.lane.b32.xlu0 %v1196, 8
      %v1368 = vpop.permute.xlu0 %1367
      %1369 = vrot.lane.b32.xlu0 %v1208, 8
      %v1370 = vpop.permute.xlu0 %1369
      %1371 = vrot.lane.b32.xlu0 %v1220, 8
      %v1372 = vpop.permute.xlu0 %1371
      %1373 = vrot.lane.b32.xlu0 %v1232, 8
      %v1374 = vpop.permute.xlu0 %1373
      %1375 = vrot.lane.b32.xlu0 %v1244, 8
      %v1376 = vpop.permute.xlu0 %1375
      %1377 = vrot.lane.b32.xlu0 %v1256, 8
      %v1378 = vpop.permute.xlu0 %1377
      %1379 = vrot.lane.b32.xlu0 %v1268, 8
      %v1380 = vpop.permute.xlu0 %1379
      %1381 = vrot.lane.b32.xlu0 %v1280, 8
      %v1382 = vpop.permute.xlu0 %1381
      %1383 = vrot.lane.b32.xlu0 %v1292, 8
      %v1384 = vpop.permute.xlu0 %1383
      %1385 = vrot.lane.b32.xlu0 %v1304, 8
      %v1386 = vpop.permute.xlu0 %1385
      %1387 = vrot.lane.b32.xlu0 %v1316, 8
      %v1388 = vpop.permute.xlu0 %1387
      %1389 = vrot.lane.b32.xlu0 %v1328, 8
      %v1390 = vpop.permute.xlu0 %1389
      %1391 = vrot.lane.b32.xlu0 %v1340, 8
      %v1392 = vpop.permute.xlu0 %1391
      %1393 = vrot.lane.b32.xlu0 %v1352, 8
      %v1394 = vpop.permute.xlu0 %1393
      %1395 = vrot.lane.b32.xlu0 %v1364, 8
      %v1396 = vpop.permute.xlu0 %1395
      %v1413 = vunpack.c.l.b16 %v899
      %v1414 = vunpack.c.l.b16 %v900
      %v1415 = vunpack.c.l.b16 %v901
      %v1416 = vunpack.c.l.b16 %v902
      %v1417 = vunpack.c.l.b16 %v903
      %v1418 = vunpack.c.l.b16 %v904
      %v1419 = vunpack.c.l.b16 %v905
      %v1420 = vunpack.c.l.b16 %v906
      %v1421 = vunpack.c.l.b16 %v907
      %v1422 = vunpack.c.l.b16 %v908
      %v1423 = vunpack.c.l.b16 %v909
      %v1424 = vunpack.c.l.b16 %v910
      %v1425 = vunpack.c.l.b16 %v911
      %v1426 = vunpack.c.l.b16 %v912
      %v1427 = vunpack.c.l.b16 %v913
      %v1428 = vunpack.c.l.b16 %v914
      %v1429 = vpack.c.b16 %v1077, %v1413
      %v1430 = vpack.c.b16 %v1079, %v1414
      %v1431 = vpack.c.b16 %v1081, %v1415
      %v1432 = vpack.c.b16 %v1083, %v1416
      %v1433 = vpack.c.b16 %v1085, %v1417
      %v1434 = vpack.c.b16 %v1087, %v1418
      %v1435 = vpack.c.b16 %v1089, %v1419
      %v1436 = vpack.c.b16 %v1091, %v1420
      %v1437 = vpack.c.b16 %v1093, %v1421
      %v1438 = vpack.c.b16 %v1095, %v1422
      %v1439 = vpack.c.b16 %v1097, %v1423
      %v1440 = vpack.c.b16 %v1099, %v1424
      %v1441 = vpack.c.b16 %v1101, %v1425
      %v1442 = vpack.c.b16 %v1103, %v1426
      %v1443 = vpack.c.b16 %v1105, %v1427
      %v1444 = vpack.c.b16 %v1107, %v1428
      %vm1445 = vcmask 1046528
      %v1446 = vrot.slane %v1429, 1
      %v1447 = vrot.slane %v1156, 1
      %v1448 = vsel %vm1445, %v1446, %v1447
      %v1449 = vrot.slane %v1430, 1
      %v1450 = vrot.slane %v1157, 1
      %v1451 = vsel %vm1445, %v1449, %v1450
      %v1452 = vrot.slane %v1431, 1
      %v1453 = vrot.slane %v1158, 1
      %v1454 = vsel %vm1445, %v1452, %v1453
      %v1455 = vrot.slane %v1432, 1
      %v1456 = vrot.slane %v1159, 1
      %v1457 = vsel %vm1445, %v1455, %v1456
      %v1458 = vrot.slane %v1433, 1
      %v1459 = vrot.slane %v1160, 1
      %v1460 = vsel %vm1445, %v1458, %v1459
      %v1461 = vrot.slane %v1434, 1
      %v1462 = vrot.slane %v1161, 1
      %v1463 = vsel %vm1445, %v1461, %v1462
      %v1464 = vrot.slane %v1435, 1
      %v1465 = vrot.slane %v1162, 1
      %v1466 = vsel %vm1445, %v1464, %v1465
      %v1467 = vrot.slane %v1436, 1
      %v1468 = vrot.slane %v1163, 1
      %v1469 = vsel %vm1445, %v1467, %v1468
      %v1470 = vrot.slane %v1437, 1
      %v1471 = vrot.slane %v1164, 1
      %v1472 = vsel %vm1445, %v1470, %v1471
      %v1473 = vrot.slane %v1438, 1
      %v1474 = vrot.slane %v1165, 1
      %v1475 = vsel %vm1445, %v1473, %v1474
      %v1476 = vrot.slane %v1439, 1
      %v1477 = vrot.slane %v1166, 1
      %v1478 = vsel %vm1445, %v1476, %v1477
      %v1479 = vrot.slane %v1440, 1
      %v1480 = vrot.slane %v1167, 1
      %v1481 = vsel %vm1445, %v1479, %v1480
      %v1482 = vrot.slane %v1441, 1
      %v1483 = vrot.slane %v1168, 1
      %v1484 = vsel %vm1445, %v1482, %v1483
      %v1485 = vrot.slane %v1442, 1
      %v1486 = vrot.slane %v1169, 1
      %v1487 = vsel %vm1445, %v1485, %v1486
      %v1488 = vrot.slane %v1443, 1
      %v1489 = vrot.slane %v1170, 1
      %v1490 = vsel %vm1445, %v1488, %v1489
      %v1491 = vrot.slane %v1444, 1
      %v1492 = vrot.slane %v1171, 1
      %v1493 = vsel %vm1445, %v1491, %v1492
      %1494 = vrot.lane.b32.xlu0 %v1448, 16
      %v1495 = vpop.permute.xlu0 %1494
      %1496 = vrot.lane.b32.xlu0 %v1451, 16
      %v1497 = vpop.permute.xlu0 %1496
      %1498 = vrot.lane.b32.xlu0 %v1454, 16
      %v1499 = vpop.permute.xlu0 %1498
      %1500 = vrot.lane.b32.xlu0 %v1457, 16
      %v1501 = vpop.permute.xlu0 %1500
      %1502 = vrot.lane.b32.xlu0 %v1460, 16
      %v1503 = vpop.permute.xlu0 %1502
      %1504 = vrot.lane.b32.xlu0 %v1463, 16
      %v1505 = vpop.permute.xlu0 %1504
      %1506 = vrot.lane.b32.xlu0 %v1466, 16
      %v1507 = vpop.permute.xlu0 %1506
      %1508 = vrot.lane.b32.xlu0 %v1469, 16
      %v1509 = vpop.permute.xlu0 %1508
      %1510 = vrot.lane.b32.xlu0 %v1472, 16
      %v1511 = vpop.permute.xlu0 %1510
      %1512 = vrot.lane.b32.xlu0 %v1475, 16
      %v1513 = vpop.permute.xlu0 %1512
      %1514 = vrot.lane.b32.xlu0 %v1478, 16
      %v1515 = vpop.permute.xlu0 %1514
      %1516 = vrot.lane.b32.xlu0 %v1481, 16
      %v1517 = vpop.permute.xlu0 %1516
      %1518 = vrot.lane.b32.xlu0 %v1484, 16
      %v1519 = vpop.permute.xlu0 %1518
      %1520 = vrot.lane.b32.xlu0 %v1487, 16
      %v1521 = vpop.permute.xlu0 %1520
      %1522 = vrot.lane.b32.xlu0 %v1490, 16
      %v1523 = vpop.permute.xlu0 %1522
      %1524 = vrot.lane.b32.xlu0 %v1493, 16
      %v1525 = vpop.permute.xlu0 %1524
      %v1558 = vunpack.c.l.b16 %v915
      %v1559 = vunpack.c.l.b16 %v916
      %v1560 = vunpack.c.l.b16 %v917
      %v1561 = vunpack.c.l.b16 %v918
      %v1562 = vunpack.c.l.b16 %v919
      %v1563 = vunpack.c.l.b16 %v920
      %v1564 = vunpack.c.l.b16 %v921
      %v1565 = vunpack.c.l.b16 %v922
      %v1566 = vunpack.c.l.b16 %v923
      %v1567 = vunpack.c.l.b16 %v924
      %v1568 = vunpack.c.l.b16 %v925
      %v1569 = vunpack.c.l.b16 %v926
      %v1570 = vunpack.c.l.b16 %v927
      %v1571 = vunpack.c.l.b16 %v928
      %v1572 = vunpack.c.l.b16 %v929
      %v1573 = vunpack.c.l.b16 %v930
      %v1574 = vunpack.c.l.b16 %v931
      %v1575 = vunpack.c.l.b16 %v932
      %v1576 = vunpack.c.l.b16 %v933
      %v1577 = vunpack.c.l.b16 %v934
      %v1578 = vunpack.c.l.b16 %v935
      %v1579 = vunpack.c.l.b16 %v936
      %v1580 = vunpack.c.l.b16 %v937
      %v1581 = vunpack.c.l.b16 %v938
      %v1582 = vunpack.c.l.b16 %v939
      %v1583 = vunpack.c.l.b16 %v940
      %v1584 = vunpack.c.l.b16 %v941
      %v1585 = vunpack.c.l.b16 %v942
      %v1586 = vunpack.c.l.b16 %v943
      %v1587 = vunpack.c.l.b16 %v944
      %v1588 = vunpack.c.l.b16 %v945
      %v1589 = vunpack.c.l.b16 %v946
      %v1590 = vpack.c.b16 %v1559, %v1558
      %v1591 = vpack.c.b16 %v1561, %v1560
      %v1592 = vpack.c.b16 %v1563, %v1562
      %v1593 = vpack.c.b16 %v1565, %v1564
      %v1594 = vpack.c.b16 %v1567, %v1566
      %v1595 = vpack.c.b16 %v1569, %v1568
      %v1596 = vpack.c.b16 %v1571, %v1570
      %v1597 = vpack.c.b16 %v1573, %v1572
      %v1598 = vpack.c.b16 %v1575, %v1574
      %v1599 = vpack.c.b16 %v1577, %v1576
      %v1600 = vpack.c.b16 %v1579, %v1578
      %v1601 = vpack.c.b16 %v1581, %v1580
      %v1602 = vpack.c.b16 %v1583, %v1582
      %v1603 = vpack.c.b16 %v1585, %v1584
      %v1604 = vpack.c.b16 %v1587, %v1586
      %v1605 = vpack.c.b16 %v1589, %v1588
      %1606 = vrot.lane.b32.xlu0 %v1590, 24
      %v1607 = vpop.permute.xlu0 %1606
      %1608 = vrot.lane.b32.xlu0 %v1591, 24
      %v1609 = vpop.permute.xlu0 %1608
      %1610 = vrot.lane.b32.xlu0 %v1592, 24
      %v1611 = vpop.permute.xlu0 %1610
      %1612 = vrot.lane.b32.xlu0 %v1593, 24
      %v1613 = vpop.permute.xlu0 %1612
      %1614 = vrot.lane.b32.xlu0 %v1594, 24
      %v1615 = vpop.permute.xlu0 %1614
      %1616 = vrot.lane.b32.xlu0 %v1595, 24
      %v1617 = vpop.permute.xlu0 %1616
      %1618 = vrot.lane.b32.xlu0 %v1596, 24
      %v1619 = vpop.permute.xlu0 %1618
      %1620 = vrot.lane.b32.xlu0 %v1597, 24
      %v1621 = vpop.permute.xlu0 %1620
      %1622 = vrot.lane.b32.xlu0 %v1598, 24
      %v1623 = vpop.permute.xlu0 %1622
      %1624 = vrot.lane.b32.xlu0 %v1599, 24
      %v1625 = vpop.permute.xlu0 %1624
      %1626 = vrot.lane.b32.xlu0 %v1600, 24
      %v1627 = vpop.permute.xlu0 %1626
      %1628 = vrot.lane.b32.xlu0 %v1601, 24
      %v1629 = vpop.permute.xlu0 %1628
      %1630 = vrot.lane.b32.xlu0 %v1602, 24
      %v1631 = vpop.permute.xlu0 %1630
      %1632 = vrot.lane.b32.xlu0 %v1603, 24
      %v1633 = vpop.permute.xlu0 %1632
      %1634 = vrot.lane.b32.xlu0 %v1604, 24
      %v1635 = vpop.permute.xlu0 %1634
      %1636 = vrot.lane.b32.xlu0 %v1605, 24
      %v1637 = vpop.permute.xlu0 %1636
      %v1654 = vunpack.c.l.b16 %v947
      %v1655 = vunpack.c.l.b16 %v948
      %v1656 = vunpack.c.l.b16 %v949
      %v1657 = vunpack.c.l.b16 %v950
      %v1658 = vunpack.c.l.b16 %v951
      %v1659 = vunpack.c.l.b16 %v952
      %v1660 = vunpack.c.l.b16 %v953
      %v1661 = vunpack.c.l.b16 %v954
      %v1662 = vunpack.c.l.b16 %v955
      %v1663 = vunpack.c.l.b16 %v956
      %v1664 = vunpack.c.l.b16 %v957
      %v1665 = vunpack.c.l.b16 %v958
      %v1666 = vunpack.c.l.b16 %v959
      %v1667 = vunpack.c.l.b16 %v960
      %v1668 = vunpack.c.l.b16 %v961
      %v1669 = vunpack.c.l.b16 %v962
      %v1670 = vpack.c.b16 %v1654, %v1654
      %v1671 = vpack.c.b16 %v1655, %v1655
      %v1672 = vpack.c.b16 %v1656, %v1656
      %v1673 = vpack.c.b16 %v1657, %v1657
      %v1674 = vpack.c.b16 %v1658, %v1658
      %v1675 = vpack.c.b16 %v1659, %v1659
      %v1676 = vpack.c.b16 %v1660, %v1660
      %v1677 = vpack.c.b16 %v1661, %v1661
      %v1678 = vpack.c.b16 %v1662, %v1662
      %v1679 = vpack.c.b16 %v1663, %v1663
      %v1680 = vpack.c.b16 %v1664, %v1664
      %v1681 = vpack.c.b16 %v1665, %v1665
      %v1682 = vpack.c.b16 %v1666, %v1666
      %v1683 = vpack.c.b16 %v1667, %v1667
      %v1684 = vpack.c.b16 %v1668, %v1668
      %v1685 = vpack.c.b16 %v1669, %v1669
      %v1687 = vshrl.u32 %v1590, 16
      %v1689 = vshll.u32 %v1590, 16
      %v1691 = vrot.slane %v1689, 1
      %v1692 = vor.u32 %v1687, %v1691
      %v1694 = vshll.u32 %v1670, 16
      %v1696 = vrot.slane %v1694, 1
      %v1697 = vsel %vm1172, %v1692, %v1696
      %v1699 = vshrl.u32 %v1591, 16
      %v1701 = vshll.u32 %v1591, 16
      %v1703 = vrot.slane %v1701, 1
      %v1704 = vor.u32 %v1699, %v1703
      %v1706 = vshll.u32 %v1671, 16
      %v1708 = vrot.slane %v1706, 1
      %v1709 = vsel %vm1172, %v1704, %v1708
      %v1711 = vshrl.u32 %v1592, 16
      %v1713 = vshll.u32 %v1592, 16
      %v1715 = vrot.slane %v1713, 1
      %v1716 = vor.u32 %v1711, %v1715
      %v1718 = vshll.u32 %v1672, 16
      %v1720 = vrot.slane %v1718, 1
      %v1721 = vsel %vm1172, %v1716, %v1720
      %v1723 = vshrl.u32 %v1593, 16
      %v1725 = vshll.u32 %v1593, 16
      %v1727 = vrot.slane %v1725, 1
      %v1728 = vor.u32 %v1723, %v1727
      %v1730 = vshll.u32 %v1673, 16
      %v1732 = vrot.slane %v1730, 1
      %v1733 = vsel %vm1172, %v1728, %v1732
      %v1735 = vshrl.u32 %v1594, 16
      %v1737 = vshll.u32 %v1594, 16
      %v1739 = vrot.slane %v1737, 1
      %v1740 = vor.u32 %v1735, %v1739
      %v1742 = vshll.u32 %v1674, 16
      %v1744 = vrot.slane %v1742, 1
      %v1745 = vsel %vm1172, %v1740, %v1744
      %v1747 = vshrl.u32 %v1595, 16
      %v1749 = vshll.u32 %v1595, 16
      %v1751 = vrot.slane %v1749, 1
      %v1752 = vor.u32 %v1747, %v1751
      %v1754 = vshll.u32 %v1675, 16
      %v1756 = vrot.slane %v1754, 1
      %v1757 = vsel %vm1172, %v1752, %v1756
      %v1759 = vshrl.u32 %v1596, 16
      %v1761 = vshll.u32 %v1596, 16
      %v1763 = vrot.slane %v1761, 1
      %v1764 = vor.u32 %v1759, %v1763
      %v1766 = vshll.u32 %v1676, 16
      %v1768 = vrot.slane %v1766, 1
      %v1769 = vsel %vm1172, %v1764, %v1768
      %v1771 = vshrl.u32 %v1597, 16
      %v1773 = vshll.u32 %v1597, 16
      %v1775 = vrot.slane %v1773, 1
      %v1776 = vor.u32 %v1771, %v1775
      %v1778 = vshll.u32 %v1677, 16
      %v1780 = vrot.slane %v1778, 1
      %v1781 = vsel %vm1172, %v1776, %v1780
      %v1783 = vshrl.u32 %v1598, 16
      %v1785 = vshll.u32 %v1598, 16
      %v1787 = vrot.slane %v1785, 1
      %v1788 = vor.u32 %v1783, %v1787
      %v1790 = vshll.u32 %v1678, 16
      %v1792 = vrot.slane %v1790, 1
      %v1793 = vsel %vm1172, %v1788, %v1792
      %v1795 = vshrl.u32 %v1599, 16
      %v1797 = vshll.u32 %v1599, 16
      %v1799 = vrot.slane %v1797, 1
      %v1800 = vor.u32 %v1795, %v1799
      %v1802 = vshll.u32 %v1679, 16
      %v1804 = vrot.slane %v1802, 1
      %v1805 = vsel %vm1172, %v1800, %v1804
      %v1807 = vshrl.u32 %v1600, 16
      %v1809 = vshll.u32 %v1600, 16
      %v1811 = vrot.slane %v1809, 1
      %v1812 = vor.u32 %v1807, %v1811
      %v1814 = vshll.u32 %v1680, 16
      %v1816 = vrot.slane %v1814, 1
      %v1817 = vsel %vm1172, %v1812, %v1816
      %v1819 = vshrl.u32 %v1601, 16
      %v1821 = vshll.u32 %v1601, 16
      %v1823 = vrot.slane %v1821, 1
      %v1824 = vor.u32 %v1819, %v1823
      %v1826 = vshll.u32 %v1681, 16
      %v1828 = vrot.slane %v1826, 1
      %v1829 = vsel %vm1172, %v1824, %v1828
      %v1831 = vshrl.u32 %v1602, 16
      %v1833 = vshll.u32 %v1602, 16
      %v1835 = vrot.slane %v1833, 1
      %v1836 = vor.u32 %v1831, %v1835
      %v1838 = vshll.u32 %v1682, 16
      %v1840 = vrot.slane %v1838, 1
      %v1841 = vsel %vm1172, %v1836, %v1840
      %v1843 = vshrl.u32 %v1603, 16
      %v1845 = vshll.u32 %v1603, 16
      %v1847 = vrot.slane %v1845, 1
      %v1848 = vor.u32 %v1843, %v1847
      %v1850 = vshll.u32 %v1683, 16
      %v1852 = vrot.slane %v1850, 1
      %v1853 = vsel %vm1172, %v1848, %v1852
      %v1855 = vshrl.u32 %v1604, 16
      %v1857 = vshll.u32 %v1604, 16
      %v1859 = vrot.slane %v1857, 1
      %v1860 = vor.u32 %v1855, %v1859
      %v1862 = vshll.u32 %v1684, 16
      %v1864 = vrot.slane %v1862, 1
      %v1865 = vsel %vm1172, %v1860, %v1864
      %v1867 = vshrl.u32 %v1605, 16
      %v1869 = vshll.u32 %v1605, 16
      %v1871 = vrot.slane %v1869, 1
      %v1872 = vor.u32 %v1867, %v1871
      %v1874 = vshll.u32 %v1685, 16
      %v1876 = vrot.slane %v1874, 1
      %v1877 = vsel %vm1172, %v1872, %v1876
      %1878 = vrot.lane.b32.xlu0 %v1697, 32
      %v1879 = vpop.permute.xlu0 %1878
      %1880 = vrot.lane.b32.xlu0 %v1709, 32
      %v1881 = vpop.permute.xlu0 %1880
      %1882 = vrot.lane.b32.xlu0 %v1721, 32
      %v1883 = vpop.permute.xlu0 %1882
      %1884 = vrot.lane.b32.xlu0 %v1733, 32
      %v1885 = vpop.permute.xlu0 %1884
      %1886 = vrot.lane.b32.xlu0 %v1745, 32
      %v1887 = vpop.permute.xlu0 %1886
      %1888 = vrot.lane.b32.xlu0 %v1757, 32
      %v1889 = vpop.permute.xlu0 %1888
      %1890 = vrot.lane.b32.xlu0 %v1769, 32
      %v1891 = vpop.permute.xlu0 %1890
      %1892 = vrot.lane.b32.xlu0 %v1781, 32
      %v1893 = vpop.permute.xlu0 %1892
      %1894 = vrot.lane.b32.xlu0 %v1793, 32
      %v1895 = vpop.permute.xlu0 %1894
      %1896 = vrot.lane.b32.xlu0 %v1805, 32
      %v1897 = vpop.permute.xlu0 %1896
      %1898 = vrot.lane.b32.xlu0 %v1817, 32
      %v1899 = vpop.permute.xlu0 %1898
      %1900 = vrot.lane.b32.xlu0 %v1829, 32
      %v1901 = vpop.permute.xlu0 %1900
      %1902 = vrot.lane.b32.xlu0 %v1841, 32
      %v1903 = vpop.permute.xlu0 %1902
      %1904 = vrot.lane.b32.xlu0 %v1853, 32
      %v1905 = vpop.permute.xlu0 %1904
      %1906 = vrot.lane.b32.xlu0 %v1865, 32
      %v1907 = vpop.permute.xlu0 %1906
      %1908 = vrot.lane.b32.xlu0 %v1877, 32
      %v1909 = vpop.permute.xlu0 %1908
      %v1926 = vunpack.c.l.b16 %v963
      %v1927 = vunpack.c.l.b16 %v964
      %v1928 = vunpack.c.l.b16 %v965
      %v1929 = vunpack.c.l.b16 %v966
      %v1930 = vunpack.c.l.b16 %v967
      %v1931 = vunpack.c.l.b16 %v968
      %v1932 = vunpack.c.l.b16 %v969
      %v1933 = vunpack.c.l.b16 %v970
      %v1934 = vunpack.c.l.b16 %v971
      %v1935 = vunpack.c.l.b16 %v972
      %v1936 = vunpack.c.l.b16 %v973
      %v1937 = vunpack.c.l.b16 %v974
      %v1938 = vunpack.c.l.b16 %v975
      %v1939 = vunpack.c.l.b16 %v976
      %v1940 = vunpack.c.l.b16 %v977
      %v1941 = vunpack.c.l.b16 %v978
      %v1942 = vpack.c.b16 %v1559, %v1926
      %v1943 = vpack.c.b16 %v1561, %v1927
      %v1944 = vpack.c.b16 %v1563, %v1928
      %v1945 = vpack.c.b16 %v1565, %v1929
      %v1946 = vpack.c.b16 %v1567, %v1930
      %v1947 = vpack.c.b16 %v1569, %v1931
      %v1948 = vpack.c.b16 %v1571, %v1932
      %v1949 = vpack.c.b16 %v1573, %v1933
      %v1950 = vpack.c.b16 %v1575, %v1934
      %v1951 = vpack.c.b16 %v1577, %v1935
      %v1952 = vpack.c.b16 %v1579, %v1936
      %v1953 = vpack.c.b16 %v1581, %v1937
      %v1954 = vpack.c.b16 %v1583, %v1938
      %v1955 = vpack.c.b16 %v1585, %v1939
      %v1956 = vpack.c.b16 %v1587, %v1940
      %v1957 = vpack.c.b16 %v1589, %v1941
      %v1958 = vrot.slane %v1942, 1
      %v1959 = vrot.slane %v1670, 1
      %v1960 = vsel %vm1445, %v1958, %v1959
      %v1961 = vrot.slane %v1943, 1
      %v1962 = vrot.slane %v1671, 1
      %v1963 = vsel %vm1445, %v1961, %v1962
      %v1964 = vrot.slane %v1944, 1
      %v1965 = vrot.slane %v1672, 1
      %v1966 = vsel %vm1445, %v1964, %v1965
      %v1967 = vrot.slane %v1945, 1
      %v1968 = vrot.slane %v1673, 1
      %v1969 = vsel %vm1445, %v1967, %v1968
      %v1970 = vrot.slane %v1946, 1
      %v1971 = vrot.slane %v1674, 1
      %v1972 = vsel %vm1445, %v1970, %v1971
      %v1973 = vrot.slane %v1947, 1
      %v1974 = vrot.slane %v1675, 1
      %v1975 = vsel %vm1445, %v1973, %v1974
      %v1976 = vrot.slane %v1948, 1
      %v1977 = vrot.slane %v1676, 1
      %v1978 = vsel %vm1445, %v1976, %v1977
      %v1979 = vrot.slane %v1949, 1
      %v1980 = vrot.slane %v1677, 1
      %v1981 = vsel %vm1445, %v1979, %v1980
      %v1982 = vrot.slane %v1950, 1
      %v1983 = vrot.slane %v1678, 1
      %v1984 = vsel %vm1445, %v1982, %v1983
      %v1985 = vrot.slane %v1951, 1
      %v1986 = vrot.slane %v1679, 1
      %v1987 = vsel %vm1445, %v1985, %v1986
      %v1988 = vrot.slane %v1952, 1
      %v1989 = vrot.slane %v1680, 1
      %v1990 = vsel %vm1445, %v1988, %v1989
      %v1991 = vrot.slane %v1953, 1
      %v1992 = vrot.slane %v1681, 1
      %v1993 = vsel %vm1445, %v1991, %v1992
      %v1994 = vrot.slane %v1954, 1
      %v1995 = vrot.slane %v1682, 1
      %v1996 = vsel %vm1445, %v1994, %v1995
      %v1997 = vrot.slane %v1955, 1
      %v1998 = vrot.slane %v1683, 1
      %v1999 = vsel %vm1445, %v1997, %v1998
      %v2000 = vrot.slane %v1956, 1
      %v2001 = vrot.slane %v1684, 1
      %v2002 = vsel %vm1445, %v2000, %v2001
      %v2003 = vrot.slane %v1957, 1
      %v2004 = vrot.slane %v1685, 1
      %v2005 = vsel %vm1445, %v2003, %v2004
      %2006 = vrot.lane.b32.xlu0 %v1960, 40
      %v2007 = vpop.permute.xlu0 %2006
      %2008 = vrot.lane.b32.xlu0 %v1963, 40
      %v2009 = vpop.permute.xlu0 %2008
      %2010 = vrot.lane.b32.xlu0 %v1966, 40
      %v2011 = vpop.permute.xlu0 %2010
      %2012 = vrot.lane.b32.xlu0 %v1969, 40
      %v2013 = vpop.permute.xlu0 %2012
      %2014 = vrot.lane.b32.xlu0 %v1972, 40
      %v2015 = vpop.permute.xlu0 %2014
      %2016 = vrot.lane.b32.xlu0 %v1975, 40
      %v2017 = vpop.permute.xlu0 %2016
      %2018 = vrot.lane.b32.xlu0 %v1978, 40
      %v2019 = vpop.permute.xlu0 %2018
      %2020 = vrot.lane.b32.xlu0 %v1981, 40
      %v2021 = vpop.permute.xlu0 %2020
      %2022 = vrot.lane.b32.xlu0 %v1984, 40
      %v2023 = vpop.permute.xlu0 %2022
      %2024 = vrot.lane.b32.xlu0 %v1987, 40
      %v2025 = vpop.permute.xlu0 %2024
      %2026 = vrot.lane.b32.xlu0 %v1990, 40
      %v2027 = vpop.permute.xlu0 %2026
      %2028 = vrot.lane.b32.xlu0 %v1993, 40
      %v2029 = vpop.permute.xlu0 %2028
      %2030 = vrot.lane.b32.xlu0 %v1996, 40
      %v2031 = vpop.permute.xlu0 %2030
      %2032 = vrot.lane.b32.xlu0 %v1999, 40
      %v2033 = vpop.permute.xlu0 %2032
      %2034 = vrot.lane.b32.xlu0 %v2002, 40
      %v2035 = vpop.permute.xlu0 %2034
      %2036 = vrot.lane.b32.xlu0 %v2005, 40
      %v2037 = vpop.permute.xlu0 %2036
      %v2070 = vunpack.c.l.b16 %v980
      %v2071 = vunpack.c.l.b16 %v981
      %v2072 = vunpack.c.l.b16 %v982
      %v2073 = vunpack.c.l.b16 %v983
      %v2074 = vunpack.c.l.b16 %v984
      %v2075 = vunpack.c.l.b16 %v985
      %v2076 = vunpack.c.l.b16 %v986
      %v2077 = vunpack.c.l.b16 %v987
      %v2078 = vunpack.c.l.b16 %v988
      %v2079 = vunpack.c.l.b16 %v989
      %v2080 = vunpack.c.l.b16 %v990
      %v2081 = vunpack.c.l.b16 %v991
      %v2082 = vunpack.c.l.b16 %v992
      %v2083 = vunpack.c.l.b16 %v993
      %v2084 = vunpack.c.l.b16 %v994
      %v2085 = vunpack.c.l.b16 %v995
      %v2086 = vunpack.c.l.b16 %v996
      %v2087 = vunpack.c.l.b16 %v997
      %v2088 = vunpack.c.l.b16 %v998
      %v2089 = vunpack.c.l.b16 %v999
      %v2090 = vunpack.c.l.b16 %v1000
      %v2091 = vunpack.c.l.b16 %v1001
      %v2092 = vunpack.c.l.b16 %v1002
      %v2093 = vunpack.c.l.b16 %v1003
      %v2094 = vunpack.c.l.b16 %v1004
      %v2095 = vunpack.c.l.b16 %v1005
      %v2096 = vunpack.c.l.b16 %v1006
      %v2097 = vunpack.c.l.b16 %v1007
      %v2098 = vunpack.c.l.b16 %v1008
      %v2099 = vunpack.c.l.b16 %v1009
      %v2100 = vunpack.c.l.b16 %v1010
      %v2101 = vunpack.c.l.b16 %v1011
      %v2102 = vpack.c.b16 %v2071, %v2070
      %v2103 = vpack.c.b16 %v2073, %v2072
      %v2104 = vpack.c.b16 %v2075, %v2074
      %v2105 = vpack.c.b16 %v2077, %v2076
      %v2106 = vpack.c.b16 %v2079, %v2078
      %v2107 = vpack.c.b16 %v2081, %v2080
      %v2108 = vpack.c.b16 %v2083, %v2082
      %v2109 = vpack.c.b16 %v2085, %v2084
      %v2110 = vpack.c.b16 %v2087, %v2086
      %v2111 = vpack.c.b16 %v2089, %v2088
      %v2112 = vpack.c.b16 %v2091, %v2090
      %v2113 = vpack.c.b16 %v2093, %v2092
      %v2114 = vpack.c.b16 %v2095, %v2094
      %v2115 = vpack.c.b16 %v2097, %v2096
      %v2116 = vpack.c.b16 %v2099, %v2098
      %v2117 = vpack.c.b16 %v2101, %v2100
      %2118 = vrot.lane.b32.xlu0 %v2102, 48
      %v2119 = vpop.permute.xlu0 %2118
      %2120 = vrot.lane.b32.xlu0 %v2103, 48
      %v2121 = vpop.permute.xlu0 %2120
      %2122 = vrot.lane.b32.xlu0 %v2104, 48
      %v2123 = vpop.permute.xlu0 %2122
      %2124 = vrot.lane.b32.xlu0 %v2105, 48
      %v2125 = vpop.permute.xlu0 %2124
      %2126 = vrot.lane.b32.xlu0 %v2106, 48
      %v2127 = vpop.permute.xlu0 %2126
      %2128 = vrot.lane.b32.xlu0 %v2107, 48
      %v2129 = vpop.permute.xlu0 %2128
      %2130 = vrot.lane.b32.xlu0 %v2108, 48
      %v2131 = vpop.permute.xlu0 %2130
      %2132 = vrot.lane.b32.xlu0 %v2109, 48
      %v2133 = vpop.permute.xlu0 %2132
      %2134 = vrot.lane.b32.xlu0 %v2110, 48
      %v2135 = vpop.permute.xlu0 %2134
      %2136 = vrot.lane.b32.xlu0 %v2111, 48
      %v2137 = vpop.permute.xlu0 %2136
      %2138 = vrot.lane.b32.xlu0 %v2112, 48
      %v2139 = vpop.permute.xlu0 %2138
      %2140 = vrot.lane.b32.xlu0 %v2113, 48
      %v2141 = vpop.permute.xlu0 %2140
      %2142 = vrot.lane.b32.xlu0 %v2114, 48
      %v2143 = vpop.permute.xlu0 %2142
      %2144 = vrot.lane.b32.xlu0 %v2115, 48
      %v2145 = vpop.permute.xlu0 %2144
      %2146 = vrot.lane.b32.xlu0 %v2116, 48
      %v2147 = vpop.permute.xlu0 %2146
      %2148 = vrot.lane.b32.xlu0 %v2117, 48
      %v2149 = vpop.permute.xlu0 %2148
      %v2166 = vunpack.c.l.b16 %v1012
      %v2167 = vunpack.c.l.b16 %v1013
      %v2168 = vunpack.c.l.b16 %v1014
      %v2169 = vunpack.c.l.b16 %v1015
      %v2170 = vunpack.c.l.b16 %v1016
      %v2171 = vunpack.c.l.b16 %v1017
      %v2172 = vunpack.c.l.b16 %v1018
      %v2173 = vunpack.c.l.b16 %v1019
      %v2174 = vunpack.c.l.b16 %v1020
      %v2175 = vunpack.c.l.b16 %v1021
      %v2176 = vunpack.c.l.b16 %v1022
      %v2177 = vunpack.c.l.b16 %v1023
      %v2178 = vunpack.c.l.b16 %v1024
      %v2179 = vunpack.c.l.b16 %v1025
      %v2180 = vunpack.c.l.b16 %v1026
      %v2181 = vunpack.c.l.b16 %v1027
      %v2182 = vpack.c.b16 %v2166, %v2166
      %v2183 = vpack.c.b16 %v2167, %v2167
      %v2184 = vpack.c.b16 %v2168, %v2168
      %v2185 = vpack.c.b16 %v2169, %v2169
      %v2186 = vpack.c.b16 %v2170, %v2170
      %v2187 = vpack.c.b16 %v2171, %v2171
      %v2188 = vpack.c.b16 %v2172, %v2172
      %v2189 = vpack.c.b16 %v2173, %v2173
      %v2190 = vpack.c.b16 %v2174, %v2174
      %v2191 = vpack.c.b16 %v2175, %v2175
      %v2192 = vpack.c.b16 %v2176, %v2176
      %v2193 = vpack.c.b16 %v2177, %v2177
      %v2194 = vpack.c.b16 %v2178, %v2178
      %v2195 = vpack.c.b16 %v2179, %v2179
      %v2196 = vpack.c.b16 %v2180, %v2180
      %v2197 = vpack.c.b16 %v2181, %v2181
      %v2199 = vshrl.u32 %v2102, 16
      %v2201 = vshll.u32 %v2102, 16
      %v2203 = vrot.slane %v2201, 1
      %v2204 = vor.u32 %v2199, %v2203
      %v2206 = vshll.u32 %v2182, 16
      %v2208 = vrot.slane %v2206, 1
      %v2209 = vsel %vm1172, %v2204, %v2208
      %v2211 = vshrl.u32 %v2103, 16
      %v2213 = vshll.u32 %v2103, 16
      %v2215 = vrot.slane %v2213, 1
      %v2216 = vor.u32 %v2211, %v2215
      %v2218 = vshll.u32 %v2183, 16
      %v2220 = vrot.slane %v2218, 1
      %v2221 = vsel %vm1172, %v2216, %v2220
      %v2223 = vshrl.u32 %v2104, 16
      %v2225 = vshll.u32 %v2104, 16
      %v2227 = vrot.slane %v2225, 1
      %v2228 = vor.u32 %v2223, %v2227
      %v2230 = vshll.u32 %v2184, 16
      %v2232 = vrot.slane %v2230, 1
      %v2233 = vsel %vm1172, %v2228, %v2232
      %v2235 = vshrl.u32 %v2105, 16
      %v2237 = vshll.u32 %v2105, 16
      %v2239 = vrot.slane %v2237, 1
      %v2240 = vor.u32 %v2235, %v2239
      %v2242 = vshll.u32 %v2185, 16
      %v2244 = vrot.slane %v2242, 1
      %v2245 = vsel %vm1172, %v2240, %v2244
      %v2247 = vshrl.u32 %v2106, 16
      %v2249 = vshll.u32 %v2106, 16
      %v2251 = vrot.slane %v2249, 1
      %v2252 = vor.u32 %v2247, %v2251
      %v2254 = vshll.u32 %v2186, 16
      %v2256 = vrot.slane %v2254, 1
      %v2257 = vsel %vm1172, %v2252, %v2256
      %v2259 = vshrl.u32 %v2107, 16
      %v2261 = vshll.u32 %v2107, 16
      %v2263 = vrot.slane %v2261, 1
      %v2264 = vor.u32 %v2259, %v2263
      %v2266 = vshll.u32 %v2187, 16
      %v2268 = vrot.slane %v2266, 1
      %v2269 = vsel %vm1172, %v2264, %v2268
      %v2271 = vshrl.u32 %v2108, 16
      %v2273 = vshll.u32 %v2108, 16
      %v2275 = vrot.slane %v2273, 1
      %v2276 = vor.u32 %v2271, %v2275
      %v2278 = vshll.u32 %v2188, 16
      %v2280 = vrot.slane %v2278, 1
      %v2281 = vsel %vm1172, %v2276, %v2280
      %v2283 = vshrl.u32 %v2109, 16
      %v2285 = vshll.u32 %v2109, 16
      %v2287 = vrot.slane %v2285, 1
      %v2288 = vor.u32 %v2283, %v2287
      %v2290 = vshll.u32 %v2189, 16
      %v2292 = vrot.slane %v2290, 1
      %v2293 = vsel %vm1172, %v2288, %v2292
      %v2295 = vshrl.u32 %v2110, 16
      %v2297 = vshll.u32 %v2110, 16
      %v2299 = vrot.slane %v2297, 1
      %v2300 = vor.u32 %v2295, %v2299
      %v2302 = vshll.u32 %v2190, 16
      %v2304 = vrot.slane %v2302, 1
      %v2305 = vsel %vm1172, %v2300, %v2304
      %v2307 = vshrl.u32 %v2111, 16
      %v2309 = vshll.u32 %v2111, 16
      %v2311 = vrot.slane %v2309, 1
      %v2312 = vor.u32 %v2307, %v2311
      %v2314 = vshll.u32 %v2191, 16
      %v2316 = vrot.slane %v2314, 1
      %v2317 = vsel %vm1172, %v2312, %v2316
      %v2319 = vshrl.u32 %v2112, 16
      %v2321 = vshll.u32 %v2112, 16
      %v2323 = vrot.slane %v2321, 1
      %v2324 = vor.u32 %v2319, %v2323
      %v2326 = vshll.u32 %v2192, 16
      %v2328 = vrot.slane %v2326, 1
      %v2329 = vsel %vm1172, %v2324, %v2328
      %v2331 = vshrl.u32 %v2113, 16
      %v2333 = vshll.u32 %v2113, 16
      %v2335 = vrot.slane %v2333, 1
      %v2336 = vor.u32 %v2331, %v2335
      %v2338 = vshll.u32 %v2193, 16
      %v2340 = vrot.slane %v2338, 1
      %v2341 = vsel %vm1172, %v2336, %v2340
      %v2343 = vshrl.u32 %v2114, 16
      %v2345 = vshll.u32 %v2114, 16
      %v2347 = vrot.slane %v2345, 1
      %v2348 = vor.u32 %v2343, %v2347
      %v2350 = vshll.u32 %v2194, 16
      %v2352 = vrot.slane %v2350, 1
      %v2353 = vsel %vm1172, %v2348, %v2352
      %v2355 = vshrl.u32 %v2115, 16
      %v2357 = vshll.u32 %v2115, 16
      %v2359 = vrot.slane %v2357, 1
      %v2360 = vor.u32 %v2355, %v2359
      %v2362 = vshll.u32 %v2195, 16
      %v2364 = vrot.slane %v2362, 1
      %v2365 = vsel %vm1172, %v2360, %v2364
      %v2367 = vshrl.u32 %v2116, 16
      %v2369 = vshll.u32 %v2116, 16
      %v2371 = vrot.slane %v2369, 1
      %v2372 = vor.u32 %v2367, %v2371
      %v2374 = vshll.u32 %v2196, 16
      %v2376 = vrot.slane %v2374, 1
      %v2377 = vsel %vm1172, %v2372, %v2376
      %v2379 = vshrl.u32 %v2117, 16
      %v2381 = vshll.u32 %v2117, 16
      %v2383 = vrot.slane %v2381, 1
      %v2384 = vor.u32 %v2379, %v2383
      %v2386 = vshll.u32 %v2197, 16
      %v2388 = vrot.slane %v2386, 1
      %v2389 = vsel %vm1172, %v2384, %v2388
      %2390 = vrot.lane.b32.xlu0 %v2209, 56
      %v2391 = vpop.permute.xlu0 %2390
      %2392 = vrot.lane.b32.xlu0 %v2221, 56
      %v2393 = vpop.permute.xlu0 %2392
      %2394 = vrot.lane.b32.xlu0 %v2233, 56
      %v2395 = vpop.permute.xlu0 %2394
      %2396 = vrot.lane.b32.xlu0 %v2245, 56
      %v2397 = vpop.permute.xlu0 %2396
      %2398 = vrot.lane.b32.xlu0 %v2257, 56
      %v2399 = vpop.permute.xlu0 %2398
      %2400 = vrot.lane.b32.xlu0 %v2269, 56
      %v2401 = vpop.permute.xlu0 %2400
      %2402 = vrot.lane.b32.xlu0 %v2281, 56
      %v2403 = vpop.permute.xlu0 %2402
      %2404 = vrot.lane.b32.xlu0 %v2293, 56
      %v2405 = vpop.permute.xlu0 %2404
      %2406 = vrot.lane.b32.xlu0 %v2305, 56
      %v2407 = vpop.permute.xlu0 %2406
      %2408 = vrot.lane.b32.xlu0 %v2317, 56
      %v2409 = vpop.permute.xlu0 %2408
      %2410 = vrot.lane.b32.xlu0 %v2329, 56
      %v2411 = vpop.permute.xlu0 %2410
      %2412 = vrot.lane.b32.xlu0 %v2341, 56
      %v2413 = vpop.permute.xlu0 %2412
      %2414 = vrot.lane.b32.xlu0 %v2353, 56
      %v2415 = vpop.permute.xlu0 %2414
      %2416 = vrot.lane.b32.xlu0 %v2365, 56
      %v2417 = vpop.permute.xlu0 %2416
      %2418 = vrot.lane.b32.xlu0 %v2377, 56
      %v2419 = vpop.permute.xlu0 %2418
      %2420 = vrot.lane.b32.xlu0 %v2389, 56
      %v2421 = vpop.permute.xlu0 %2420
      %v2438 = vunpack.c.l.b16 %v1028
      %v2439 = vunpack.c.l.b16 %v1029
      %v2440 = vunpack.c.l.b16 %v1030
      %v2441 = vunpack.c.l.b16 %v1031
      %v2442 = vunpack.c.l.b16 %v1032
      %v2443 = vunpack.c.l.b16 %v1033
      %v2444 = vunpack.c.l.b16 %v1034
      %v2445 = vunpack.c.l.b16 %v1035
      %v2446 = vunpack.c.l.b16 %v1036
      %v2447 = vunpack.c.l.b16 %v1037
      %v2448 = vunpack.c.l.b16 %v1038
      %v2449 = vunpack.c.l.b16 %v1039
      %v2450 = vunpack.c.l.b16 %v1040
      %v2451 = vunpack.c.l.b16 %v1041
      %v2452 = vunpack.c.l.b16 %v1042
      %v2453 = vunpack.c.l.b16 %v1043
      %v2454 = vpack.c.b16 %v2071, %v2438
      %v2455 = vpack.c.b16 %v2073, %v2439
      %v2456 = vpack.c.b16 %v2075, %v2440
      %v2457 = vpack.c.b16 %v2077, %v2441
      %v2458 = vpack.c.b16 %v2079, %v2442
      %v2459 = vpack.c.b16 %v2081, %v2443
      %v2460 = vpack.c.b16 %v2083, %v2444
      %v2461 = vpack.c.b16 %v2085, %v2445
      %v2462 = vpack.c.b16 %v2087, %v2446
      %v2463 = vpack.c.b16 %v2089, %v2447
      %v2464 = vpack.c.b16 %v2091, %v2448
      %v2465 = vpack.c.b16 %v2093, %v2449
      %v2466 = vpack.c.b16 %v2095, %v2450
      %v2467 = vpack.c.b16 %v2097, %v2451
      %v2468 = vpack.c.b16 %v2099, %v2452
      %v2469 = vpack.c.b16 %v2101, %v2453
      %v2470 = vrot.slane %v2454, 1
      %v2471 = vrot.slane %v2182, 1
      %v2472 = vsel %vm1445, %v2470, %v2471
      %v2473 = vrot.slane %v2455, 1
      %v2474 = vrot.slane %v2183, 1
      %v2475 = vsel %vm1445, %v2473, %v2474
      %v2476 = vrot.slane %v2456, 1
      %v2477 = vrot.slane %v2184, 1
      %v2478 = vsel %vm1445, %v2476, %v2477
      %v2479 = vrot.slane %v2457, 1
      %v2480 = vrot.slane %v2185, 1
      %v2481 = vsel %vm1445, %v2479, %v2480
      %v2482 = vrot.slane %v2458, 1
      %v2483 = vrot.slane %v2186, 1
      %v2484 = vsel %vm1445, %v2482, %v2483
      %v2485 = vrot.slane %v2459, 1
      %v2486 = vrot.slane %v2187, 1
      %v2487 = vsel %vm1445, %v2485, %v2486
      %v2488 = vrot.slane %v2460, 1
      %v2489 = vrot.slane %v2188, 1
      %v2490 = vsel %vm1445, %v2488, %v2489
      %v2491 = vrot.slane %v2461, 1
      %v2492 = vrot.slane %v2189, 1
      %v2493 = vsel %vm1445, %v2491, %v2492
      %v2494 = vrot.slane %v2462, 1
      %v2495 = vrot.slane %v2190, 1
      %v2496 = vsel %vm1445, %v2494, %v2495
      %v2497 = vrot.slane %v2463, 1
      %v2498 = vrot.slane %v2191, 1
      %v2499 = vsel %vm1445, %v2497, %v2498
      %v2500 = vrot.slane %v2464, 1
      %v2501 = vrot.slane %v2192, 1
      %v2502 = vsel %vm1445, %v2500, %v2501
      %v2503 = vrot.slane %v2465, 1
      %v2504 = vrot.slane %v2193, 1
      %v2505 = vsel %vm1445, %v2503, %v2504
      %v2506 = vrot.slane %v2466, 1
      %v2507 = vrot.slane %v2194, 1
      %v2508 = vsel %vm1445, %v2506, %v2507
      %v2509 = vrot.slane %v2467, 1
      %v2510 = vrot.slane %v2195, 1
      %v2511 = vsel %vm1445, %v2509, %v2510
      %v2512 = vrot.slane %v2468, 1
      %v2513 = vrot.slane %v2196, 1
      %v2514 = vsel %vm1445, %v2512, %v2513
      %v2515 = vrot.slane %v2469, 1
      %v2516 = vrot.slane %v2197, 1
      %v2517 = vsel %vm1445, %v2515, %v2516
      %2518 = vrot.lane.b32.xlu0 %v2472, 64
      %v2519 = vpop.permute.xlu0 %2518
      %2520 = vrot.lane.b32.xlu0 %v2475, 64
      %v2521 = vpop.permute.xlu0 %2520
      %2522 = vrot.lane.b32.xlu0 %v2478, 64
      %v2523 = vpop.permute.xlu0 %2522
      %2524 = vrot.lane.b32.xlu0 %v2481, 64
      %v2525 = vpop.permute.xlu0 %2524
      %2526 = vrot.lane.b32.xlu0 %v2484, 64
      %v2527 = vpop.permute.xlu0 %2526
      %2528 = vrot.lane.b32.xlu0 %v2487, 64
      %v2529 = vpop.permute.xlu0 %2528
      %2530 = vrot.lane.b32.xlu0 %v2490, 64
      %v2531 = vpop.permute.xlu0 %2530
      %2532 = vrot.lane.b32.xlu0 %v2493, 64
      %v2533 = vpop.permute.xlu0 %2532
      %2534 = vrot.lane.b32.xlu0 %v2496, 64
      %v2535 = vpop.permute.xlu0 %2534
      %2536 = vrot.lane.b32.xlu0 %v2499, 64
      %v2537 = vpop.permute.xlu0 %2536
      %2538 = vrot.lane.b32.xlu0 %v2502, 64
      %v2539 = vpop.permute.xlu0 %2538
      %2540 = vrot.lane.b32.xlu0 %v2505, 64
      %v2541 = vpop.permute.xlu0 %2540
      %2542 = vrot.lane.b32.xlu0 %v2508, 64
      %v2543 = vpop.permute.xlu0 %2542
      %2544 = vrot.lane.b32.xlu0 %v2511, 64
      %v2545 = vpop.permute.xlu0 %2544
      %2546 = vrot.lane.b32.xlu0 %v2514, 64
      %v2547 = vpop.permute.xlu0 %2546
      %2548 = vrot.lane.b32.xlu0 %v2517, 64
      %v2549 = vpop.permute.xlu0 %2548
      %vm2550 = vcmask 64512
      %v2552 = vsel %vm2550, %v1108, %v1366
      %v2554 = vsel %vm2550, %v1109, %v1368
      %v2556 = vsel %vm2550, %v1110, %v1370
      %v2558 = vsel %vm2550, %v1111, %v1372
      %v2560 = vsel %vm2550, %v1112, %v1374
      %v2562 = vsel %vm2550, %v1113, %v1376
      %v2564 = vsel %vm2550, %v1114, %v1378
      %v2566 = vsel %vm2550, %v1115, %v1380
      %v2568 = vsel %vm2550, %v1116, %v1382
      %v2570 = vsel %vm2550, %v1117, %v1384
      %v2572 = vsel %vm2550, %v1118, %v1386
      %v2574 = vsel %vm2550, %v1119, %v1388
      %v2576 = vsel %vm2550, %v1120, %v1390
      %v2578 = vsel %vm2550, %v1121, %v1392
      %v2580 = vsel %vm2550, %v1122, %v1394
      %v2582 = vsel %vm2550, %v1123, %v1396
      %vm2583 = vcmask 130048
      %v2585 = vsel %vm2583, %v2552, %v1495
      %v2587 = vsel %vm2583, %v2554, %v1497
      %v2589 = vsel %vm2583, %v2556, %v1499
      %v2591 = vsel %vm2583, %v2558, %v1501
      %v2593 = vsel %vm2583, %v2560, %v1503
      %v2595 = vsel %vm2583, %v2562, %v1505
      %v2597 = vsel %vm2583, %v2564, %v1507
      %v2599 = vsel %vm2583, %v2566, %v1509
      %v2601 = vsel %vm2583, %v2568, %v1511
      %v2603 = vsel %vm2583, %v2570, %v1513
      %v2605 = vsel %vm2583, %v2572, %v1515
      %v2607 = vsel %vm2583, %v2574, %v1517
      %v2609 = vsel %vm2583, %v2576, %v1519
      %v2611 = vsel %vm2583, %v2578, %v1521
      %v2613 = vsel %vm2583, %v2580, %v1523
      %v2615 = vsel %vm2583, %v2582, %v1525
      %vm2616 = vcmask 195584
      %v2618 = vsel %vm2616, %v2585, %v1607
      %v2620 = vsel %vm2616, %v2587, %v1609
      %v2622 = vsel %vm2616, %v2589, %v1611
      %v2624 = vsel %vm2616, %v2591, %v1613
      %v2626 = vsel %vm2616, %v2593, %v1615
      %v2628 = vsel %vm2616, %v2595, %v1617
      %v2630 = vsel %vm2616, %v2597, %v1619
      %v2632 = vsel %vm2616, %v2599, %v1621
      %v2634 = vsel %vm2616, %v2601, %v1623
      %v2636 = vsel %vm2616, %v2603, %v1625
      %v2638 = vsel %vm2616, %v2605, %v1627
      %v2640 = vsel %vm2616, %v2607, %v1629
      %v2642 = vsel %vm2616, %v2609, %v1631
      %v2644 = vsel %vm2616, %v2611, %v1633
      %v2646 = vsel %vm2616, %v2613, %v1635
      %v2648 = vsel %vm2616, %v2615, %v1637
      %vm2649 = vcmask 261120
      %v2651 = vsel %vm2649, %v2618, %v1879
      %v2653 = vsel %vm2649, %v2620, %v1881
      %v2655 = vsel %vm2649, %v2622, %v1883
      %v2657 = vsel %vm2649, %v2624, %v1885
      %v2659 = vsel %vm2649, %v2626, %v1887
      %v2661 = vsel %vm2649, %v2628, %v1889
      %v2663 = vsel %vm2649, %v2630, %v1891
      %v2665 = vsel %vm2649, %v2632, %v1893
      %v2667 = vsel %vm2649, %v2634, %v1895
      %v2669 = vsel %vm2649, %v2636, %v1897
      %v2671 = vsel %vm2649, %v2638, %v1899
      %v2673 = vsel %vm2649, %v2640, %v1901
      %v2675 = vsel %vm2649, %v2642, %v1903
      %v2677 = vsel %vm2649, %v2644, %v1905
      %v2679 = vsel %vm2649, %v2646, %v1907
      %v2681 = vsel %vm2649, %v2648, %v1909
      %vm2682 = vcmask 326656
      %v2684 = vsel %vm2682, %v2651, %v2007
      %v2686 = vsel %vm2682, %v2653, %v2009
      %v2688 = vsel %vm2682, %v2655, %v2011
      %v2690 = vsel %vm2682, %v2657, %v2013
      %v2692 = vsel %vm2682, %v2659, %v2015
      %v2694 = vsel %vm2682, %v2661, %v2017
      %v2696 = vsel %vm2682, %v2663, %v2019
      %v2698 = vsel %vm2682, %v2665, %v2021
      %v2700 = vsel %vm2682, %v2667, %v2023
      %v2702 = vsel %vm2682, %v2669, %v2025
      %v2704 = vsel %vm2682, %v2671, %v2027
      %v2706 = vsel %vm2682, %v2673, %v2029
      %v2708 = vsel %vm2682, %v2675, %v2031
      %v2710 = vsel %vm2682, %v2677, %v2033
      %v2712 = vsel %vm2682, %v2679, %v2035
      %v2714 = vsel %vm2682, %v2681, %v2037
      %vm2715 = vcmask 392192
      %v2717 = vsel %vm2715, %v2684, %v2119
      %v2719 = vsel %vm2715, %v2686, %v2121
      %v2721 = vsel %vm2715, %v2688, %v2123
      %v2723 = vsel %vm2715, %v2690, %v2125
      %v2725 = vsel %vm2715, %v2692, %v2127
      %v2727 = vsel %vm2715, %v2694, %v2129
      %v2729 = vsel %vm2715, %v2696, %v2131
      %v2731 = vsel %vm2715, %v2698, %v2133
      %v2733 = vsel %vm2715, %v2700, %v2135
      %v2735 = vsel %vm2715, %v2702, %v2137
      %v2737 = vsel %vm2715, %v2704, %v2139
      %v2739 = vsel %vm2715, %v2706, %v2141
      %v2741 = vsel %vm2715, %v2708, %v2143
      %v2743 = vsel %vm2715, %v2710, %v2145
      %v2745 = vsel %vm2715, %v2712, %v2147
      %v2747 = vsel %vm2715, %v2714, %v2149
      %vm2748 = vcmask 457728
      %v2750 = vsel %vm2748, %v2717, %v2391
      %v2752 = vsel %vm2748, %v2719, %v2393
      %v2754 = vsel %vm2748, %v2721, %v2395
      %v2756 = vsel %vm2748, %v2723, %v2397
      %v2758 = vsel %vm2748, %v2725, %v2399
      %v2760 = vsel %vm2748, %v2727, %v2401
      %v2762 = vsel %vm2748, %v2729, %v2403
      %v2764 = vsel %vm2748, %v2731, %v2405
      %v2766 = vsel %vm2748, %v2733, %v2407
      %v2768 = vsel %vm2748, %v2735, %v2409
      %v2770 = vsel %vm2748, %v2737, %v2411
      %v2772 = vsel %vm2748, %v2739, %v2413
      %v2774 = vsel %vm2748, %v2741, %v2415
      %v2776 = vsel %vm2748, %v2743, %v2417
      %v2778 = vsel %vm2748, %v2745, %v2419
      %v2780 = vsel %vm2748, %v2747, %v2421
      %vm2781 = vcmask 523264
      %v2783 = vsel %vm2781, %v2750, %v2519
      %v2785 = vsel %vm2781, %v2752, %v2521
      %v2787 = vsel %vm2781, %v2754, %v2523
      %v2789 = vsel %vm2781, %v2756, %v2525
      %v2791 = vsel %vm2781, %v2758, %v2527
      %v2793 = vsel %vm2781, %v2760, %v2529
      %v2795 = vsel %vm2781, %v2762, %v2531
      %v2797 = vsel %vm2781, %v2764, %v2533
      %v2799 = vsel %vm2781, %v2766, %v2535
      %v2801 = vsel %vm2781, %v2768, %v2537
      %v2803 = vsel %vm2781, %v2770, %v2539
      %v2805 = vsel %vm2781, %v2772, %v2541
      %v2807 = vsel %vm2781, %v2774, %v2543
      %v2809 = vsel %vm2781, %v2776, %v2545
      %v2811 = vsel %vm2781, %v2778, %v2547
      %v2813 = vsel %vm2781, %v2780, %v2549
      %v2814 = vld [vmem:[%s1] sm:$0xf]
      %v2815 = vld [vmem:[%s1 + $0x4] sm:$0xf]
      %v2816 = vld [vmem:[%s1 + $0x8] sm:$0xf]
      %v2817 = vld [vmem:[%s1 + $0xc] sm:$0xf]
      %v2818 = vld [vmem:[%s1 + $0x10] sm:$0xf]
      %v2819 = vld [vmem:[%s1 + $0x14] sm:$0xf]
      %v2820 = vld [vmem:[%s1 + $0x18] sm:$0xf]
      %v2821 = vld [vmem:[%s1 + $0x1c] sm:$0xf]
      %v2822 = vld [vmem:[%s1 + $0x20] sm:$0xf]
      %v2823 = vld [vmem:[%s2] sm:$0x1]
      %v2825 = vlaneseq
      %v2826 = vshrl.u32 %v2825, 7
      %v2827 = vsub.s32 0, %v2826
      %v2828 = vrot.slane %v2823, %v2827
      %v2839 = vunpack.c.l.b16 %v2814
      %v2840 = vunpack.c.l.b16 %v2815
      %v2841 = vunpack.c.l.b16 %v2816
      %v2842 = vunpack.c.l.b16 %v2817
      %v2843 = vunpack.c.l.b16 %v2818
      %v2844 = vunpack.c.l.b16 %v2819
      %v2845 = vunpack.c.l.b16 %v2820
      %v2846 = vunpack.c.l.b16 %v2821
      %v2847 = vunpack.c.l.b16 %v2822
      %v2848 = vpack.c.b16 %v2840, %v2839
      %v2849 = vpack.c.b16 %v2842, %v2841
      %v2850 = vpack.c.b16 %v2844, %v2843
      %v2851 = vpack.c.b16 %v2846, %v2845
      %v2852 = vpack.c.b16 %v2847, %v2847
      %vm2857 = vcmask 588800
      %v2858 = vsel %vm2857, %v2783, 0
      %v2860 = vsel %vm2857, %v2785, 0
      %v2862 = vsel %vm2857, %v2787, 0
      %v2864 = vsel %vm2857, %v2789, 0
      %v2866 = vsel %vm2857, %v2791, 0
      %v2868 = vsel %vm2857, %v2793, 0
      %v2870 = vsel %vm2857, %v2795, 0
      %v2872 = vsel %vm2857, %v2797, 0
      %v2874 = vsel %vm2857, %v2799, 0
      %v2876 = vsel %vm2857, %v2801, 0
      %v2878 = vsel %vm2857, %v2803, 0
      %v2880 = vsel %vm2857, %v2805, 0
      %v2882 = vsel %vm2857, %v2807, 0
      %v2884 = vsel %vm2857, %v2809, 0
      %v2886 = vsel %vm2857, %v2811, 0
      %v2888 = vsel %vm2857, %v2813, 0
      %vm2890 = vcmask 1043456
      %v2892 = vsel %vm2890, %v2852, 0
      %2894 = vmatprep.subr.bf16.mxu0 0
      %2895 = vmatpush1.bf16.msra.mxu0 %v2848
      %2896 = vmatprep.subr.bf16.mxu0 0
      %2897 = vmatpush1.bf16.msra.mxu0 %v2849
      %2898 = vmatprep.subr.bf16.mxu0 0
      %2899 = vmatpush1.bf16.msra.mxu0 %v2850
      %2900 = vmatprep.subr.bf16.mxu0 0
      %2901 = vmatpush1.bf16.msra.mxu0 %v2851
      %2902 = vmatprep.subr.bf16.mxu0 0
      %2903 = vmatpush1.bf16.msra.mxu0 %v2892
      %2904 = vmatprep.subr.bf16.mxu0 0
      %2905 = vmatpush1.bf16.msra.mxu0 0
      %2906 = vmatprep.subr.bf16.mxu0 0
      %2907 = vmatpush1.bf16.msra.mxu0 0
      %2908 = vmatprep.subr.bf16.mxu0 0
      %2909 = vmatpush1.bf16.msra.mxu0 0
      %2910 = vmatprep.subr.bf16.mxu0 0
      %2911 = vmatpush1.bf16.msra.mxu0 0
      %2912 = vmatprep.subr.bf16.mxu0 0
      %2913 = vmatpush1.bf16.msra.mxu0 0
      %2914 = vmatprep.subr.bf16.mxu0 0
      %2915 = vmatpush1.bf16.msra.mxu0 0
      %2916 = vmatprep.subr.bf16.mxu0 0
      %2917 = vmatpush1.bf16.msra.mxu0 0
      %2918 = vmatprep.subr.bf16.mxu0 0
      %2919 = vmatpush1.bf16.msra.mxu0 0
      %2920 = vmatprep.subr.bf16.mxu0 0
      %2921 = vmatpush1.bf16.msra.mxu0 0
      %2922 = vmatprep.subr.bf16.mxu0 0
      %2923 = vmatpush1.bf16.msra.mxu0 0
      %2924 = vmatprep.subr.bf16.mxu0 0
      %2925 = vmatpush1.bf16.msra.mxu0 0
      %2926 = vmatprep.mubr.bf16.mxu0 0
      %2927 = vmatmul.mubr.bf16.gmra.mrb[0].mxu0 %v2858
      %v2928 = vpop.f32.mrb[0].mxu0
      %v2929 = vadd.f32 %v2828, %v2928
      %v2930 = vpop.f32.mrb[0].mxu0
      %v2931 = vpop.f32.mrb[0].mxu0
      %v2932 = vadd.f32 %v2828, %v2931
      %v2933 = vpop.f32.mrb[0].mxu0
      %2934 = vmatprep.mubr.bf16.mxu0 0
      %2935 = vmatmul.mubr.bf16.gmra.mrb[0].mxu0 %v2860
      %v2936 = vpop.f32.mrb[0].mxu0
      %v2937 = vadd.f32 %v2828, %v2936
      %v2938 = vpop.f32.mrb[0].mxu0
      %v2939 = vpop.f32.mrb[0].mxu0
      %v2940 = vadd.f32 %v2828, %v2939
      %v2941 = vpop.f32.mrb[0].mxu0
      %2942 = vmatprep.mubr.bf16.mxu0 0
      %2943 = vmatmul.mubr.bf16.gmra.mrb[0].mxu0 %v2862
      %v2944 = vpop.f32.mrb[0].mxu0
      %v2945 = vadd.f32 %v2828, %v2944
      %v2946 = vpop.f32.mrb[0].mxu0
      %v2947 = vpop.f32.mrb[0].mxu0
      %v2948 = vadd.f32 %v2828, %v2947
      %v2949 = vpop.f32.mrb[0].mxu0
      %2950 = vmatprep.mubr.bf16.mxu0 0
      %2951 = vmatmul.mubr.bf16.gmra.mrb[0].mxu0 %v2864
      %v2952 = vpop.f32.mrb[0].mxu0
      %v2953 = vadd.f32 %v2828, %v2952
      %v2954 = vpop.f32.mrb[0].mxu0
      %v2955 = vpop.f32.mrb[0].mxu0
      %v2956 = vadd.f32 %v2828, %v2955
      %v2957 = vpop.f32.mrb[0].mxu0
      %2958 = vmatprep.mubr.bf16.mxu0 0
      %2959 = vmatmul.mubr.bf16.gmra.mrb[0].mxu0 %v2866
      %v2960 = vpop.f32.mrb[0].mxu0
      %v2961 = vadd.f32 %v2828, %v2960
      %v2962 = vpop.f32.mrb[0].mxu0
      %v2963 = vpop.f32.mrb[0].mxu0
      %v2964 = vadd.f32 %v2828, %v2963
      %v2965 = vpop.f32.mrb[0].mxu0
      %2966 = vmatprep.mubr.bf16.mxu0 0
      %2967 = vmatmul.mubr.bf16.gmra.mrb[0].mxu0 %v2868
      %v2968 = vpop.f32.mrb[0].mxu0
      %v2969 = vadd.f32 %v2828, %v2968
      %v2970 = vpop.f32.mrb[0].mxu0
      %v2971 = vpop.f32.mrb[0].mxu0
      %v2972 = vadd.f32 %v2828, %v2971
      %v2973 = vpop.f32.mrb[0].mxu0
      %2974 = vmatprep.mubr.bf16.mxu0 0
      %2975 = vmatmul.mubr.bf16.gmra.mrb[0].mxu0 %v2870
      %v2976 = vpop.f32.mrb[0].mxu0
      %v2977 = vadd.f32 %v2828, %v2976
      %v2978 = vpop.f32.mrb[0].mxu0
      %v2979 = vpop.f32.mrb[0].mxu0
      %v2980 = vadd.f32 %v2828, %v2979
      %v2981 = vpop.f32.mrb[0].mxu0
      %2982 = vmatprep.mubr.bf16.mxu0 0
      %2983 = vmatmul.mubr.bf16.gmra.mrb[0].mxu0 %v2872
      %v2984 = vpop.f32.mrb[0].mxu0
      %v2985 = vadd.f32 %v2828, %v2984
      %v2986 = vpop.f32.mrb[0].mxu0
      %v2987 = vpop.f32.mrb[0].mxu0
      %v2988 = vadd.f32 %v2828, %v2987
      %v2989 = vpop.f32.mrb[0].mxu0
      %2990 = vmatprep.mubr.bf16.mxu0 0
      %2991 = vmatmul.mubr.bf16.gmra.mrb[0].mxu0 %v2874
      %v2992 = vpop.f32.mrb[0].mxu0
      %v2993 = vadd.f32 %v2828, %v2992
      %v2994 = vpop.f32.mrb[0].mxu0
      %v2995 = vpop.f32.mrb[0].mxu0
      %v2996 = vadd.f32 %v2828, %v2995
      %v2997 = vpop.f32.mrb[0].mxu0
      %2998 = vmatprep.mubr.bf16.mxu0 0
      %2999 = vmatmul.mubr.bf16.gmra.mrb[0].mxu0 %v2876
      %v3000 = vpop.f32.mrb[0].mxu0
      %v3001 = vadd.f32 %v2828, %v3000
      %v3002 = vpop.f32.mrb[0].mxu0
      %v3003 = vpop.f32.mrb[0].mxu0
      %v3004 = vadd.f32 %v2828, %v3003
      %v3005 = vpop.f32.mrb[0].mxu0
      %3006 = vmatprep.mubr.bf16.mxu0 0
      %3007 = vmatmul.mubr.bf16.gmra.mrb[0].mxu0 %v2878
      %v3008 = vpop.f32.mrb[0].mxu0
      %v3009 = vadd.f32 %v2828, %v3008
      %v3010 = vpop.f32.mrb[0].mxu0
      %v3011 = vpop.f32.mrb[0].mxu0
      %v3012 = vadd.f32 %v2828, %v3011
      %v3013 = vpop.f32.mrb[0].mxu0
      %3014 = vmatprep.mubr.bf16.mxu0 0
      %3015 = vmatmul.mubr.bf16.gmra.mrb[0].mxu0 %v2880
      %v3016 = vpop.f32.mrb[0].mxu0
      %v3017 = vadd.f32 %v2828, %v3016
      %v3018 = vpop.f32.mrb[0].mxu0
      %v3019 = vpop.f32.mrb[0].mxu0
      %v3020 = vadd.f32 %v2828, %v3019
      %v3021 = vpop.f32.mrb[0].mxu0
      %3022 = vmatprep.mubr.bf16.mxu0 0
      %3023 = vmatmul.mubr.bf16.gmra.mrb[0].mxu0 %v2882
      %v3024 = vpop.f32.mrb[0].mxu0
      %v3025 = vadd.f32 %v2828, %v3024
      %v3026 = vpop.f32.mrb[0].mxu0
      %v3027 = vpop.f32.mrb[0].mxu0
      %v3028 = vadd.f32 %v2828, %v3027
      %v3029 = vpop.f32.mrb[0].mxu0
      %3030 = vmatprep.mubr.bf16.mxu0 0
      %3031 = vmatmul.mubr.bf16.gmra.mrb[0].mxu0 %v2884
      %v3032 = vpop.f32.mrb[0].mxu0
      %v3033 = vadd.f32 %v2828, %v3032
      %v3034 = vpop.f32.mrb[0].mxu0
      %v3035 = vpop.f32.mrb[0].mxu0
      %v3036 = vadd.f32 %v2828, %v3035
      %v3037 = vpop.f32.mrb[0].mxu0
      %3038 = vmatprep.mubr.bf16.mxu0 0
      %3039 = vmatmul.mubr.bf16.gmra.mrb[0].mxu0 %v2886
      %v3040 = vpop.f32.mrb[0].mxu0
      %v3041 = vadd.f32 %v2828, %v3040
      %v3042 = vpop.f32.mrb[0].mxu0
      %v3043 = vpop.f32.mrb[0].mxu0
      %v3044 = vadd.f32 %v2828, %v3043
      %v3045 = vpop.f32.mrb[0].mxu0
      %3046 = vmatprep.mubr.bf16.mxu0 0
      %3047 = vmatmul.mubr.bf16.gmra.mrb[0].mxu0 %v2888
      %v3048 = vpop.f32.mrb[0].mxu0
      %v3049 = vadd.f32 %v2828, %v3048
      %v3050 = vpop.f32.mrb[0].mxu0
      %v3051 = vpop.f32.mrb[0].mxu0
      %v3052 = vadd.f32 %v2828, %v3051
      %v3053 = vpop.f32.mrb[0].mxu0
      %3054 = vdwg.mxu0
      %v3055 = vmax.f32 %v2929, 0.0
      %v3056 = vmax.f32 %v2932, 0.0
      %v3057 = vmax.f32 %v2937, 0.0
      %v3058 = vmax.f32 %v2940, 0.0
      %v3059 = vmax.f32 %v2945, 0.0
      %v3060 = vmax.f32 %v2948, 0.0
      %v3061 = vmax.f32 %v2953, 0.0
      %v3062 = vmax.f32 %v2956, 0.0
      %v3063 = vmax.f32 %v2961, 0.0
      %v3064 = vmax.f32 %v2964, 0.0
      %v3065 = vmax.f32 %v2969, 0.0
      %v3066 = vmax.f32 %v2972, 0.0
      %v3067 = vmax.f32 %v2977, 0.0
      %v3068 = vmax.f32 %v2980, 0.0
      %v3069 = vmax.f32 %v2985, 0.0
      %v3070 = vmax.f32 %v2988, 0.0
      %v3071 = vmax.f32 %v2993, 0.0
      %v3072 = vmax.f32 %v2996, 0.0
      %v3073 = vmax.f32 %v3001, 0.0
      %v3074 = vmax.f32 %v3004, 0.0
      %v3075 = vmax.f32 %v3009, 0.0
      %v3076 = vmax.f32 %v3012, 0.0
      %v3077 = vmax.f32 %v3017, 0.0
      %v3078 = vmax.f32 %v3020, 0.0
      %v3079 = vmax.f32 %v3025, 0.0
      %v3080 = vmax.f32 %v3028, 0.0
      %v3081 = vmax.f32 %v3033, 0.0
      %v3082 = vmax.f32 %v3036, 0.0
      %v3083 = vmax.f32 %v3041, 0.0
      %v3084 = vmax.f32 %v3044, 0.0
      %v3085 = vmax.f32 %v3049, 0.0
      %v3086 = vmax.f32 %v3052, 0.0
      %3087 = vst.msk [vmem:[#allocation3] sm:$0xf] %vm258, 0
      %3088 = vst.msk [vmem:[#allocation3 + $0x4] sm:$0xf] %vm258, 0
      %3089 = vst.msk [vmem:[#allocation3 + $0x8] sm:$0x1] %vm261, 0
      %3090 = vst.msk [vmem:[#allocation3 + $0xc] sm:$0xf] %vm258, 0
      %3091 = vst.msk [vmem:[#allocation3 + $0x10] sm:$0xf] %vm258, 0
      %3092 = vst.msk [vmem:[#allocation3 + $0x14] sm:$0x1] %vm261, 0
      %3093 = vst.msk [vmem:[#allocation3 + $0x18] sm:$0xf] %vm258, 0
      %3094 = vst.msk [vmem:[#allocation3 + $0x1c] sm:$0xf] %vm258, 0
      %3095 = vst.msk [vmem:[#allocation3 + $0x20] sm:$0x1] %vm261, 0
      %3096 = vst.msk [vmem:[#allocation3 + $0x24] sm:$0xf] %vm258, 0
      %3097 = vst.msk [vmem:[#allocation3 + $0x28] sm:$0xf] %vm258, 0
      %3098 = vst.msk [vmem:[#allocation3 + $0x2c] sm:$0x1] %vm261, 0
      %3099 = vst.msk [vmem:[#allocation3 + $0x30] sm:$0xf] %vm258, 0
      %3100 = vst.msk [vmem:[#allocation3 + $0x34] sm:$0xf] %vm258, 0
      %3101 = vst.msk [vmem:[#allocation3 + $0x38] sm:$0x1] %vm261, 0
      %3102 = vst.msk [vmem:[#allocation3 + $0x3c] sm:$0xf] %vm258, 0
      %3103 = vst.msk [vmem:[#allocation3 + $0x40] sm:$0xf] %vm258, 0
      %3104 = vst.msk [vmem:[#allocation3 + $0x44] sm:$0x1] %vm261, 0
      %3105 = vst.msk [vmem:[#allocation3 + $0x48] sm:$0xf] %vm258, 0
      %3106 = vst.msk [vmem:[#allocation3 + $0x4c] sm:$0xf] %vm258, 0
      %3107 = vst.msk [vmem:[#allocation3 + $0x50] sm:$0x1] %vm261, 0
      %3108 = vst.msk [vmem:[#allocation3 + $0x54] sm:$0xf] %vm258, 0
      %3109 = vst.msk [vmem:[#allocation3 + $0x58] sm:$0xf] %vm258, 0
      %3110 = vst.msk [vmem:[#allocation3 + $0x5c] sm:$0x1] %vm261, 0
      %3111 = vst.msk [vmem:[#allocation3 + $0x60] sm:$0xf] %vm258, 0
      %3112 = vst.msk [vmem:[#allocation3 + $0x64] sm:$0xf] %vm258, 0
      %3113 = vst.msk [vmem:[#allocation3 + $0x68] sm:$0x1] %vm261, 0
      %3114 = vst.msk [vmem:[#allocation3 + $0x6c] sm:$0xf] %vm258, 0
      %3115 = vst.msk [vmem:[#allocation3 + $0x70] sm:$0xf] %vm258, 0
      %3116 = vst.msk [vmem:[#allocation3 + $0x74] sm:$0x1] %vm261, 0
      %3117 = vst.msk [vmem:[#allocation3 + $0x78] sm:$0xf] %vm258, 0
      %3118 = vst.msk [vmem:[#allocation3 + $0x7c] sm:$0xf] %vm258, 0
      %3119 = vst.msk [vmem:[#allocation3 + $0x80] sm:$0x1] %vm261, 0
      %3120 = vst.msk [vmem:[#allocation3 + $0x84] sm:$0xf] %vm258, 0
      %3121 = vst.msk [vmem:[#allocation3 + $0x88] sm:$0xf] %vm258, 0
      %3122 = vst.msk [vmem:[#allocation3 + $0x8c] sm:$0x1] %vm261, 0
      %3123 = vst.msk [vmem:[#allocation3 + $0x90] sm:$0xf] %vm258, 0
      %3124 = vst.msk [vmem:[#allocation3 + $0x94] sm:$0xf] %vm258, 0
      %3125 = vst.msk [vmem:[#allocation3 + $0x98] sm:$0x1] %vm261, 0
      %3126 = vst.msk [vmem:[#allocation3 + $0x9c] sm:$0xf] %vm258, 0
      %3127 = vst.msk [vmem:[#allocation3 + $0xa0] sm:$0xf] %vm258, 0
      %3128 = vst.msk [vmem:[#allocation3 + $0xa4] sm:$0x1] %vm261, 0
      %3129 = vst.msk [vmem:[#allocation3 + $0xa8] sm:$0xf] %vm258, 0
      %3130 = vst.msk [vmem:[#allocation3 + $0xac] sm:$0xf] %vm258, 0
      %3131 = vst.msk [vmem:[#allocation3 + $0xb0] sm:$0x1] %vm261, 0
      %3132 = vst.msk [vmem:[#allocation3 + $0xb4] sm:$0xf] %vm258, 0
      %3133 = vst.msk [vmem:[#allocation3 + $0xb8] sm:$0xf] %vm258, 0
      %3134 = vst.msk [vmem:[#allocation3 + $0xbc] sm:$0x1] %vm261, 0
      %3135 = vst.msk [vmem:[#allocation3 + $0xc0] sm:$0xf] %vm258, 0
      %3136 = vst.msk [vmem:[#allocation3 + $0xc4] sm:$0xf] %vm258, 0
      %3137 = vst.msk [vmem:[#allocation3 + $0xc8] sm:$0x1] %vm261, 0
      %3138 = vst.msk [vmem:[#allocation3 + $0xcc] sm:$0xf] %vm258, 0
      %3139 = vst.msk [vmem:[#allocation3 + $0xd0] sm:$0xf] %vm258, 0
      %3140 = vst.msk [vmem:[#allocation3 + $0xd4] sm:$0x1] %vm261, 0
      %v3141 = vpack.c.bf16 %v3056, %v3055
      %v3142 = vpack.c.bf16 %v3058, %v3057
      %v3143 = vpack.c.bf16 %v3060, %v3059
      %v3144 = vpack.c.bf16 %v3062, %v3061
      %v3145 = vpack.c.bf16 %v3064, %v3063
      %v3146 = vpack.c.bf16 %v3066, %v3065
      %v3147 = vpack.c.bf16 %v3068, %v3067
      %v3148 = vpack.c.bf16 %v3070, %v3069
      %v3149 = vpack.c.bf16 %v3072, %v3071
      %v3150 = vpack.c.bf16 %v3074, %v3073
      %v3151 = vpack.c.bf16 %v3076, %v3075
      %v3152 = vpack.c.bf16 %v3078, %v3077
      %v3153 = vpack.c.bf16 %v3080, %v3079
      %v3154 = vpack.c.bf16 %v3082, %v3081
      %v3155 = vpack.c.bf16 %v3084, %v3083
      %v3156 = vpack.c.bf16 %v3086, %v3085
      %v3173 = vunpack.c.l.b16 %v3141
      %v3174 = vunpack.c.h.b16 %v3141
      %v3175 = vunpack.c.l.b16 %v3142
      %v3176 = vunpack.c.h.b16 %v3142
      %v3177 = vunpack.c.l.b16 %v3143
      %v3178 = vunpack.c.h.b16 %v3143
      %v3179 = vunpack.c.l.b16 %v3144
      %v3180 = vunpack.c.h.b16 %v3144
      %v3181 = vunpack.c.l.b16 %v3145
      %v3182 = vunpack.c.h.b16 %v3145
      %v3183 = vunpack.c.l.b16 %v3146
      %v3184 = vunpack.c.h.b16 %v3146
      %v3185 = vunpack.c.l.b16 %v3147
      %v3186 = vunpack.c.h.b16 %v3147
      %v3187 = vunpack.c.l.b16 %v3148
      %v3188 = vunpack.c.h.b16 %v3148
      %v3189 = vunpack.c.l.b16 %v3149
      %v3190 = vunpack.c.h.b16 %v3149
      %v3191 = vunpack.c.l.b16 %v3150
      %v3192 = vunpack.c.h.b16 %v3150
      %v3193 = vunpack.c.l.b16 %v3151
      %v3194 = vunpack.c.h.b16 %v3151
      %v3195 = vunpack.c.l.b16 %v3152
      %v3196 = vunpack.c.h.b16 %v3152
      %v3197 = vunpack.c.l.b16 %v3153
      %v3198 = vunpack.c.h.b16 %v3153
      %v3199 = vunpack.c.l.b16 %v3154
      %v3200 = vunpack.c.h.b16 %v3154
      %v3201 = vunpack.c.l.b16 %v3155
      %v3202 = vunpack.c.h.b16 %v3155
      %v3203 = vunpack.c.l.b16 %v3156
      %v3204 = vunpack.c.h.b16 %v3156
      %v3205 = vpack.c.b16 %v3173, %v3173
      %v3206 = vpack.c.b16 %v3174, %v3174
      %v3207 = vpack.c.b16 %v3175, %v3175
      %v3208 = vpack.c.b16 %v3176, %v3176
      %v3209 = vpack.c.b16 %v3177, %v3177
      %v3210 = vpack.c.b16 %v3178, %v3178
      %v3211 = vpack.c.b16 %v3179, %v3179
      %v3212 = vpack.c.b16 %v3180, %v3180
      %v3213 = vpack.c.b16 %v3181, %v3181
      %v3214 = vpack.c.b16 %v3182, %v3182
      %v3215 = vpack.c.b16 %v3183, %v3183
      %v3216 = vpack.c.b16 %v3184, %v3184
      %v3217 = vpack.c.b16 %v3185, %v3185
      %v3218 = vpack.c.b16 %v3186, %v3186
      %v3219 = vpack.c.b16 %v3187, %v3187
      %v3220 = vpack.c.b16 %v3188, %v3188
      %v3221 = vpack.c.b16 %v3189, %v3189
      %v3222 = vpack.c.b16 %v3190, %v3190
      %v3223 = vpack.c.b16 %v3191, %v3191
      %v3224 = vpack.c.b16 %v3192, %v3192
      %v3225 = vpack.c.b16 %v3193, %v3193
      %v3226 = vpack.c.b16 %v3194, %v3194
      %v3227 = vpack.c.b16 %v3195, %v3195
      %v3228 = vpack.c.b16 %v3196, %v3196
      %v3229 = vpack.c.b16 %v3197, %v3197
      %v3230 = vpack.c.b16 %v3198, %v3198
      %v3231 = vpack.c.b16 %v3199, %v3199
      %v3232 = vpack.c.b16 %v3200, %v3200
      %v3233 = vpack.c.b16 %v3201, %v3201
      %v3234 = vpack.c.b16 %v3202, %v3202
      %v3235 = vpack.c.b16 %v3203, %v3203
      %v3236 = vpack.c.b16 %v3204, %v3204
      %v3238 = vshrl.u32 %v3205, 16
      %v3240 = vrot.slane %v3238, 7
      %v3241 = vshll.u32 %v3205, 16
      %v3243 = vor.u32 %v3240, %v3241
      %v3244 = vrot.slane %v3240, 4
      %v3246 = vshrl.u32 %v3206, 16
      %v3248 = vrot.slane %v3246, 7
      %v3249 = vshll.u32 %v3206, 16
      %v3251 = vor.u32 %v3248, %v3249
      %v3252 = vsel %vm412, %v3244, %v3251
      %v3253 = vrot.slane %v3248, 4
      %v3255 = vshrl.u32 %v3207, 16
      %v3257 = vrot.slane %v3255, 7
      %v3258 = vshll.u32 %v3207, 16
      %v3260 = vor.u32 %v3257, %v3258
      %v3261 = vrot.slane %v3257, 4
      %v3263 = vshrl.u32 %v3208, 16
      %v3265 = vrot.slane %v3263, 7
      %v3266 = vshll.u32 %v3208, 16
      %v3268 = vor.u32 %v3265, %v3266
      %v3269 = vsel %vm412, %v3261, %v3268
      %v3270 = vrot.slane %v3265, 4
      %v3272 = vshrl.u32 %v3209, 16
      %v3274 = vrot.slane %v3272, 7
      %v3275 = vshll.u32 %v3209, 16
      %v3277 = vor.u32 %v3274, %v3275
      %v3278 = vrot.slane %v3274, 4
      %v3280 = vshrl.u32 %v3210, 16
      %v3282 = vrot.slane %v3280, 7
      %v3283 = vshll.u32 %v3210, 16
      %v3285 = vor.u32 %v3282, %v3283
      %v3286 = vsel %vm412, %v3278, %v3285
      %v3287 = vrot.slane %v3282, 4
      %v3289 = vshrl.u32 %v3211, 16
      %v3291 = vrot.slane %v3289, 7
      %v3292 = vshll.u32 %v3211, 16
      %v3294 = vor.u32 %v3291, %v3292
      %v3295 = vrot.slane %v3291, 4
      %v3297 = vshrl.u32 %v3212, 16
      %v3299 = vrot.slane %v3297, 7
      %v3300 = vshll.u32 %v3212, 16
      %v3302 = vor.u32 %v3299, %v3300
      %v3303 = vsel %vm412, %v3295, %v3302
      %v3304 = vrot.slane %v3299, 4
      %v3306 = vshrl.u32 %v3213, 16
      %v3308 = vrot.slane %v3306, 7
      %v3309 = vshll.u32 %v3213, 16
      %v3311 = vor.u32 %v3308, %v3309
      %v3312 = vrot.slane %v3308, 4
      %v3314 = vshrl.u32 %v3214, 16
      %v3316 = vrot.slane %v3314, 7
      %v3317 = vshll.u32 %v3214, 16
      %v3319 = vor.u32 %v3316, %v3317
      %v3320 = vsel %vm412, %v3312, %v3319
      %v3321 = vrot.slane %v3316, 4
      %v3323 = vshrl.u32 %v3215, 16
      %v3325 = vrot.slane %v3323, 7
      %v3326 = vshll.u32 %v3215, 16
      %v3328 = vor.u32 %v3325, %v3326
      %v3329 = vrot.slane %v3325, 4
      %v3331 = vshrl.u32 %v3216, 16
      %v3333 = vrot.slane %v3331, 7
      %v3334 = vshll.u32 %v3216, 16
      %v3336 = vor.u32 %v3333, %v3334
      %v3337 = vsel %vm412, %v3329, %v3336
      %v3338 = vrot.slane %v3333, 4
      %v3340 = vshrl.u32 %v3217, 16
      %v3342 = vrot.slane %v3340, 7
      %v3343 = vshll.u32 %v3217, 16
      %v3345 = vor.u32 %v3342, %v3343
      %v3346 = vrot.slane %v3342, 4
      %v3348 = vshrl.u32 %v3218, 16
      %v3350 = vrot.slane %v3348, 7
      %v3351 = vshll.u32 %v3218, 16
      %v3353 = vor.u32 %v3350, %v3351
      %v3354 = vsel %vm412, %v3346, %v3353
      %v3355 = vrot.slane %v3350, 4
      %v3357 = vshrl.u32 %v3219, 16
      %v3359 = vrot.slane %v3357, 7
      %v3360 = vshll.u32 %v3219, 16
      %v3362 = vor.u32 %v3359, %v3360
      %v3363 = vrot.slane %v3359, 4
      %v3365 = vshrl.u32 %v3220, 16
      %v3367 = vrot.slane %v3365, 7
      %v3368 = vshll.u32 %v3220, 16
      %v3370 = vor.u32 %v3367, %v3368
      %v3371 = vsel %vm412, %v3363, %v3370
      %v3372 = vrot.slane %v3367, 4
      %v3374 = vshrl.u32 %v3221, 16
      %v3376 = vrot.slane %v3374, 7
      %v3377 = vshll.u32 %v3221, 16
      %v3379 = vor.u32 %v3376, %v3377
      %v3380 = vrot.slane %v3376, 4
      %v3382 = vshrl.u32 %v3222, 16
      %v3384 = vrot.slane %v3382, 7
      %v3385 = vshll.u32 %v3222, 16
      %v3387 = vor.u32 %v3384, %v3385
      %v3388 = vsel %vm412, %v3380, %v3387
      %v3389 = vrot.slane %v3384, 4
      %v3391 = vshrl.u32 %v3223, 16
      %v3393 = vrot.slane %v3391, 7
      %v3394 = vshll.u32 %v3223, 16
      %v3396 = vor.u32 %v3393, %v3394
      %v3397 = vrot.slane %v3393, 4
      %v3399 = vshrl.u32 %v3224, 16
      %v3401 = vrot.slane %v3399, 7
      %v3402 = vshll.u32 %v3224, 16
      %v3404 = vor.u32 %v3401, %v3402
      %v3405 = vsel %vm412, %v3397, %v3404
      %v3406 = vrot.slane %v3401, 4
      %v3408 = vshrl.u32 %v3225, 16
      %v3410 = vrot.slane %v3408, 7
      %v3411 = vshll.u32 %v3225, 16
      %v3413 = vor.u32 %v3410, %v3411
      %v3414 = vrot.slane %v3410, 4
      %v3416 = vshrl.u32 %v3226, 16
      %v3418 = vrot.slane %v3416, 7
      %v3419 = vshll.u32 %v3226, 16
      %v3421 = vor.u32 %v3418, %v3419
      %v3422 = vsel %vm412, %v3414, %v3421
      %v3423 = vrot.slane %v3418, 4
      %v3425 = vshrl.u32 %v3227, 16
      %v3427 = vrot.slane %v3425, 7
      %v3428 = vshll.u32 %v3227, 16
      %v3430 = vor.u32 %v3427, %v3428
      %v3431 = vrot.slane %v3427, 4
      %v3433 = vshrl.u32 %v3228, 16
      %v3435 = vrot.slane %v3433, 7
      %v3436 = vshll.u32 %v3228, 16
      %v3438 = vor.u32 %v3435, %v3436
      %v3439 = vsel %vm412, %v3431, %v3438
      %v3440 = vrot.slane %v3435, 4
      %v3442 = vshrl.u32 %v3229, 16
      %v3444 = vrot.slane %v3442, 7
      %v3445 = vshll.u32 %v3229, 16
      %v3447 = vor.u32 %v3444, %v3445
      %v3448 = vrot.slane %v3444, 4
      %v3450 = vshrl.u32 %v3230, 16
      %v3452 = vrot.slane %v3450, 7
      %v3453 = vshll.u32 %v3230, 16
      %v3455 = vor.u32 %v3452, %v3453
      %v3456 = vsel %vm412, %v3448, %v3455
      %v3457 = vrot.slane %v3452, 4
      %v3459 = vshrl.u32 %v3231, 16
      %v3461 = vrot.slane %v3459, 7
      %v3462 = vshll.u32 %v3231, 16
      %v3464 = vor.u32 %v3461, %v3462
      %v3465 = vrot.slane %v3461, 4
      %v3467 = vshrl.u32 %v3232, 16
      %v3469 = vrot.slane %v3467, 7
      %v3470 = vshll.u32 %v3232, 16
      %v3472 = vor.u32 %v3469, %v3470
      %v3473 = vsel %vm412, %v3465, %v3472
      %v3474 = vrot.slane %v3469, 4
      %v3476 = vshrl.u32 %v3233, 16
      %v3478 = vrot.slane %v3476, 7
      %v3479 = vshll.u32 %v3233, 16
      %v3481 = vor.u32 %v3478, %v3479
      %v3482 = vrot.slane %v3478, 4
      %v3484 = vshrl.u32 %v3234, 16
      %v3486 = vrot.slane %v3484, 7
      %v3487 = vshll.u32 %v3234, 16
      %v3489 = vor.u32 %v3486, %v3487
      %v3490 = vsel %vm412, %v3482, %v3489
      %v3491 = vrot.slane %v3486, 4
      %v3493 = vshrl.u32 %v3235, 16
      %v3495 = vrot.slane %v3493, 7
      %v3496 = vshll.u32 %v3235, 16
      %v3498 = vor.u32 %v3495, %v3496
      %v3499 = vrot.slane %v3495, 4
      %v3501 = vshrl.u32 %v3236, 16
      %v3503 = vrot.slane %v3501, 7
      %v3504 = vshll.u32 %v3236, 16
      %v3506 = vor.u32 %v3503, %v3504
      %v3507 = vsel %vm412, %v3499, %v3506
      %v3508 = vrot.slane %v3503, 4
      %s3557 = scalar_lea.vmem [#allocation3], 12
      %v3558 = vld [vmem:[%s3557] sm:$0xf]
      %v3559 = vsel %vm736, %v3243, %v3558
      %3560 = vst [vmem:[%s3557] sm:$0xf] %v3559
      %3561 = vst.msk [vmem:[%s3557 + $0x4] sm:$0xf] %vm258, %v3252
      %v3562 = vld [vmem:[%s3557 + $0x8] sm:$0x1]
      %v3563 = vsel %vm742, %v3253, %v3562
      %3564 = vst [vmem:[%s3557 + $0x8] sm:$0x1] %v3563
      %v3565 = vld [vmem:[%s3557 + $0xc] sm:$0xf]
      %v3566 = vsel %vm736, %v3260, %v3565
      %3567 = vst [vmem:[%s3557 + $0xc] sm:$0xf] %v3566
      %3568 = vst.msk [vmem:[%s3557 + $0x10] sm:$0xf] %vm258, %v3269
      %v3569 = vld [vmem:[%s3557 + $0x14] sm:$0x1]
      %v3570 = vsel %vm742, %v3270, %v3569
      %3571 = vst [vmem:[%s3557 + $0x14] sm:$0x1] %v3570
      %v3572 = vld [vmem:[%s3557 + $0x18] sm:$0xf]
      %v3573 = vsel %vm736, %v3277, %v3572
      %3574 = vst [vmem:[%s3557 + $0x18] sm:$0xf] %v3573
      %3575 = vst.msk [vmem:[%s3557 + $0x1c] sm:$0xf] %vm258, %v3286
      %v3576 = vld [vmem:[%s3557 + $0x20] sm:$0x1]
      %v3577 = vsel %vm742, %v3287, %v3576
      %3578 = vst [vmem:[%s3557 + $0x20] sm:$0x1] %v3577
      %v3579 = vld [vmem:[%s3557 + $0x24] sm:$0xf]
      %v3580 = vsel %vm736, %v3294, %v3579
      %3581 = vst [vmem:[%s3557 + $0x24] sm:$0xf] %v3580
      %3582 = vst.msk [vmem:[%s3557 + $0x28] sm:$0xf] %vm258, %v3303
      %v3583 = vld [vmem:[%s3557 + $0x2c] sm:$0x1]
      %v3584 = vsel %vm742, %v3304, %v3583
      %3585 = vst [vmem:[%s3557 + $0x2c] sm:$0x1] %v3584
      %v3586 = vld [vmem:[%s3557 + $0x30] sm:$0xf]
      %v3587 = vsel %vm736, %v3311, %v3586
      %3588 = vst [vmem:[%s3557 + $0x30] sm:$0xf] %v3587
      %3589 = vst.msk [vmem:[%s3557 + $0x34] sm:$0xf] %vm258, %v3320
      %v3590 = vld [vmem:[%s3557 + $0x38] sm:$0x1]
      %v3591 = vsel %vm742, %v3321, %v3590
      %3592 = vst [vmem:[%s3557 + $0x38] sm:$0x1] %v3591
      %v3593 = vld [vmem:[%s3557 + $0x3c] sm:$0xf]
      %v3594 = vsel %vm736, %v3328, %v3593
      %3595 = vst [vmem:[%s3557 + $0x3c] sm:$0xf] %v3594
      %3596 = vst.msk [vmem:[%s3557 + $0x40] sm:$0xf] %vm258, %v3337
      %v3597 = vld [vmem:[%s3557 + $0x44] sm:$0x1]
      %v3598 = vsel %vm742, %v3338, %v3597
      %3599 = vst [vmem:[%s3557 + $0x44] sm:$0x1] %v3598
      %v3600 = vld [vmem:[%s3557 + $0x48] sm:$0xf]
      %v3601 = vsel %vm736, %v3345, %v3600
      %3602 = vst [vmem:[%s3557 + $0x48] sm:$0xf] %v3601
      %3603 = vst.msk [vmem:[%s3557 + $0x4c] sm:$0xf] %vm258, %v3354
      %v3604 = vld [vmem:[%s3557 + $0x50] sm:$0x1]
      %v3605 = vsel %vm742, %v3355, %v3604
      %3606 = vst [vmem:[%s3557 + $0x50] sm:$0x1] %v3605
      %v3607 = vld [vmem:[%s3557 + $0x54] sm:$0xf]
      %v3608 = vsel %vm736, %v3362, %v3607
      %3609 = vst [vmem:[%s3557 + $0x54] sm:$0xf] %v3608
      %3610 = vst.msk [vmem:[%s3557 + $0x58] sm:$0xf] %vm258, %v3371
      %v3611 = vld [vmem:[%s3557 + $0x5c] sm:$0x1]
      %v3612 = vsel %vm742, %v3372, %v3611
      %3613 = vst [vmem:[%s3557 + $0x5c] sm:$0x1] %v3612
      %v3614 = vld [vmem:[%s3557 + $0x60] sm:$0xf]
      %v3615 = vsel %vm736, %v3379, %v3614
      %3616 = vst [vmem:[%s3557 + $0x60] sm:$0xf] %v3615
      %3617 = vst.msk [vmem:[%s3557 + $0x64] sm:$0xf] %vm258, %v3388
      %v3618 = vld [vmem:[%s3557 + $0x68] sm:$0x1]
      %v3619 = vsel %vm742, %v3389, %v3618
      %3620 = vst [vmem:[%s3557 + $0x68] sm:$0x1] %v3619
      %v3621 = vld [vmem:[%s3557 + $0x6c] sm:$0xf]
      %v3622 = vsel %vm736, %v3396, %v3621
      %3623 = vst [vmem:[%s3557 + $0x6c] sm:$0xf] %v3622
      %3624 = vst.msk [vmem:[%s3557 + $0x70] sm:$0xf] %vm258, %v3405
      %v3625 = vld [vmem:[%s3557 + $0x74] sm:$0x1]
      %v3626 = vsel %vm742, %v3406, %v3625
      %3627 = vst [vmem:[%s3557 + $0x74] sm:$0x1] %v3626
      %v3628 = vld [vmem:[%s3557 + $0x78] sm:$0xf]
      %v3629 = vsel %vm736, %v3413, %v3628
      %3630 = vst [vmem:[%s3557 + $0x78] sm:$0xf] %v3629
      %3631 = vst.msk [vmem:[%s3557 + $0x7c] sm:$0xf] %vm258, %v3422
      %v3632 = vld [vmem:[%s3557 + $0x80] sm:$0x1]
      %v3633 = vsel %vm742, %v3423, %v3632
      %3634 = vst [vmem:[%s3557 + $0x80] sm:$0x1] %v3633
      %v3635 = vld [vmem:[%s3557 + $0x84] sm:$0xf]
      %v3636 = vsel %vm736, %v3430, %v3635
      %3637 = vst [vmem:[%s3557 + $0x84] sm:$0xf] %v3636
      %3638 = vst.msk [vmem:[%s3557 + $0x88] sm:$0xf] %vm258, %v3439
      %v3639 = vld [vmem:[%s3557 + $0x8c] sm:$0x1]
      %v3640 = vsel %vm742, %v3440, %v3639
      %3641 = vst [vmem:[%s3557 + $0x8c] sm:$0x1] %v3640
      %v3642 = vld [vmem:[%s3557 + $0x90] sm:$0xf]
      %v3643 = vsel %vm736, %v3447, %v3642
      %3644 = vst [vmem:[%s3557 + $0x90] sm:$0xf] %v3643
      %3645 = vst.msk [vmem:[%s3557 + $0x94] sm:$0xf] %vm258, %v3456
      %v3646 = vld [vmem:[%s3557 + $0x98] sm:$0x1]
      %v3647 = vsel %vm742, %v3457, %v3646
      %3648 = vst [vmem:[%s3557 + $0x98] sm:$0x1] %v3647
      %v3649 = vld [vmem:[%s3557 + $0x9c] sm:$0xf]
      %v3650 = vsel %vm736, %v3464, %v3649
      %3651 = vst [vmem:[%s3557 + $0x9c] sm:$0xf] %v3650
      %3652 = vst.msk [vmem:[%s3557 + $0xa0] sm:$0xf] %vm258, %v3473
      %v3653 = vld [vmem:[%s3557 + $0xa4] sm:$0x1]
      %v3654 = vsel %vm742, %v3474, %v3653
      %3655 = vst [vmem:[%s3557 + $0xa4] sm:$0x1] %v3654
      %v3656 = vld [vmem:[%s3557 + $0xa8] sm:$0xf]
      %v3657 = vsel %vm736, %v3481, %v3656
      %3658 = vst [vmem:[%s3557 + $0xa8] sm:$0xf] %v3657
      %3659 = vst.msk [vmem:[%s3557 + $0xac] sm:$0xf] %vm258, %v3490
      %v3660 = vld [vmem:[%s3557 + $0xb0] sm:$0x1]
      %v3661 = vsel %vm742, %v3491, %v3660
      %3662 = vst [vmem:[%s3557 + $0xb0] sm:$0x1] %v3661
      %v3663 = vld [vmem:[%s3557 + $0xb4] sm:$0xf]
      %v3664 = vsel %vm736, %v3498, %v3663
      %3665 = vst [vmem:[%s3557 + $0xb4] sm:$0xf] %v3664
      %3666 = vst.msk [vmem:[%s3557 + $0xb8] sm:$0xf] %vm258, %v3507
      %v3667 = vld [vmem:[%s3557 + $0xbc] sm:$0x1]
      %v3668 = vsel %vm742, %v3508, %v3667
      %3669 = vst [vmem:[%s3557 + $0xbc] sm:$0x1] %v3668
      %v3670 = vld [vmem:[#allocation3] sm:$0xf]
      %v3671 = vld [vmem:[#allocation3 + $0x4] sm:$0xf]
      %v3672 = vld [vmem:[#allocation3 + $0xc] sm:$0xf]
      %v3673 = vld [vmem:[#allocation3 + $0x10] sm:$0xf]
      %v3674 = vld [vmem:[#allocation3 + $0x18] sm:$0xf]
      %v3675 = vld [vmem:[#allocation3 + $0x1c] sm:$0xf]
      %v3676 = vld [vmem:[#allocation3 + $0x24] sm:$0xf]
      %v3677 = vld [vmem:[#allocation3 + $0x28] sm:$0xf]
      %v3678 = vld [vmem:[#allocation3 + $0x30] sm:$0xf]
      %v3679 = vld [vmem:[#allocation3 + $0x34] sm:$0xf]
      %v3680 = vld [vmem:[#allocation3 + $0x3c] sm:$0xf]
      %v3681 = vld [vmem:[#allocation3 + $0x40] sm:$0xf]
      %v3682 = vld [vmem:[#allocation3 + $0x48] sm:$0xf]
      %v3683 = vld [vmem:[#allocation3 + $0x4c] sm:$0xf]
      %v3684 = vld [vmem:[#allocation3 + $0x54] sm:$0xf]
      %v3685 = vld [vmem:[#allocation3 + $0x58] sm:$0xf]
      %v3686 = vld [vmem:[#allocation3 + $0x60] sm:$0xf]
      %v3687 = vld [vmem:[#allocation3 + $0x64] sm:$0xf]
      %v3688 = vld [vmem:[#allocation3 + $0x6c] sm:$0xf]
      %v3689 = vld [vmem:[#allocation3 + $0x70] sm:$0xf]
      %v3690 = vld [vmem:[#allocation3 + $0x78] sm:$0xf]
      %v3691 = vld [vmem:[#allocation3 + $0x7c] sm:$0xf]
      %v3692 = vld [vmem:[#allocation3 + $0x84] sm:$0xf]
      %v3693 = vld [vmem:[#allocation3 + $0x88] sm:$0xf]
      %v3694 = vld [vmem:[#allocation3 + $0x90] sm:$0xf]
      %v3695 = vld [vmem:[#allocation3 + $0x94] sm:$0xf]
      %v3696 = vld [vmem:[#allocation3 + $0x9c] sm:$0xf]
      %v3697 = vld [vmem:[#allocation3 + $0xa0] sm:$0xf]
      %v3698 = vld [vmem:[#allocation3 + $0xa8] sm:$0xf]
      %v3699 = vld [vmem:[#allocation3 + $0xac] sm:$0xf]
      %v3700 = vld [vmem:[#allocation3 + $0xb4] sm:$0xf]
      %v3701 = vld [vmem:[#allocation3 + $0xb8] sm:$0xf]
      %v3702 = vld [vmem:[#allocation3 + $0x8] sm:$0x1]
      %v3703 = vld [vmem:[#allocation3 + $0x14] sm:$0x1]
      %v3704 = vld [vmem:[#allocation3 + $0x20] sm:$0x1]
      %v3705 = vld [vmem:[#allocation3 + $0x2c] sm:$0x1]
      %v3706 = vld [vmem:[#allocation3 + $0x38] sm:$0x1]
      %v3707 = vld [vmem:[#allocation3 + $0x44] sm:$0x1]
      %v3708 = vld [vmem:[#allocation3 + $0x50] sm:$0x1]
      %v3709 = vld [vmem:[#allocation3 + $0x5c] sm:$0x1]
      %v3710 = vld [vmem:[#allocation3 + $0x68] sm:$0x1]
      %v3711 = vld [vmem:[#allocation3 + $0x74] sm:$0x1]
      %v3712 = vld [vmem:[#allocation3 + $0x80] sm:$0x1]
      %v3713 = vld [vmem:[#allocation3 + $0x8c] sm:$0x1]
      %v3714 = vld [vmem:[#allocation3 + $0x98] sm:$0x1]
      %v3715 = vld [vmem:[#allocation3 + $0xa4] sm:$0x1]
      %v3716 = vld [vmem:[#allocation3 + $0xb0] sm:$0x1]
      %v3717 = vld [vmem:[#allocation3 + $0xbc] sm:$0x1]
      %v3718 = vld [vmem:[#allocation3] sm:$0xe]
      %v3719 = vld [vmem:[#allocation3 + $0xc] sm:$0xe]
      %v3720 = vld [vmem:[#allocation3 + $0x18] sm:$0xe]
      %v3721 = vld [vmem:[#allocation3 + $0x24] sm:$0xe]
      %v3722 = vld [vmem:[#allocation3 + $0x30] sm:$0xe]
      %v3723 = vld [vmem:[#allocation3 + $0x3c] sm:$0xe]
      %v3724 = vld [vmem:[#allocation3 + $0x48] sm:$0xe]
      %v3725 = vld [vmem:[#allocation3 + $0x54] sm:$0xe]
      %v3726 = vld [vmem:[#allocation3 + $0x60] sm:$0xe]
      %v3727 = vld [vmem:[#allocation3 + $0x6c] sm:$0xe]
      %v3728 = vld [vmem:[#allocation3 + $0x78] sm:$0xe]
      %v3729 = vld [vmem:[#allocation3 + $0x84] sm:$0xe]
      %v3730 = vld [vmem:[#allocation3 + $0x90] sm:$0xe]
      %v3731 = vld [vmem:[#allocation3 + $0x9c] sm:$0xe]
      %v3732 = vld [vmem:[#allocation3 + $0xa8] sm:$0xe]
      %v3733 = vld [vmem:[#allocation3 + $0xb4] sm:$0xe]
      %v3734 = vld [vmem:[%s3557] sm:$0xf]
      %v3735 = vld [vmem:[%s3557 + $0x4] sm:$0xf]
      %v3736 = vld [vmem:[%s3557 + $0xc] sm:$0xf]
      %v3737 = vld [vmem:[%s3557 + $0x10] sm:$0xf]
      %v3738 = vld [vmem:[%s3557 + $0x18] sm:$0xf]
      %v3739 = vld [vmem:[%s3557 + $0x1c] sm:$0xf]
      %v3740 = vld [vmem:[%s3557 + $0x24] sm:$0xf]
      %v3741 = vld [vmem:[%s3557 + $0x28] sm:$0xf]
      %v3742 = vld [vmem:[%s3557 + $0x30] sm:$0xf]
      %v3743 = vld [vmem:[%s3557 + $0x34] sm:$0xf]
      %v3744 = vld [vmem:[%s3557 + $0x3c] sm:$0xf]
      %v3745 = vld [vmem:[%s3557 + $0x40] sm:$0xf]
      %v3746 = vld [vmem:[%s3557 + $0x48] sm:$0xf]
      %v3747 = vld [vmem:[%s3557 + $0x4c] sm:$0xf]
      %v3748 = vld [vmem:[%s3557 + $0x54] sm:$0xf]
      %v3749 = vld [vmem:[%s3557 + $0x58] sm:$0xf]
      %v3750 = vld [vmem:[%s3557 + $0x60] sm:$0xf]
      %v3751 = vld [vmem:[%s3557 + $0x64] sm:$0xf]
      %v3752 = vld [vmem:[%s3557 + $0x6c] sm:$0xf]
      %v3753 = vld [vmem:[%s3557 + $0x70] sm:$0xf]
      %v3754 = vld [vmem:[%s3557 + $0x78] sm:$0xf]
      %v3755 = vld [vmem:[%s3557 + $0x7c] sm:$0xf]
      %v3756 = vld [vmem:[%s3557 + $0x84] sm:$0xf]
      %v3757 = vld [vmem:[%s3557 + $0x88] sm:$0xf]
      %v3758 = vld [vmem:[%s3557 + $0x90] sm:$0xf]
      %v3759 = vld [vmem:[%s3557 + $0x94] sm:$0xf]
      %v3760 = vld [vmem:[%s3557 + $0x9c] sm:$0xf]
      %v3761 = vld [vmem:[%s3557 + $0xa0] sm:$0xf]
      %v3762 = vld [vmem:[%s3557 + $0xa8] sm:$0xf]
      %v3763 = vld [vmem:[%s3557 + $0xac] sm:$0xf]
      %v3764 = vld [vmem:[%s3557 + $0xb4] sm:$0xf]
      %v3765 = vld [vmem:[%s3557 + $0xb8] sm:$0xf]
      %v3766 = vld [vmem:[%s3557 + $0x8] sm:$0x1]
      %v3767 = vld [vmem:[%s3557 + $0x14] sm:$0x1]
      %v3768 = vld [vmem:[%s3557 + $0x20] sm:$0x1]
      %v3769 = vld [vmem:[%s3557 + $0x2c] sm:$0x1]
      %v3770 = vld [vmem:[%s3557 + $0x38] sm:$0x1]
      %v3771 = vld [vmem:[%s3557 + $0x44] sm:$0x1]
      %v3772 = vld [vmem:[%s3557 + $0x50] sm:$0x1]
      %v3773 = vld [vmem:[%s3557 + $0x5c] sm:$0x1]
      %v3774 = vld [vmem:[%s3557 + $0x68] sm:$0x1]
      %v3775 = vld [vmem:[%s3557 + $0x74] sm:$0x1]
      %v3776 = vld [vmem:[%s3557 + $0x80] sm:$0x1]
      %v3777 = vld [vmem:[%s3557 + $0x8c] sm:$0x1]
      %v3778 = vld [vmem:[%s3557 + $0x98] sm:$0x1]
      %v3779 = vld [vmem:[%s3557 + $0xa4] sm:$0x1]
      %v3780 = vld [vmem:[%s3557 + $0xb0] sm:$0x1]
      %v3781 = vld [vmem:[%s3557 + $0xbc] sm:$0x1]
      %v3782 = vld [vmem:[%s3557] sm:$0xe]
      %v3783 = vld [vmem:[%s3557 + $0xc] sm:$0xe]
      %v3784 = vld [vmem:[%s3557 + $0x18] sm:$0xe]
      %v3785 = vld [vmem:[%s3557 + $0x24] sm:$0xe]
      %v3786 = vld [vmem:[%s3557 + $0x30] sm:$0xe]
      %v3787 = vld [vmem:[%s3557 + $0x3c] sm:$0xe]
      %v3788 = vld [vmem:[%s3557 + $0x48] sm:$0xe]
      %v3789 = vld [vmem:[%s3557 + $0x54] sm:$0xe]
      %v3790 = vld [vmem:[%s3557 + $0x60] sm:$0xe]
      %v3791 = vld [vmem:[%s3557 + $0x6c] sm:$0xe]
      %v3792 = vld [vmem:[%s3557 + $0x78] sm:$0xe]
      %v3793 = vld [vmem:[%s3557 + $0x84] sm:$0xe]
      %v3794 = vld [vmem:[%s3557 + $0x90] sm:$0xe]
      %v3795 = vld [vmem:[%s3557 + $0x9c] sm:$0xe]
      %v3796 = vld [vmem:[%s3557 + $0xa8] sm:$0xe]
      %v3797 = vld [vmem:[%s3557 + $0xb4] sm:$0xe]
      %s3798 = scalar_lea.vmem [#allocation3], 24
      %v3799 = vld [vmem:[%s3798] sm:$0xf]
      %v3800 = vld [vmem:[%s3798 + $0x4] sm:$0xf]
      %v3801 = vld [vmem:[%s3798 + $0xc] sm:$0xf]
      %v3802 = vld [vmem:[%s3798 + $0x10] sm:$0xf]
      %v3803 = vld [vmem:[%s3798 + $0x18] sm:$0xf]
      %v3804 = vld [vmem:[%s3798 + $0x1c] sm:$0xf]
      %v3805 = vld [vmem:[%s3798 + $0x24] sm:$0xf]
      %v3806 = vld [vmem:[%s3798 + $0x28] sm:$0xf]
      %v3807 = vld [vmem:[%s3798 + $0x30] sm:$0xf]
      %v3808 = vld [vmem:[%s3798 + $0x34] sm:$0xf]
      %v3809 = vld [vmem:[%s3798 + $0x3c] sm:$0xf]
      %v3810 = vld [vmem:[%s3798 + $0x40] sm:$0xf]
      %v3811 = vld [vmem:[%s3798 + $0x48] sm:$0xf]
      %v3812 = vld [vmem:[%s3798 + $0x4c] sm:$0xf]
      %v3813 = vld [vmem:[%s3798 + $0x54] sm:$0xf]
      %v3814 = vld [vmem:[%s3798 + $0x58] sm:$0xf]
      %v3815 = vld [vmem:[%s3798 + $0x60] sm:$0xf]
      %v3816 = vld [vmem:[%s3798 + $0x64] sm:$0xf]
      %v3817 = vld [vmem:[%s3798 + $0x6c] sm:$0xf]
      %v3818 = vld [vmem:[%s3798 + $0x70] sm:$0xf]
      %v3819 = vld [vmem:[%s3798 + $0x78] sm:$0xf]
      %v3820 = vld [vmem:[%s3798 + $0x7c] sm:$0xf]
      %v3821 = vld [vmem:[%s3798 + $0x84] sm:$0xf]
      %v3822 = vld [vmem:[%s3798 + $0x88] sm:$0xf]
      %v3823 = vld [vmem:[%s3798 + $0x90] sm:$0xf]
      %v3824 = vld [vmem:[%s3798 + $0x94] sm:$0xf]
      %v3825 = vld [vmem:[%s3798 + $0x9c] sm:$0xf]
      %v3826 = vld [vmem:[%s3798 + $0xa0] sm:$0xf]
      %v3827 = vld [vmem:[%s3798 + $0xa8] sm:$0xf]
      %v3828 = vld [vmem:[%s3798 + $0xac] sm:$0xf]
      %v3829 = vld [vmem:[%s3798 + $0xb4] sm:$0xf]
      %v3830 = vld [vmem:[%s3798 + $0xb8] sm:$0xf]
      %v3831 = vld [vmem:[%s3798 + $0x8] sm:$0x1]
      %v3832 = vld [vmem:[%s3798 + $0x14] sm:$0x1]
      %v3833 = vld [vmem:[%s3798 + $0x20] sm:$0x1]
      %v3834 = vld [vmem:[%s3798 + $0x2c] sm:$0x1]
      %v3835 = vld [vmem:[%s3798 + $0x38] sm:$0x1]
      %v3836 = vld [vmem:[%s3798 + $0x44] sm:$0x1]
      %v3837 = vld [vmem:[%s3798 + $0x50] sm:$0x1]
      %v3838 = vld [vmem:[%s3798 + $0x5c] sm:$0x1]
      %v3839 = vld [vmem:[%s3798 + $0x68] sm:$0x1]
      %v3840 = vld [vmem:[%s3798 + $0x74] sm:$0x1]
      %v3841 = vld [vmem:[%s3798 + $0x80] sm:$0x1]
      %v3842 = vld [vmem:[%s3798 + $0x8c] sm:$0x1]
      %v3843 = vld [vmem:[%s3798 + $0x98] sm:$0x1]
      %v3844 = vld [vmem:[%s3798 + $0xa4] sm:$0x1]
      %v3845 = vld [vmem:[%s3798 + $0xb0] sm:$0x1]
      %v3846 = vld [vmem:[%s3798 + $0xbc] sm:$0x1]
      %v3847 = vld [vmem:[%s3798] sm:$0xe]
      %v3848 = vld [vmem:[%s3798 + $0xc] sm:$0xe]
      %v3849 = vld [vmem:[%s3798 + $0x18] sm:$0xe]
      %v3850 = vld [vmem:[%s3798 + $0x24] sm:$0xe]
      %v3851 = vld [vmem:[%s3798 + $0x30] sm:$0xe]
      %v3852 = vld [vmem:[%s3798 + $0x3c] sm:$0xe]
      %v3853 = vld [vmem:[%s3798 + $0x48] sm:$0xe]
      %v3854 = vld [vmem:[%s3798 + $0x54] sm:$0xe]
      %v3855 = vld [vmem:[%s3798 + $0x60] sm:$0xe]
      %v3856 = vld [vmem:[%s3798 + $0x6c] sm:$0xe]
      %v3857 = vld [vmem:[%s3798 + $0x78] sm:$0xe]
      %v3858 = vld [vmem:[%s3798 + $0x84] sm:$0xe]
      %v3859 = vld [vmem:[%s3798 + $0x90] sm:$0xe]
      %v3860 = vld [vmem:[%s3798 + $0x9c] sm:$0xe]
      %v3861 = vld [vmem:[%s3798 + $0xa8] sm:$0xe]
      %v3862 = vld [vmem:[%s3798 + $0xb4] sm:$0xe]
      %v3895 = vunpack.c.l.b16 %v3670
      %v3896 = vunpack.c.l.b16 %v3671
      %v3897 = vunpack.c.l.b16 %v3672
      %v3898 = vunpack.c.l.b16 %v3673
      %v3899 = vunpack.c.l.b16 %v3674
      %v3900 = vunpack.c.l.b16 %v3675
      %v3901 = vunpack.c.l.b16 %v3676
      %v3902 = vunpack.c.l.b16 %v3677
      %v3903 = vunpack.c.l.b16 %v3678
      %v3904 = vunpack.c.l.b16 %v3679
      %v3905 = vunpack.c.l.b16 %v3680
      %v3906 = vunpack.c.l.b16 %v3681
      %v3907 = vunpack.c.l.b16 %v3682
      %v3908 = vunpack.c.l.b16 %v3683
      %v3909 = vunpack.c.l.b16 %v3684
      %v3910 = vunpack.c.l.b16 %v3685
      %v3911 = vunpack.c.l.b16 %v3686
      %v3912 = vunpack.c.l.b16 %v3687
      %v3913 = vunpack.c.l.b16 %v3688
      %v3914 = vunpack.c.l.b16 %v3689
      %v3915 = vunpack.c.l.b16 %v3690
      %v3916 = vunpack.c.l.b16 %v3691
      %v3917 = vunpack.c.l.b16 %v3692
      %v3918 = vunpack.c.l.b16 %v3693
      %v3919 = vunpack.c.l.b16 %v3694
      %v3920 = vunpack.c.l.b16 %v3695
      %v3921 = vunpack.c.l.b16 %v3696
      %v3922 = vunpack.c.l.b16 %v3697
      %v3923 = vunpack.c.l.b16 %v3698
      %v3924 = vunpack.c.l.b16 %v3699
      %v3925 = vunpack.c.l.b16 %v3700
      %v3926 = vunpack.c.l.b16 %v3701
      %v3927 = vpack.c.b16 %v3896, %v3895
      %v3928 = vpack.c.b16 %v3898, %v3897
      %v3929 = vpack.c.b16 %v3900, %v3899
      %v3930 = vpack.c.b16 %v3902, %v3901
      %v3931 = vpack.c.b16 %v3904, %v3903
      %v3932 = vpack.c.b16 %v3906, %v3905
      %v3933 = vpack.c.b16 %v3908, %v3907
      %v3934 = vpack.c.b16 %v3910, %v3909
      %v3935 = vpack.c.b16 %v3912, %v3911
      %v3936 = vpack.c.b16 %v3914, %v3913
      %v3937 = vpack.c.b16 %v3916, %v3915
      %v3938 = vpack.c.b16 %v3918, %v3917
      %v3939 = vpack.c.b16 %v3920, %v3919
      %v3940 = vpack.c.b16 %v3922, %v3921
      %v3941 = vpack.c.b16 %v3924, %v3923
      %v3942 = vpack.c.b16 %v3926, %v3925
      %v3959 = vunpack.c.l.b16 %v3702
      %v3960 = vunpack.c.l.b16 %v3703
      %v3961 = vunpack.c.l.b16 %v3704
      %v3962 = vunpack.c.l.b16 %v3705
      %v3963 = vunpack.c.l.b16 %v3706
      %v3964 = vunpack.c.l.b16 %v3707
      %v3965 = vunpack.c.l.b16 %v3708
      %v3966 = vunpack.c.l.b16 %v3709
      %v3967 = vunpack.c.l.b16 %v3710
      %v3968 = vunpack.c.l.b16 %v3711
      %v3969 = vunpack.c.l.b16 %v3712
      %v3970 = vunpack.c.l.b16 %v3713
      %v3971 = vunpack.c.l.b16 %v3714
      %v3972 = vunpack.c.l.b16 %v3715
      %v3973 = vunpack.c.l.b16 %v3716
      %v3974 = vunpack.c.l.b16 %v3717
      %v3975 = vpack.c.b16 %v3959, %v3959
      %v3976 = vpack.c.b16 %v3960, %v3960
      %v3977 = vpack.c.b16 %v3961, %v3961
      %v3978 = vpack.c.b16 %v3962, %v3962
      %v3979 = vpack.c.b16 %v3963, %v3963
      %v3980 = vpack.c.b16 %v3964, %v3964
      %v3981 = vpack.c.b16 %v3965, %v3965
      %v3982 = vpack.c.b16 %v3966, %v3966
      %v3983 = vpack.c.b16 %v3967, %v3967
      %v3984 = vpack.c.b16 %v3968, %v3968
      %v3985 = vpack.c.b16 %v3969, %v3969
      %v3986 = vpack.c.b16 %v3970, %v3970
      %v3987 = vpack.c.b16 %v3971, %v3971
      %v3988 = vpack.c.b16 %v3972, %v3972
      %v3989 = vpack.c.b16 %v3973, %v3973
      %v3990 = vpack.c.b16 %v3974, %v3974
      %v3992 = vshrl.u32 %v3927, 16
      %v3994 = vshll.u32 %v3927, 16
      %v3996 = vrot.slane %v3994, 1
      %v3997 = vor.u32 %v3992, %v3996
      %v3999 = vshll.u32 %v3975, 16
      %v4001 = vrot.slane %v3999, 1
      %v4002 = vsel %vm1172, %v3997, %v4001
      %v4004 = vshrl.u32 %v3928, 16
      %v4006 = vshll.u32 %v3928, 16
      %v4008 = vrot.slane %v4006, 1
      %v4009 = vor.u32 %v4004, %v4008
      %v4011 = vshll.u32 %v3976, 16
      %v4013 = vrot.slane %v4011, 1
      %v4014 = vsel %vm1172, %v4009, %v4013
      %v4016 = vshrl.u32 %v3929, 16
      %v4018 = vshll.u32 %v3929, 16
      %v4020 = vrot.slane %v4018, 1
      %v4021 = vor.u32 %v4016, %v4020
      %v4023 = vshll.u32 %v3977, 16
      %v4025 = vrot.slane %v4023, 1
      %v4026 = vsel %vm1172, %v4021, %v4025
      %v4028 = vshrl.u32 %v3930, 16
      %v4030 = vshll.u32 %v3930, 16
      %v4032 = vrot.slane %v4030, 1
      %v4033 = vor.u32 %v4028, %v4032
      %v4035 = vshll.u32 %v3978, 16
      %v4037 = vrot.slane %v4035, 1
      %v4038 = vsel %vm1172, %v4033, %v4037
      %v4040 = vshrl.u32 %v3931, 16
      %v4042 = vshll.u32 %v3931, 16
      %v4044 = vrot.slane %v4042, 1
      %v4045 = vor.u32 %v4040, %v4044
      %v4047 = vshll.u32 %v3979, 16
      %v4049 = vrot.slane %v4047, 1
      %v4050 = vsel %vm1172, %v4045, %v4049
      %v4052 = vshrl.u32 %v3932, 16
      %v4054 = vshll.u32 %v3932, 16
      %v4056 = vrot.slane %v4054, 1
      %v4057 = vor.u32 %v4052, %v4056
      %v4059 = vshll.u32 %v3980, 16
      %v4061 = vrot.slane %v4059, 1
      %v4062 = vsel %vm1172, %v4057, %v4061
      %v4064 = vshrl.u32 %v3933, 16
      %v4066 = vshll.u32 %v3933, 16
      %v4068 = vrot.slane %v4066, 1
      %v4069 = vor.u32 %v4064, %v4068
      %v4071 = vshll.u32 %v3981, 16
      %v4073 = vrot.slane %v4071, 1
      %v4074 = vsel %vm1172, %v4069, %v4073
      %v4076 = vshrl.u32 %v3934, 16
      %v4078 = vshll.u32 %v3934, 16
      %v4080 = vrot.slane %v4078, 1
      %v4081 = vor.u32 %v4076, %v4080
      %v4083 = vshll.u32 %v3982, 16
      %v4085 = vrot.slane %v4083, 1
      %v4086 = vsel %vm1172, %v4081, %v4085
      %v4088 = vshrl.u32 %v3935, 16
      %v4090 = vshll.u32 %v3935, 16
      %v4092 = vrot.slane %v4090, 1
      %v4093 = vor.u32 %v4088, %v4092
      %v4095 = vshll.u32 %v3983, 16
      %v4097 = vrot.slane %v4095, 1
      %v4098 = vsel %vm1172, %v4093, %v4097
      %v4100 = vshrl.u32 %v3936, 16
      %v4102 = vshll.u32 %v3936, 16
      %v4104 = vrot.slane %v4102, 1
      %v4105 = vor.u32 %v4100, %v4104
      %v4107 = vshll.u32 %v3984, 16
      %v4109 = vrot.slane %v4107, 1
      %v4110 = vsel %vm1172, %v4105, %v4109
      %v4112 = vshrl.u32 %v3937, 16
      %v4114 = vshll.u32 %v3937, 16
      %v4116 = vrot.slane %v4114, 1
      %v4117 = vor.u32 %v4112, %v4116
      %v4119 = vshll.u32 %v3985, 16
      %v4121 = vrot.slane %v4119, 1
      %v4122 = vsel %vm1172, %v4117, %v4121
      %v4124 = vshrl.u32 %v3938, 16
      %v4126 = vshll.u32 %v3938, 16
      %v4128 = vrot.slane %v4126, 1
      %v4129 = vor.u32 %v4124, %v4128
      %v4131 = vshll.u32 %v3986, 16
      %v4133 = vrot.slane %v4131, 1
      %v4134 = vsel %vm1172, %v4129, %v4133
      %v4136 = vshrl.u32 %v3939, 16
      %v4138 = vshll.u32 %v3939, 16
      %v4140 = vrot.slane %v4138, 1
      %v4141 = vor.u32 %v4136, %v4140
      %v4143 = vshll.u32 %v3987, 16
      %v4145 = vrot.slane %v4143, 1
      %v4146 = vsel %vm1172, %v4141, %v4145
      %v4148 = vshrl.u32 %v3940, 16
      %v4150 = vshll.u32 %v3940, 16
      %v4152 = vrot.slane %v4150, 1
      %v4153 = vor.u32 %v4148, %v4152
      %v4155 = vshll.u32 %v3988, 16
      %v4157 = vrot.slane %v4155, 1
      %v4158 = vsel %vm1172, %v4153, %v4157
      %v4160 = vshrl.u32 %v3941, 16
      %v4162 = vshll.u32 %v3941, 16
      %v4164 = vrot.slane %v4162, 1
      %v4165 = vor.u32 %v4160, %v4164
      %v4167 = vshll.u32 %v3989, 16
      %v4169 = vrot.slane %v4167, 1
      %v4170 = vsel %vm1172, %v4165, %v4169
      %v4172 = vshrl.u32 %v3942, 16
      %v4174 = vshll.u32 %v3942, 16
      %v4176 = vrot.slane %v4174, 1
      %v4177 = vor.u32 %v4172, %v4176
      %v4179 = vshll.u32 %v3990, 16
      %v4181 = vrot.slane %v4179, 1
      %v4182 = vsel %vm1172, %v4177, %v4181
      %4183 = vrot.lane.b32.xlu0 %v4002, 8
      %v4184 = vpop.permute.xlu0 %4183
      %4185 = vrot.lane.b32.xlu0 %v4014, 8
      %v4186 = vpop.permute.xlu0 %4185
      %4187 = vrot.lane.b32.xlu0 %v4026, 8
      %v4188 = vpop.permute.xlu0 %4187
      %4189 = vrot.lane.b32.xlu0 %v4038, 8
      %v4190 = vpop.permute.xlu0 %4189
      %4191 = vrot.lane.b32.xlu0 %v4050, 8
      %v4192 = vpop.permute.xlu0 %4191
      %4193 = vrot.lane.b32.xlu0 %v4062, 8
      %v4194 = vpop.permute.xlu0 %4193
      %4195 = vrot.lane.b32.xlu0 %v4074, 8
      %v4196 = vpop.permute.xlu0 %4195
      %4197 = vrot.lane.b32.xlu0 %v4086, 8
      %v4198 = vpop.permute.xlu0 %4197
      %4199 = vrot.lane.b32.xlu0 %v4098, 8
      %v4200 = vpop.permute.xlu0 %4199
      %4201 = vrot.lane.b32.xlu0 %v4110, 8
      %v4202 = vpop.permute.xlu0 %4201
      %4203 = vrot.lane.b32.xlu0 %v4122, 8
      %v4204 = vpop.permute.xlu0 %4203
      %4205 = vrot.lane.b32.xlu0 %v4134, 8
      %v4206 = vpop.permute.xlu0 %4205
      %4207 = vrot.lane.b32.xlu0 %v4146, 8
      %v4208 = vpop.permute.xlu0 %4207
      %4209 = vrot.lane.b32.xlu0 %v4158, 8
      %v4210 = vpop.permute.xlu0 %4209
      %4211 = vrot.lane.b32.xlu0 %v4170, 8
      %v4212 = vpop.permute.xlu0 %4211
      %4213 = vrot.lane.b32.xlu0 %v4182, 8
      %v4214 = vpop.permute.xlu0 %4213
      %v4231 = vunpack.c.l.b16 %v3718
      %v4232 = vunpack.c.l.b16 %v3719
      %v4233 = vunpack.c.l.b16 %v3720
      %v4234 = vunpack.c.l.b16 %v3721
      %v4235 = vunpack.c.l.b16 %v3722
      %v4236 = vunpack.c.l.b16 %v3723
      %v4237 = vunpack.c.l.b16 %v3724
      %v4238 = vunpack.c.l.b16 %v3725
      %v4239 = vunpack.c.l.b16 %v3726
      %v4240 = vunpack.c.l.b16 %v3727
      %v4241 = vunpack.c.l.b16 %v3728
      %v4242 = vunpack.c.l.b16 %v3729
      %v4243 = vunpack.c.l.b16 %v3730
      %v4244 = vunpack.c.l.b16 %v3731
      %v4245 = vunpack.c.l.b16 %v3732
      %v4246 = vunpack.c.l.b16 %v3733
      %v4247 = vpack.c.b16 %v3896, %v4231
      %v4248 = vpack.c.b16 %v3898, %v4232
      %v4249 = vpack.c.b16 %v3900, %v4233
      %v4250 = vpack.c.b16 %v3902, %v4234
      %v4251 = vpack.c.b16 %v3904, %v4235
      %v4252 = vpack.c.b16 %v3906, %v4236
      %v4253 = vpack.c.b16 %v3908, %v4237
      %v4254 = vpack.c.b16 %v3910, %v4238
      %v4255 = vpack.c.b16 %v3912, %v4239
      %v4256 = vpack.c.b16 %v3914, %v4240
      %v4257 = vpack.c.b16 %v3916, %v4241
      %v4258 = vpack.c.b16 %v3918, %v4242
      %v4259 = vpack.c.b16 %v3920, %v4243
      %v4260 = vpack.c.b16 %v3922, %v4244
      %v4261 = vpack.c.b16 %v3924, %v4245
      %v4262 = vpack.c.b16 %v3926, %v4246
      %v4263 = vrot.slane %v4247, 1
      %v4264 = vrot.slane %v3975, 1
      %v4265 = vsel %vm1445, %v4263, %v4264
      %v4266 = vrot.slane %v4248, 1
      %v4267 = vrot.slane %v3976, 1
      %v4268 = vsel %vm1445, %v4266, %v4267
      %v4269 = vrot.slane %v4249, 1
      %v4270 = vrot.slane %v3977, 1
      %v4271 = vsel %vm1445, %v4269, %v4270
      %v4272 = vrot.slane %v4250, 1
      %v4273 = vrot.slane %v3978, 1
      %v4274 = vsel %vm1445, %v4272, %v4273
      %v4275 = vrot.slane %v4251, 1
      %v4276 = vrot.slane %v3979, 1
      %v4277 = vsel %vm1445, %v4275, %v4276
      %v4278 = vrot.slane %v4252, 1
      %v4279 = vrot.slane %v3980, 1
      %v4280 = vsel %vm1445, %v4278, %v4279
      %v4281 = vrot.slane %v4253, 1
      %v4282 = vrot.slane %v3981, 1
      %v4283 = vsel %vm1445, %v4281, %v4282
      %v4284 = vrot.slane %v4254, 1
      %v4285 = vrot.slane %v3982, 1
      %v4286 = vsel %vm1445, %v4284, %v4285
      %v4287 = vrot.slane %v4255, 1
      %v4288 = vrot.slane %v3983, 1
      %v4289 = vsel %vm1445, %v4287, %v4288
      %v4290 = vrot.slane %v4256, 1
      %v4291 = vrot.slane %v3984, 1
      %v4292 = vsel %vm1445, %v4290, %v4291
      %v4293 = vrot.slane %v4257, 1
      %v4294 = vrot.slane %v3985, 1
      %v4295 = vsel %vm1445, %v4293, %v4294
      %v4296 = vrot.slane %v4258, 1
      %v4297 = vrot.slane %v3986, 1
      %v4298 = vsel %vm1445, %v4296, %v4297
      %v4299 = vrot.slane %v4259, 1
      %v4300 = vrot.slane %v3987, 1
      %v4301 = vsel %vm1445, %v4299, %v4300
      %v4302 = vrot.slane %v4260, 1
      %v4303 = vrot.slane %v3988, 1
      %v4304 = vsel %vm1445, %v4302, %v4303
      %v4305 = vrot.slane %v4261, 1
      %v4306 = vrot.slane %v3989, 1
      %v4307 = vsel %vm1445, %v4305, %v4306
      %v4308 = vrot.slane %v4262, 1
      %v4309 = vrot.slane %v3990, 1
      %v4310 = vsel %vm1445, %v4308, %v4309
      %4311 = vrot.lane.b32.xlu0 %v4265, 16
      %v4312 = vpop.permute.xlu0 %4311
      %4313 = vrot.lane.b32.xlu0 %v4268, 16
      %v4314 = vpop.permute.xlu0 %4313
      %4315 = vrot.lane.b32.xlu0 %v4271, 16
      %v4316 = vpop.permute.xlu0 %4315
      %4317 = vrot.lane.b32.xlu0 %v4274, 16
      %v4318 = vpop.permute.xlu0 %4317
      %4319 = vrot.lane.b32.xlu0 %v4277, 16
      %v4320 = vpop.permute.xlu0 %4319
      %4321 = vrot.lane.b32.xlu0 %v4280, 16
      %v4322 = vpop.permute.xlu0 %4321
      %4323 = vrot.lane.b32.xlu0 %v4283, 16
      %v4324 = vpop.permute.xlu0 %4323
      %4325 = vrot.lane.b32.xlu0 %v4286, 16
      %v4326 = vpop.permute.xlu0 %4325
      %4327 = vrot.lane.b32.xlu0 %v4289, 16
      %v4328 = vpop.permute.xlu0 %4327
      %4329 = vrot.lane.b32.xlu0 %v4292, 16
      %v4330 = vpop.permute.xlu0 %4329
      %4331 = vrot.lane.b32.xlu0 %v4295, 16
      %v4332 = vpop.permute.xlu0 %4331
      %4333 = vrot.lane.b32.xlu0 %v4298, 16
      %v4334 = vpop.permute.xlu0 %4333
      %4335 = vrot.lane.b32.xlu0 %v4301, 16
      %v4336 = vpop.permute.xlu0 %4335
      %4337 = vrot.lane.b32.xlu0 %v4304, 16
      %v4338 = vpop.permute.xlu0 %4337
      %4339 = vrot.lane.b32.xlu0 %v4307, 16
      %v4340 = vpop.permute.xlu0 %4339
      %4341 = vrot.lane.b32.xlu0 %v4310, 16
      %v4342 = vpop.permute.xlu0 %4341
      %v4375 = vunpack.c.l.b16 %v3734
      %v4376 = vunpack.c.l.b16 %v3735
      %v4377 = vunpack.c.l.b16 %v3736
      %v4378 = vunpack.c.l.b16 %v3737
      %v4379 = vunpack.c.l.b16 %v3738
      %v4380 = vunpack.c.l.b16 %v3739
      %v4381 = vunpack.c.l.b16 %v3740
      %v4382 = vunpack.c.l.b16 %v3741
      %v4383 = vunpack.c.l.b16 %v3742
      %v4384 = vunpack.c.l.b16 %v3743
      %v4385 = vunpack.c.l.b16 %v3744
      %v4386 = vunpack.c.l.b16 %v3745
      %v4387 = vunpack.c.l.b16 %v3746
      %v4388 = vunpack.c.l.b16 %v3747
      %v4389 = vunpack.c.l.b16 %v3748
      %v4390 = vunpack.c.l.b16 %v3749
      %v4391 = vunpack.c.l.b16 %v3750
      %v4392 = vunpack.c.l.b16 %v3751
      %v4393 = vunpack.c.l.b16 %v3752
      %v4394 = vunpack.c.l.b16 %v3753
      %v4395 = vunpack.c.l.b16 %v3754
      %v4396 = vunpack.c.l.b16 %v3755
      %v4397 = vunpack.c.l.b16 %v3756
      %v4398 = vunpack.c.l.b16 %v3757
      %v4399 = vunpack.c.l.b16 %v3758
      %v4400 = vunpack.c.l.b16 %v3759
      %v4401 = vunpack.c.l.b16 %v3760
      %v4402 = vunpack.c.l.b16 %v3761
      %v4403 = vunpack.c.l.b16 %v3762
      %v4404 = vunpack.c.l.b16 %v3763
      %v4405 = vunpack.c.l.b16 %v3764
      %v4406 = vunpack.c.l.b16 %v3765
      %v4407 = vpack.c.b16 %v4376, %v4375
      %v4408 = vpack.c.b16 %v4378, %v4377
      %v4409 = vpack.c.b16 %v4380, %v4379
      %v4410 = vpack.c.b16 %v4382, %v4381
      %v4411 = vpack.c.b16 %v4384, %v4383
      %v4412 = vpack.c.b16 %v4386, %v4385
      %v4413 = vpack.c.b16 %v4388, %v4387
      %v4414 = vpack.c.b16 %v4390, %v4389
      %v4415 = vpack.c.b16 %v4392, %v4391
      %v4416 = vpack.c.b16 %v4394, %v4393
      %v4417 = vpack.c.b16 %v4396, %v4395
      %v4418 = vpack.c.b16 %v4398, %v4397
      %v4419 = vpack.c.b16 %v4400, %v4399
      %v4420 = vpack.c.b16 %v4402, %v4401
      %v4421 = vpack.c.b16 %v4404, %v4403
      %v4422 = vpack.c.b16 %v4406, %v4405
      %4423 = vrot.lane.b32.xlu0 %v4407, 24
      %v4424 = vpop.permute.xlu0 %4423
      %4425 = vrot.lane.b32.xlu0 %v4408, 24
      %v4426 = vpop.permute.xlu0 %4425
      %4427 = vrot.lane.b32.xlu0 %v4409, 24
      %v4428 = vpop.permute.xlu0 %4427
      %4429 = vrot.lane.b32.xlu0 %v4410, 24
      %v4430 = vpop.permute.xlu0 %4429
      %4431 = vrot.lane.b32.xlu0 %v4411, 24
      %v4432 = vpop.permute.xlu0 %4431
      %4433 = vrot.lane.b32.xlu0 %v4412, 24
      %v4434 = vpop.permute.xlu0 %4433
      %4435 = vrot.lane.b32.xlu0 %v4413, 24
      %v4436 = vpop.permute.xlu0 %4435
      %4437 = vrot.lane.b32.xlu0 %v4414, 24
      %v4438 = vpop.permute.xlu0 %4437
      %4439 = vrot.lane.b32.xlu0 %v4415, 24
      %v4440 = vpop.permute.xlu0 %4439
      %4441 = vrot.lane.b32.xlu0 %v4416, 24
      %v4442 = vpop.permute.xlu0 %4441
      %4443 = vrot.lane.b32.xlu0 %v4417, 24
      %v4444 = vpop.permute.xlu0 %4443
      %4445 = vrot.lane.b32.xlu0 %v4418, 24
      %v4446 = vpop.permute.xlu0 %4445
      %4447 = vrot.lane.b32.xlu0 %v4419, 24
      %v4448 = vpop.permute.xlu0 %4447
      %4449 = vrot.lane.b32.xlu0 %v4420, 24
      %v4450 = vpop.permute.xlu0 %4449
      %4451 = vrot.lane.b32.xlu0 %v4421, 24
      %v4452 = vpop.permute.xlu0 %4451
      %4453 = vrot.lane.b32.xlu0 %v4422, 24
      %v4454 = vpop.permute.xlu0 %4453
      %v4471 = vunpack.c.l.b16 %v3766
      %v4472 = vunpack.c.l.b16 %v3767
      %v4473 = vunpack.c.l.b16 %v3768
      %v4474 = vunpack.c.l.b16 %v3769
      %v4475 = vunpack.c.l.b16 %v3770
      %v4476 = vunpack.c.l.b16 %v3771
      %v4477 = vunpack.c.l.b16 %v3772
      %v4478 = vunpack.c.l.b16 %v3773
      %v4479 = vunpack.c.l.b16 %v3774
      %v4480 = vunpack.c.l.b16 %v3775
      %v4481 = vunpack.c.l.b16 %v3776
      %v4482 = vunpack.c.l.b16 %v3777
      %v4483 = vunpack.c.l.b16 %v3778
      %v4484 = vunpack.c.l.b16 %v3779
      %v4485 = vunpack.c.l.b16 %v3780
      %v4486 = vunpack.c.l.b16 %v3781
      %v4487 = vpack.c.b16 %v4471, %v4471
      %v4488 = vpack.c.b16 %v4472, %v4472
      %v4489 = vpack.c.b16 %v4473, %v4473
      %v4490 = vpack.c.b16 %v4474, %v4474
      %v4491 = vpack.c.b16 %v4475, %v4475
      %v4492 = vpack.c.b16 %v4476, %v4476
      %v4493 = vpack.c.b16 %v4477, %v4477
      %v4494 = vpack.c.b16 %v4478, %v4478
      %v4495 = vpack.c.b16 %v4479, %v4479
      %v4496 = vpack.c.b16 %v4480, %v4480
      %v4497 = vpack.c.b16 %v4481, %v4481
      %v4498 = vpack.c.b16 %v4482, %v4482
      %v4499 = vpack.c.b16 %v4483, %v4483
      %v4500 = vpack.c.b16 %v4484, %v4484
      %v4501 = vpack.c.b16 %v4485, %v4485
      %v4502 = vpack.c.b16 %v4486, %v4486
      %v4504 = vshrl.u32 %v4407, 16
      %v4506 = vshll.u32 %v4407, 16
      %v4508 = vrot.slane %v4506, 1
      %v4509 = vor.u32 %v4504, %v4508
      %v4511 = vshll.u32 %v4487, 16
      %v4513 = vrot.slane %v4511, 1
      %v4514 = vsel %vm1172, %v4509, %v4513
      %v4516 = vshrl.u32 %v4408, 16
      %v4518 = vshll.u32 %v4408, 16
      %v4520 = vrot.slane %v4518, 1
      %v4521 = vor.u32 %v4516, %v4520
      %v4523 = vshll.u32 %v4488, 16
      %v4525 = vrot.slane %v4523, 1
      %v4526 = vsel %vm1172, %v4521, %v4525
      %v4528 = vshrl.u32 %v4409, 16
      %v4530 = vshll.u32 %v4409, 16
      %v4532 = vrot.slane %v4530, 1
      %v4533 = vor.u32 %v4528, %v4532
      %v4535 = vshll.u32 %v4489, 16
      %v4537 = vrot.slane %v4535, 1
      %v4538 = vsel %vm1172, %v4533, %v4537
      %v4540 = vshrl.u32 %v4410, 16
      %v4542 = vshll.u32 %v4410, 16
      %v4544 = vrot.slane %v4542, 1
      %v4545 = vor.u32 %v4540, %v4544
      %v4547 = vshll.u32 %v4490, 16
      %v4549 = vrot.slane %v4547, 1
      %v4550 = vsel %vm1172, %v4545, %v4549
      %v4552 = vshrl.u32 %v4411, 16
      %v4554 = vshll.u32 %v4411, 16
      %v4556 = vrot.slane %v4554, 1
      %v4557 = vor.u32 %v4552, %v4556
      %v4559 = vshll.u32 %v4491, 16
      %v4561 = vrot.slane %v4559, 1
      %v4562 = vsel %vm1172, %v4557, %v4561
      %v4564 = vshrl.u32 %v4412, 16
      %v4566 = vshll.u32 %v4412, 16
      %v4568 = vrot.slane %v4566, 1
      %v4569 = vor.u32 %v4564, %v4568
      %v4571 = vshll.u32 %v4492, 16
      %v4573 = vrot.slane %v4571, 1
      %v4574 = vsel %vm1172, %v4569, %v4573
      %v4576 = vshrl.u32 %v4413, 16
      %v4578 = vshll.u32 %v4413, 16
      %v4580 = vrot.slane %v4578, 1
      %v4581 = vor.u32 %v4576, %v4580
      %v4583 = vshll.u32 %v4493, 16
      %v4585 = vrot.slane %v4583, 1
      %v4586 = vsel %vm1172, %v4581, %v4585
      %v4588 = vshrl.u32 %v4414, 16
      %v4590 = vshll.u32 %v4414, 16
      %v4592 = vrot.slane %v4590, 1
      %v4593 = vor.u32 %v4588, %v4592
      %v4595 = vshll.u32 %v4494, 16
      %v4597 = vrot.slane %v4595, 1
      %v4598 = vsel %vm1172, %v4593, %v4597
      %v4600 = vshrl.u32 %v4415, 16
      %v4602 = vshll.u32 %v4415, 16
      %v4604 = vrot.slane %v4602, 1
      %v4605 = vor.u32 %v4600, %v4604
      %v4607 = vshll.u32 %v4495, 16
      %v4609 = vrot.slane %v4607, 1
      %v4610 = vsel %vm1172, %v4605, %v4609
      %v4612 = vshrl.u32 %v4416, 16
      %v4614 = vshll.u32 %v4416, 16
      %v4616 = vrot.slane %v4614, 1
      %v4617 = vor.u32 %v4612, %v4616
      %v4619 = vshll.u32 %v4496, 16
      %v4621 = vrot.slane %v4619, 1
      %v4622 = vsel %vm1172, %v4617, %v4621
      %v4624 = vshrl.u32 %v4417, 16
      %v4626 = vshll.u32 %v4417, 16
      %v4628 = vrot.slane %v4626, 1
      %v4629 = vor.u32 %v4624, %v4628
      %v4631 = vshll.u32 %v4497, 16
      %v4633 = vrot.slane %v4631, 1
      %v4634 = vsel %vm1172, %v4629, %v4633
      %v4636 = vshrl.u32 %v4418, 16
      %v4638 = vshll.u32 %v4418, 16
      %v4640 = vrot.slane %v4638, 1
      %v4641 = vor.u32 %v4636, %v4640
      %v4643 = vshll.u32 %v4498, 16
      %v4645 = vrot.slane %v4643, 1
      %v4646 = vsel %vm1172, %v4641, %v4645
      %v4648 = vshrl.u32 %v4419, 16
      %v4650 = vshll.u32 %v4419, 16
      %v4652 = vrot.slane %v4650, 1
      %v4653 = vor.u32 %v4648, %v4652
      %v4655 = vshll.u32 %v4499, 16
      %v4657 = vrot.slane %v4655, 1
      %v4658 = vsel %vm1172, %v4653, %v4657
      %v4660 = vshrl.u32 %v4420, 16
      %v4662 = vshll.u32 %v4420, 16
      %v4664 = vrot.slane %v4662, 1
      %v4665 = vor.u32 %v4660, %v4664
      %v4667 = vshll.u32 %v4500, 16
      %v4669 = vrot.slane %v4667, 1
      %v4670 = vsel %vm1172, %v4665, %v4669
      %v4672 = vshrl.u32 %v4421, 16
      %v4674 = vshll.u32 %v4421, 16
      %v4676 = vrot.slane %v4674, 1
      %v4677 = vor.u32 %v4672, %v4676
      %v4679 = vshll.u32 %v4501, 16
      %v4681 = vrot.slane %v4679, 1
      %v4682 = vsel %vm1172, %v4677, %v4681
      %v4684 = vshrl.u32 %v4422, 16
      %v4686 = vshll.u32 %v4422, 16
      %v4688 = vrot.slane %v4686, 1
      %v4689 = vor.u32 %v4684, %v4688
      %v4691 = vshll.u32 %v4502, 16
      %v4693 = vrot.slane %v4691, 1
      %v4694 = vsel %vm1172, %v4689, %v4693
      %4695 = vrot.lane.b32.xlu0 %v4514, 32
      %v4696 = vpop.permute.xlu0 %4695
      %4697 = vrot.lane.b32.xlu0 %v4526, 32
      %v4698 = vpop.permute.xlu0 %4697
      %4699 = vrot.lane.b32.xlu0 %v4538, 32
      %v4700 = vpop.permute.xlu0 %4699
      %4701 = vrot.lane.b32.xlu0 %v4550, 32
      %v4702 = vpop.permute.xlu0 %4701
      %4703 = vrot.lane.b32.xlu0 %v4562, 32
      %v4704 = vpop.permute.xlu0 %4703
      %4705 = vrot.lane.b32.xlu0 %v4574, 32
      %v4706 = vpop.permute.xlu0 %4705
      %4707 = vrot.lane.b32.xlu0 %v4586, 32
      %v4708 = vpop.permute.xlu0 %4707
      %4709 = vrot.lane.b32.xlu0 %v4598, 32
      %v4710 = vpop.permute.xlu0 %4709
      %4711 = vrot.lane.b32.xlu0 %v4610, 32
      %v4712 = vpop.permute.xlu0 %4711
      %4713 = vrot.lane.b32.xlu0 %v4622, 32
      %v4714 = vpop.permute.xlu0 %4713
      %4715 = vrot.lane.b32.xlu0 %v4634, 32
      %v4716 = vpop.permute.xlu0 %4715
      %4717 = vrot.lane.b32.xlu0 %v4646, 32
      %v4718 = vpop.permute.xlu0 %4717
      %4719 = vrot.lane.b32.xlu0 %v4658, 32
      %v4720 = vpop.permute.xlu0 %4719
      %4721 = vrot.lane.b32.xlu0 %v4670, 32
      %v4722 = vpop.permute.xlu0 %4721
      %4723 = vrot.lane.b32.xlu0 %v4682, 32
      %v4724 = vpop.permute.xlu0 %4723
      %4725 = vrot.lane.b32.xlu0 %v4694, 32
      %v4726 = vpop.permute.xlu0 %4725
      %v4743 = vunpack.c.l.b16 %v3782
      %v4744 = vunpack.c.l.b16 %v3783
      %v4745 = vunpack.c.l.b16 %v3784
      %v4746 = vunpack.c.l.b16 %v3785
      %v4747 = vunpack.c.l.b16 %v3786
      %v4748 = vunpack.c.l.b16 %v3787
      %v4749 = vunpack.c.l.b16 %v3788
      %v4750 = vunpack.c.l.b16 %v3789
      %v4751 = vunpack.c.l.b16 %v3790
      %v4752 = vunpack.c.l.b16 %v3791
      %v4753 = vunpack.c.l.b16 %v3792
      %v4754 = vunpack.c.l.b16 %v3793
      %v4755 = vunpack.c.l.b16 %v3794
      %v4756 = vunpack.c.l.b16 %v3795
      %v4757 = vunpack.c.l.b16 %v3796
      %v4758 = vunpack.c.l.b16 %v3797
      %v4759 = vpack.c.b16 %v4376, %v4743
      %v4760 = vpack.c.b16 %v4378, %v4744
      %v4761 = vpack.c.b16 %v4380, %v4745
      %v4762 = vpack.c.b16 %v4382, %v4746
      %v4763 = vpack.c.b16 %v4384, %v4747
      %v4764 = vpack.c.b16 %v4386, %v4748
      %v4765 = vpack.c.b16 %v4388, %v4749
      %v4766 = vpack.c.b16 %v4390, %v4750
      %v4767 = vpack.c.b16 %v4392, %v4751
      %v4768 = vpack.c.b16 %v4394, %v4752
      %v4769 = vpack.c.b16 %v4396, %v4753
      %v4770 = vpack.c.b16 %v4398, %v4754
      %v4771 = vpack.c.b16 %v4400, %v4755
      %v4772 = vpack.c.b16 %v4402, %v4756
      %v4773 = vpack.c.b16 %v4404, %v4757
      %v4774 = vpack.c.b16 %v4406, %v4758
      %v4775 = vrot.slane %v4759, 1
      %v4776 = vrot.slane %v4487, 1
      %v4777 = vsel %vm1445, %v4775, %v4776
      %v4778 = vrot.slane %v4760, 1
      %v4779 = vrot.slane %v4488, 1
      %v4780 = vsel %vm1445, %v4778, %v4779
      %v4781 = vrot.slane %v4761, 1
      %v4782 = vrot.slane %v4489, 1
      %v4783 = vsel %vm1445, %v4781, %v4782
      %v4784 = vrot.slane %v4762, 1
      %v4785 = vrot.slane %v4490, 1
      %v4786 = vsel %vm1445, %v4784, %v4785
      %v4787 = vrot.slane %v4763, 1
      %v4788 = vrot.slane %v4491, 1
      %v4789 = vsel %vm1445, %v4787, %v4788
      %v4790 = vrot.slane %v4764, 1
      %v4791 = vrot.slane %v4492, 1
      %v4792 = vsel %vm1445, %v4790, %v4791
      %v4793 = vrot.slane %v4765, 1
      %v4794 = vrot.slane %v4493, 1
      %v4795 = vsel %vm1445, %v4793, %v4794
      %v4796 = vrot.slane %v4766, 1
      %v4797 = vrot.slane %v4494, 1
      %v4798 = vsel %vm1445, %v4796, %v4797
      %v4799 = vrot.slane %v4767, 1
      %v4800 = vrot.slane %v4495, 1
      %v4801 = vsel %vm1445, %v4799, %v4800
      %v4802 = vrot.slane %v4768, 1
      %v4803 = vrot.slane %v4496, 1
      %v4804 = vsel %vm1445, %v4802, %v4803
      %v4805 = vrot.slane %v4769, 1
      %v4806 = vrot.slane %v4497, 1
      %v4807 = vsel %vm1445, %v4805, %v4806
      %v4808 = vrot.slane %v4770, 1
      %v4809 = vrot.slane %v4498, 1
      %v4810 = vsel %vm1445, %v4808, %v4809
      %v4811 = vrot.slane %v4771, 1
      %v4812 = vrot.slane %v4499, 1
      %v4813 = vsel %vm1445, %v4811, %v4812
      %v4814 = vrot.slane %v4772, 1
      %v4815 = vrot.slane %v4500, 1
      %v4816 = vsel %vm1445, %v4814, %v4815
      %v4817 = vrot.slane %v4773, 1
      %v4818 = vrot.slane %v4501, 1
      %v4819 = vsel %vm1445, %v4817, %v4818
      %v4820 = vrot.slane %v4774, 1
      %v4821 = vrot.slane %v4502, 1
      %v4822 = vsel %vm1445, %v4820, %v4821
      %4823 = vrot.lane.b32.xlu0 %v4777, 40
      %v4824 = vpop.permute.xlu0 %4823
      %4825 = vrot.lane.b32.xlu0 %v4780, 40
      %v4826 = vpop.permute.xlu0 %4825
      %4827 = vrot.lane.b32.xlu0 %v4783, 40
      %v4828 = vpop.permute.xlu0 %4827
      %4829 = vrot.lane.b32.xlu0 %v4786, 40
      %v4830 = vpop.permute.xlu0 %4829
      %4831 = vrot.lane.b32.xlu0 %v4789, 40
      %v4832 = vpop.permute.xlu0 %4831
      %4833 = vrot.lane.b32.xlu0 %v4792, 40
      %v4834 = vpop.permute.xlu0 %4833
      %4835 = vrot.lane.b32.xlu0 %v4795, 40
      %v4836 = vpop.permute.xlu0 %4835
      %4837 = vrot.lane.b32.xlu0 %v4798, 40
      %v4838 = vpop.permute.xlu0 %4837
      %4839 = vrot.lane.b32.xlu0 %v4801, 40
      %v4840 = vpop.permute.xlu0 %4839
      %4841 = vrot.lane.b32.xlu0 %v4804, 40
      %v4842 = vpop.permute.xlu0 %4841
      %4843 = vrot.lane.b32.xlu0 %v4807, 40
      %v4844 = vpop.permute.xlu0 %4843
      %4845 = vrot.lane.b32.xlu0 %v4810, 40
      %v4846 = vpop.permute.xlu0 %4845
      %4847 = vrot.lane.b32.xlu0 %v4813, 40
      %v4848 = vpop.permute.xlu0 %4847
      %4849 = vrot.lane.b32.xlu0 %v4816, 40
      %v4850 = vpop.permute.xlu0 %4849
      %4851 = vrot.lane.b32.xlu0 %v4819, 40
      %v4852 = vpop.permute.xlu0 %4851
      %4853 = vrot.lane.b32.xlu0 %v4822, 40
      %v4854 = vpop.permute.xlu0 %4853
      %v4887 = vunpack.c.l.b16 %v3799
      %v4888 = vunpack.c.l.b16 %v3800
      %v4889 = vunpack.c.l.b16 %v3801
      %v4890 = vunpack.c.l.b16 %v3802
      %v4891 = vunpack.c.l.b16 %v3803
      %v4892 = vunpack.c.l.b16 %v3804
      %v4893 = vunpack.c.l.b16 %v3805
      %v4894 = vunpack.c.l.b16 %v3806
      %v4895 = vunpack.c.l.b16 %v3807
      %v4896 = vunpack.c.l.b16 %v3808
      %v4897 = vunpack.c.l.b16 %v3809
      %v4898 = vunpack.c.l.b16 %v3810
      %v4899 = vunpack.c.l.b16 %v3811
      %v4900 = vunpack.c.l.b16 %v3812
      %v4901 = vunpack.c.l.b16 %v3813
      %v4902 = vunpack.c.l.b16 %v3814
      %v4903 = vunpack.c.l.b16 %v3815
      %v4904 = vunpack.c.l.b16 %v3816
      %v4905 = vunpack.c.l.b16 %v3817
      %v4906 = vunpack.c.l.b16 %v3818
      %v4907 = vunpack.c.l.b16 %v3819
      %v4908 = vunpack.c.l.b16 %v3820
      %v4909 = vunpack.c.l.b16 %v3821
      %v4910 = vunpack.c.l.b16 %v3822
      %v4911 = vunpack.c.l.b16 %v3823
      %v4912 = vunpack.c.l.b16 %v3824
      %v4913 = vunpack.c.l.b16 %v3825
      %v4914 = vunpack.c.l.b16 %v3826
      %v4915 = vunpack.c.l.b16 %v3827
      %v4916 = vunpack.c.l.b16 %v3828
      %v4917 = vunpack.c.l.b16 %v3829
      %v4918 = vunpack.c.l.b16 %v3830
      %v4919 = vpack.c.b16 %v4888, %v4887
      %v4920 = vpack.c.b16 %v4890, %v4889
      %v4921 = vpack.c.b16 %v4892, %v4891
      %v4922 = vpack.c.b16 %v4894, %v4893
      %v4923 = vpack.c.b16 %v4896, %v4895
      %v4924 = vpack.c.b16 %v4898, %v4897
      %v4925 = vpack.c.b16 %v4900, %v4899
      %v4926 = vpack.c.b16 %v4902, %v4901
      %v4927 = vpack.c.b16 %v4904, %v4903
      %v4928 = vpack.c.b16 %v4906, %v4905
      %v4929 = vpack.c.b16 %v4908, %v4907
      %v4930 = vpack.c.b16 %v4910, %v4909
      %v4931 = vpack.c.b16 %v4912, %v4911
      %v4932 = vpack.c.b16 %v4914, %v4913
      %v4933 = vpack.c.b16 %v4916, %v4915
      %v4934 = vpack.c.b16 %v4918, %v4917
      %4935 = vrot.lane.b32.xlu0 %v4919, 48
      %v4936 = vpop.permute.xlu0 %4935
      %4937 = vrot.lane.b32.xlu0 %v4920, 48
      %v4938 = vpop.permute.xlu0 %4937
      %4939 = vrot.lane.b32.xlu0 %v4921, 48
      %v4940 = vpop.permute.xlu0 %4939
      %4941 = vrot.lane.b32.xlu0 %v4922, 48
      %v4942 = vpop.permute.xlu0 %4941
      %4943 = vrot.lane.b32.xlu0 %v4923, 48
      %v4944 = vpop.permute.xlu0 %4943
      %4945 = vrot.lane.b32.xlu0 %v4924, 48
      %v4946 = vpop.permute.xlu0 %4945
      %4947 = vrot.lane.b32.xlu0 %v4925, 48
      %v4948 = vpop.permute.xlu0 %4947
      %4949 = vrot.lane.b32.xlu0 %v4926, 48
      %v4950 = vpop.permute.xlu0 %4949
      %4951 = vrot.lane.b32.xlu0 %v4927, 48
      %v4952 = vpop.permute.xlu0 %4951
      %4953 = vrot.lane.b32.xlu0 %v4928, 48
      %v4954 = vpop.permute.xlu0 %4953
      %4955 = vrot.lane.b32.xlu0 %v4929, 48
      %v4956 = vpop.permute.xlu0 %4955
      %4957 = vrot.lane.b32.xlu0 %v4930, 48
      %v4958 = vpop.permute.xlu0 %4957
      %4959 = vrot.lane.b32.xlu0 %v4931, 48
      %v4960 = vpop.permute.xlu0 %4959
      %4961 = vrot.lane.b32.xlu0 %v4932, 48
      %v4962 = vpop.permute.xlu0 %4961
      %4963 = vrot.lane.b32.xlu0 %v4933, 48
      %v4964 = vpop.permute.xlu0 %4963
      %4965 = vrot.lane.b32.xlu0 %v4934, 48
      %v4966 = vpop.permute.xlu0 %4965
      %v4983 = vunpack.c.l.b16 %v3831
      %v4984 = vunpack.c.l.b16 %v3832
      %v4985 = vunpack.c.l.b16 %v3833
      %v4986 = vunpack.c.l.b16 %v3834
      %v4987 = vunpack.c.l.b16 %v3835
      %v4988 = vunpack.c.l.b16 %v3836
      %v4989 = vunpack.c.l.b16 %v3837
      %v4990 = vunpack.c.l.b16 %v3838
      %v4991 = vunpack.c.l.b16 %v3839
      %v4992 = vunpack.c.l.b16 %v3840
      %v4993 = vunpack.c.l.b16 %v3841
      %v4994 = vunpack.c.l.b16 %v3842
      %v4995 = vunpack.c.l.b16 %v3843
      %v4996 = vunpack.c.l.b16 %v3844
      %v4997 = vunpack.c.l.b16 %v3845
      %v4998 = vunpack.c.l.b16 %v3846
      %v4999 = vpack.c.b16 %v4983, %v4983
      %v5000 = vpack.c.b16 %v4984, %v4984
      %v5001 = vpack.c.b16 %v4985, %v4985
      %v5002 = vpack.c.b16 %v4986, %v4986
      %v5003 = vpack.c.b16 %v4987, %v4987
      %v5004 = vpack.c.b16 %v4988, %v4988
      %v5005 = vpack.c.b16 %v4989, %v4989
      %v5006 = vpack.c.b16 %v4990, %v4990
      %v5007 = vpack.c.b16 %v4991, %v4991
      %v5008 = vpack.c.b16 %v4992, %v4992
      %v5009 = vpack.c.b16 %v4993, %v4993
      %v5010 = vpack.c.b16 %v4994, %v4994
      %v5011 = vpack.c.b16 %v4995, %v4995
      %v5012 = vpack.c.b16 %v4996, %v4996
      %v5013 = vpack.c.b16 %v4997, %v4997
      %v5014 = vpack.c.b16 %v4998, %v4998
      %v5016 = vshrl.u32 %v4919, 16
      %v5018 = vshll.u32 %v4919, 16
      %v5020 = vrot.slane %v5018, 1
      %v5021 = vor.u32 %v5016, %v5020
      %v5023 = vshll.u32 %v4999, 16
      %v5025 = vrot.slane %v5023, 1
      %v5026 = vsel %vm1172, %v5021, %v5025
      %v5028 = vshrl.u32 %v4920, 16
      %v5030 = vshll.u32 %v4920, 16
      %v5032 = vrot.slane %v5030, 1
      %v5033 = vor.u32 %v5028, %v5032
      %v5035 = vshll.u32 %v5000, 16
      %v5037 = vrot.slane %v5035, 1
      %v5038 = vsel %vm1172, %v5033, %v5037
      %v5040 = vshrl.u32 %v4921, 16
      %v5042 = vshll.u32 %v4921, 16
      %v5044 = vrot.slane %v5042, 1
      %v5045 = vor.u32 %v5040, %v5044
      %v5047 = vshll.u32 %v5001, 16
      %v5049 = vrot.slane %v5047, 1
      %v5050 = vsel %vm1172, %v5045, %v5049
      %v5052 = vshrl.u32 %v4922, 16
      %v5054 = vshll.u32 %v4922, 16
      %v5056 = vrot.slane %v5054, 1
      %v5057 = vor.u32 %v5052, %v5056
      %v5059 = vshll.u32 %v5002, 16
      %v5061 = vrot.slane %v5059, 1
      %v5062 = vsel %vm1172, %v5057, %v5061
      %v5064 = vshrl.u32 %v4923, 16
      %v5066 = vshll.u32 %v4923, 16
      %v5068 = vrot.slane %v5066, 1
      %v5069 = vor.u32 %v5064, %v5068
      %v5071 = vshll.u32 %v5003, 16
      %v5073 = vrot.slane %v5071, 1
      %v5074 = vsel %vm1172, %v5069, %v5073
      %v5076 = vshrl.u32 %v4924, 16
      %v5078 = vshll.u32 %v4924, 16
      %v5080 = vrot.slane %v5078, 1
      %v5081 = vor.u32 %v5076, %v5080
      %v5083 = vshll.u32 %v5004, 16
      %v5085 = vrot.slane %v5083, 1
      %v5086 = vsel %vm1172, %v5081, %v5085
      %v5088 = vshrl.u32 %v4925, 16
      %v5090 = vshll.u32 %v4925, 16
      %v5092 = vrot.slane %v5090, 1
      %v5093 = vor.u32 %v5088, %v5092
      %v5095 = vshll.u32 %v5005, 16
      %v5097 = vrot.slane %v5095, 1
      %v5098 = vsel %vm1172, %v5093, %v5097
      %v5100 = vshrl.u32 %v4926, 16
      %v5102 = vshll.u32 %v4926, 16
      %v5104 = vrot.slane %v5102, 1
      %v5105 = vor.u32 %v5100, %v5104
      %v5107 = vshll.u32 %v5006, 16
      %v5109 = vrot.slane %v5107, 1
      %v5110 = vsel %vm1172, %v5105, %v5109
      %v5112 = vshrl.u32 %v4927, 16
      %v5114 = vshll.u32 %v4927, 16
      %v5116 = vrot.slane %v5114, 1
      %v5117 = vor.u32 %v5112, %v5116
      %v5119 = vshll.u32 %v5007, 16
      %v5121 = vrot.slane %v5119, 1
      %v5122 = vsel %vm1172, %v5117, %v5121
      %v5124 = vshrl.u32 %v4928, 16
      %v5126 = vshll.u32 %v4928, 16
      %v5128 = vrot.slane %v5126, 1
      %v5129 = vor.u32 %v5124, %v5128
      %v5131 = vshll.u32 %v5008, 16
      %v5133 = vrot.slane %v5131, 1
      %v5134 = vsel %vm1172, %v5129, %v5133
      %v5136 = vshrl.u32 %v4929, 16
      %v5138 = vshll.u32 %v4929, 16
      %v5140 = vrot.slane %v5138, 1
      %v5141 = vor.u32 %v5136, %v5140
      %v5143 = vshll.u32 %v5009, 16
      %v5145 = vrot.slane %v5143, 1
      %v5146 = vsel %vm1172, %v5141, %v5145
      %v5148 = vshrl.u32 %v4930, 16
      %v5150 = vshll.u32 %v4930, 16
      %v5152 = vrot.slane %v5150, 1
      %v5153 = vor.u32 %v5148, %v5152
      %v5155 = vshll.u32 %v5010, 16
      %v5157 = vrot.slane %v5155, 1
      %v5158 = vsel %vm1172, %v5153, %v5157
      %v5160 = vshrl.u32 %v4931, 16
      %v5162 = vshll.u32 %v4931, 16
      %v5164 = vrot.slane %v5162, 1
      %v5165 = vor.u32 %v5160, %v5164
      %v5167 = vshll.u32 %v5011, 16
      %v5169 = vrot.slane %v5167, 1
      %v5170 = vsel %vm1172, %v5165, %v5169
      %v5172 = vshrl.u32 %v4932, 16
      %v5174 = vshll.u32 %v4932, 16
      %v5176 = vrot.slane %v5174, 1
      %v5177 = vor.u32 %v5172, %v5176
      %v5179 = vshll.u32 %v5012, 16
      %v5181 = vrot.slane %v5179, 1
      %v5182 = vsel %vm1172, %v5177, %v5181
      %v5184 = vshrl.u32 %v4933, 16
      %v5186 = vshll.u32 %v4933, 16
      %v5188 = vrot.slane %v5186, 1
      %v5189 = vor.u32 %v5184, %v5188
      %v5191 = vshll.u32 %v5013, 16
      %v5193 = vrot.slane %v5191, 1
      %v5194 = vsel %vm1172, %v5189, %v5193
      %v5196 = vshrl.u32 %v4934, 16
      %v5198 = vshll.u32 %v4934, 16
      %v5200 = vrot.slane %v5198, 1
      %v5201 = vor.u32 %v5196, %v5200
      %v5203 = vshll.u32 %v5014, 16
      %v5205 = vrot.slane %v5203, 1
      %v5206 = vsel %vm1172, %v5201, %v5205
      %5207 = vrot.lane.b32.xlu0 %v5026, 56
      %v5208 = vpop.permute.xlu0 %5207
      %5209 = vrot.lane.b32.xlu0 %v5038, 56
      %v5210 = vpop.permute.xlu0 %5209
      %5211 = vrot.lane.b32.xlu0 %v5050, 56
      %v5212 = vpop.permute.xlu0 %5211
      %5213 = vrot.lane.b32.xlu0 %v5062, 56
      %v5214 = vpop.permute.xlu0 %5213
      %5215 = vrot.lane.b32.xlu0 %v5074, 56
      %v5216 = vpop.permute.xlu0 %5215
      %5217 = vrot.lane.b32.xlu0 %v5086, 56
      %v5218 = vpop.permute.xlu0 %5217
      %5219 = vrot.lane.b32.xlu0 %v5098, 56
      %v5220 = vpop.permute.xlu0 %5219
      %5221 = vrot.lane.b32.xlu0 %v5110, 56
      %v5222 = vpop.permute.xlu0 %5221
      %5223 = vrot.lane.b32.xlu0 %v5122, 56
      %v5224 = vpop.permute.xlu0 %5223
      %5225 = vrot.lane.b32.xlu0 %v5134, 56
      %v5226 = vpop.permute.xlu0 %5225
      %5227 = vrot.lane.b32.xlu0 %v5146, 56
      %v5228 = vpop.permute.xlu0 %5227
      %5229 = vrot.lane.b32.xlu0 %v5158, 56
      %v5230 = vpop.permute.xlu0 %5229
      %5231 = vrot.lane.b32.xlu0 %v5170, 56
      %v5232 = vpop.permute.xlu0 %5231
      %5233 = vrot.lane.b32.xlu0 %v5182, 56
      %v5234 = vpop.permute.xlu0 %5233
      %5235 = vrot.lane.b32.xlu0 %v5194, 56
      %v5236 = vpop.permute.xlu0 %5235
      %5237 = vrot.lane.b32.xlu0 %v5206, 56
      %v5238 = vpop.permute.xlu0 %5237
      %v5255 = vunpack.c.l.b16 %v3847
      %v5256 = vunpack.c.l.b16 %v3848
      %v5257 = vunpack.c.l.b16 %v3849
      %v5258 = vunpack.c.l.b16 %v3850
      %v5259 = vunpack.c.l.b16 %v3851
      %v5260 = vunpack.c.l.b16 %v3852
      %v5261 = vunpack.c.l.b16 %v3853
      %v5262 = vunpack.c.l.b16 %v3854
      %v5263 = vunpack.c.l.b16 %v3855
      %v5264 = vunpack.c.l.b16 %v3856
      %v5265 = vunpack.c.l.b16 %v3857
      %v5266 = vunpack.c.l.b16 %v3858
      %v5267 = vunpack.c.l.b16 %v3859
      %v5268 = vunpack.c.l.b16 %v3860
      %v5269 = vunpack.c.l.b16 %v3861
      %v5270 = vunpack.c.l.b16 %v3862
      %v5271 = vpack.c.b16 %v4888, %v5255
      %v5272 = vpack.c.b16 %v4890, %v5256
      %v5273 = vpack.c.b16 %v4892, %v5257
      %v5274 = vpack.c.b16 %v4894, %v5258
      %v5275 = vpack.c.b16 %v4896, %v5259
      %v5276 = vpack.c.b16 %v4898, %v5260
      %v5277 = vpack.c.b16 %v4900, %v5261
      %v5278 = vpack.c.b16 %v4902, %v5262
      %v5279 = vpack.c.b16 %v4904, %v5263
      %v5280 = vpack.c.b16 %v4906, %v5264
      %v5281 = vpack.c.b16 %v4908, %v5265
      %v5282 = vpack.c.b16 %v4910, %v5266
      %v5283 = vpack.c.b16 %v4912, %v5267
      %v5284 = vpack.c.b16 %v4914, %v5268
      %v5285 = vpack.c.b16 %v4916, %v5269
      %v5286 = vpack.c.b16 %v4918, %v5270
      %v5287 = vrot.slane %v5271, 1
      %v5288 = vrot.slane %v4999, 1
      %v5289 = vsel %vm1445, %v5287, %v5288
      %v5290 = vrot.slane %v5272, 1
      %v5291 = vrot.slane %v5000, 1
      %v5292 = vsel %vm1445, %v5290, %v5291
      %v5293 = vrot.slane %v5273, 1
      %v5294 = vrot.slane %v5001, 1
      %v5295 = vsel %vm1445, %v5293, %v5294
      %v5296 = vrot.slane %v5274, 1
      %v5297 = vrot.slane %v5002, 1
      %v5298 = vsel %vm1445, %v5296, %v5297
      %v5299 = vrot.slane %v5275, 1
      %v5300 = vrot.slane %v5003, 1
      %v5301 = vsel %vm1445, %v5299, %v5300
      %v5302 = vrot.slane %v5276, 1
      %v5303 = vrot.slane %v5004, 1
      %v5304 = vsel %vm1445, %v5302, %v5303
      %v5305 = vrot.slane %v5277, 1
      %v5306 = vrot.slane %v5005, 1
      %v5307 = vsel %vm1445, %v5305, %v5306
      %v5308 = vrot.slane %v5278, 1
      %v5309 = vrot.slane %v5006, 1
      %v5310 = vsel %vm1445, %v5308, %v5309
      %v5311 = vrot.slane %v5279, 1
      %v5312 = vrot.slane %v5007, 1
      %v5313 = vsel %vm1445, %v5311, %v5312
      %v5314 = vrot.slane %v5280, 1
      %v5315 = vrot.slane %v5008, 1
      %v5316 = vsel %vm1445, %v5314, %v5315
      %v5317 = vrot.slane %v5281, 1
      %v5318 = vrot.slane %v5009, 1
      %v5319 = vsel %vm1445, %v5317, %v5318
      %v5320 = vrot.slane %v5282, 1
      %v5321 = vrot.slane %v5010, 1
      %v5322 = vsel %vm1445, %v5320, %v5321
      %v5323 = vrot.slane %v5283, 1
      %v5324 = vrot.slane %v5011, 1
      %v5325 = vsel %vm1445, %v5323, %v5324
      %v5326 = vrot.slane %v5284, 1
      %v5327 = vrot.slane %v5012, 1
      %v5328 = vsel %vm1445, %v5326, %v5327
      %v5329 = vrot.slane %v5285, 1
      %v5330 = vrot.slane %v5013, 1
      %v5331 = vsel %vm1445, %v5329, %v5330
      %v5332 = vrot.slane %v5286, 1
      %v5333 = vrot.slane %v5014, 1
      %v5334 = vsel %vm1445, %v5332, %v5333
      %5335 = vrot.lane.b32.xlu0 %v5289, 64
      %v5336 = vpop.permute.xlu0 %5335
      %5337 = vrot.lane.b32.xlu0 %v5292, 64
      %v5338 = vpop.permute.xlu0 %5337
      %5339 = vrot.lane.b32.xlu0 %v5295, 64
      %v5340 = vpop.permute.xlu0 %5339
      %5341 = vrot.lane.b32.xlu0 %v5298, 64
      %v5342 = vpop.permute.xlu0 %5341
      %5343 = vrot.lane.b32.xlu0 %v5301, 64
      %v5344 = vpop.permute.xlu0 %5343
      %5345 = vrot.lane.b32.xlu0 %v5304, 64
      %v5346 = vpop.permute.xlu0 %5345
      %5347 = vrot.lane.b32.xlu0 %v5307, 64
      %v5348 = vpop.permute.xlu0 %5347
      %5349 = vrot.lane.b32.xlu0 %v5310, 64
      %v5350 = vpop.permute.xlu0 %5349
      %5351 = vrot.lane.b32.xlu0 %v5313, 64
      %v5352 = vpop.permute.xlu0 %5351
      %5353 = vrot.lane.b32.xlu0 %v5316, 64
      %v5354 = vpop.permute.xlu0 %5353
      %5355 = vrot.lane.b32.xlu0 %v5319, 64
      %v5356 = vpop.permute.xlu0 %5355
      %5357 = vrot.lane.b32.xlu0 %v5322, 64
      %v5358 = vpop.permute.xlu0 %5357
      %5359 = vrot.lane.b32.xlu0 %v5325, 64
      %v5360 = vpop.permute.xlu0 %5359
      %5361 = vrot.lane.b32.xlu0 %v5328, 64
      %v5362 = vpop.permute.xlu0 %5361
      %5363 = vrot.lane.b32.xlu0 %v5331, 64
      %v5364 = vpop.permute.xlu0 %5363
      %5365 = vrot.lane.b32.xlu0 %v5334, 64
      %v5366 = vpop.permute.xlu0 %5365
      %v5368 = vsel %vm2550, %v3927, %v4184
      %v5370 = vsel %vm2550, %v3928, %v4186
      %v5372 = vsel %vm2550, %v3929, %v4188
      %v5374 = vsel %vm2550, %v3930, %v4190
      %v5376 = vsel %vm2550, %v3931, %v4192
      %v5378 = vsel %vm2550, %v3932, %v4194
      %v5380 = vsel %vm2550, %v3933, %v4196
      %v5382 = vsel %vm2550, %v3934, %v4198
      %v5384 = vsel %vm2550, %v3935, %v4200
      %v5386 = vsel %vm2550, %v3936, %v4202
      %v5388 = vsel %vm2550, %v3937, %v4204
      %v5390 = vsel %vm2550, %v3938, %v4206
      %v5392 = vsel %vm2550, %v3939, %v4208
      %v5394 = vsel %vm2550, %v3940, %v4210
      %v5396 = vsel %vm2550, %v3941, %v4212
      %v5398 = vsel %vm2550, %v3942, %v4214
      %v5400 = vsel %vm2583, %v5368, %v4312
      %v5402 = vsel %vm2583, %v5370, %v4314
      %v5404 = vsel %vm2583, %v5372, %v4316
      %v5406 = vsel %vm2583, %v5374, %v4318
      %v5408 = vsel %vm2583, %v5376, %v4320
      %v5410 = vsel %vm2583, %v5378, %v4322
      %v5412 = vsel %vm2583, %v5380, %v4324
      %v5414 = vsel %vm2583, %v5382, %v4326
      %v5416 = vsel %vm2583, %v5384, %v4328
      %v5418 = vsel %vm2583, %v5386, %v4330
      %v5420 = vsel %vm2583, %v5388, %v4332
      %v5422 = vsel %vm2583, %v5390, %v4334
      %v5424 = vsel %vm2583, %v5392, %v4336
      %v5426 = vsel %vm2583, %v5394, %v4338
      %v5428 = vsel %vm2583, %v5396, %v4340
      %v5430 = vsel %vm2583, %v5398, %v4342
      %v5432 = vsel %vm2616, %v5400, %v4424
      %v5434 = vsel %vm2616, %v5402, %v4426
      %v5436 = vsel %vm2616, %v5404, %v4428
      %v5438 = vsel %vm2616, %v5406, %v4430
      %v5440 = vsel %vm2616, %v5408, %v4432
      %v5442 = vsel %vm2616, %v5410, %v4434
      %v5444 = vsel %vm2616, %v5412, %v4436
      %v5446 = vsel %vm2616, %v5414, %v4438
      %v5448 = vsel %vm2616, %v5416, %v4440
      %v5450 = vsel %vm2616, %v5418, %v4442
      %v5452 = vsel %vm2616, %v5420, %v4444
      %v5454 = vsel %vm2616, %v5422, %v4446
      %v5456 = vsel %vm2616, %v5424, %v4448
      %v5458 = vsel %vm2616, %v5426, %v4450
      %v5460 = vsel %vm2616, %v5428, %v4452
      %v5462 = vsel %vm2616, %v5430, %v4454
      %v5464 = vsel %vm2649, %v5432, %v4696
      %v5466 = vsel %vm2649, %v5434, %v4698
      %v5468 = vsel %vm2649, %v5436, %v4700
      %v5470 = vsel %vm2649, %v5438, %v4702
      %v5472 = vsel %vm2649, %v5440, %v4704
      %v5474 = vsel %vm2649, %v5442, %v4706
      %v5476 = vsel %vm2649, %v5444, %v4708
      %v5478 = vsel %vm2649, %v5446, %v4710
      %v5480 = vsel %vm2649, %v5448, %v4712
      %v5482 = vsel %vm2649, %v5450, %v4714
      %v5484 = vsel %vm2649, %v5452, %v4716
      %v5486 = vsel %vm2649, %v5454, %v4718
      %v5488 = vsel %vm2649, %v5456, %v4720
      %v5490 = vsel %vm2649, %v5458, %v4722
      %v5492 = vsel %vm2649, %v5460, %v4724
      %v5494 = vsel %vm2649, %v5462, %v4726
      %v5496 = vsel %vm2682, %v5464, %v4824
      %v5498 = vsel %vm2682, %v5466, %v4826
      %v5500 = vsel %vm2682, %v5468, %v4828
      %v5502 = vsel %vm2682, %v5470, %v4830
      %v5504 = vsel %vm2682, %v5472, %v4832
      %v5506 = vsel %vm2682, %v5474, %v4834
      %v5508 = vsel %vm2682, %v5476, %v4836
      %v5510 = vsel %vm2682, %v5478, %v4838
      %v5512 = vsel %vm2682, %v5480, %v4840
      %v5514 = vsel %vm2682, %v5482, %v4842
      %v5516 = vsel %vm2682, %v5484, %v4844
      %v5518 = vsel %vm2682, %v5486, %v4846
      %v5520 = vsel %vm2682, %v5488, %v4848
      %v5522 = vsel %vm2682, %v5490, %v4850
      %v5524 = vsel %vm2682, %v5492, %v4852
      %v5526 = vsel %vm2682, %v5494, %v4854
      %v5528 = vsel %vm2715, %v5496, %v4936
      %v5530 = vsel %vm2715, %v5498, %v4938
      %v5532 = vsel %vm2715, %v5500, %v4940
      %v5534 = vsel %vm2715, %v5502, %v4942
      %v5536 = vsel %vm2715, %v5504, %v4944
      %v5538 = vsel %vm2715, %v5506, %v4946
      %v5540 = vsel %vm2715, %v5508, %v4948
      %v5542 = vsel %vm2715, %v5510, %v4950
      %v5544 = vsel %vm2715, %v5512, %v4952
      %v5546 = vsel %vm2715, %v5514, %v4954
      %v5548 = vsel %vm2715, %v5516, %v4956
      %v5550 = vsel %vm2715, %v5518, %v4958
      %v5552 = vsel %vm2715, %v5520, %v4960
      %v5554 = vsel %vm2715, %v5522, %v4962
      %v5556 = vsel %vm2715, %v5524, %v4964
      %v5558 = vsel %vm2715, %v5526, %v4966
      %v5560 = vsel %vm2748, %v5528, %v5208
      %v5562 = vsel %vm2748, %v5530, %v5210
      %v5564 = vsel %vm2748, %v5532, %v5212
      %v5566 = vsel %vm2748, %v5534, %v5214
      %v5568 = vsel %vm2748, %v5536, %v5216
      %v5570 = vsel %vm2748, %v5538, %v5218
      %v5572 = vsel %vm2748, %v5540, %v5220
      %v5574 = vsel %vm2748, %v5542, %v5222
      %v5576 = vsel %vm2748, %v5544, %v5224
      %v5578 = vsel %vm2748, %v5546, %v5226
      %v5580 = vsel %vm2748, %v5548, %v5228
      %v5582 = vsel %vm2748, %v5550, %v5230
      %v5584 = vsel %vm2748, %v5552, %v5232
      %v5586 = vsel %vm2748, %v5554, %v5234
      %v5588 = vsel %vm2748, %v5556, %v5236
      %v5590 = vsel %vm2748, %v5558, %v5238
      %v5592 = vsel %vm2781, %v5560, %v5336
      %v5594 = vsel %vm2781, %v5562, %v5338
      %v5596 = vsel %vm2781, %v5564, %v5340
      %v5598 = vsel %vm2781, %v5566, %v5342
      %v5600 = vsel %vm2781, %v5568, %v5344
      %v5602 = vsel %vm2781, %v5570, %v5346
      %v5604 = vsel %vm2781, %v5572, %v5348
      %v5606 = vsel %vm2781, %v5574, %v5350
      %v5608 = vsel %vm2781, %v5576, %v5352
      %v5610 = vsel %vm2781, %v5578, %v5354
      %v5612 = vsel %vm2781, %v5580, %v5356
      %v5614 = vsel %vm2781, %v5582, %v5358
      %v5616 = vsel %vm2781, %v5584, %v5360
      %v5618 = vsel %vm2781, %v5586, %v5362
      %v5620 = vsel %vm2781, %v5588, %v5364
      %v5622 = vsel %vm2781, %v5590, %v5366
      %v5623 = vld [vmem:[%s3] sm:$0xf]
      %v5624 = vld [vmem:[%s3 + $0x4] sm:$0xf]
      %v5625 = vld [vmem:[%s3 + $0x8] sm:$0xf]
      %v5626 = vld [vmem:[%s3 + $0xc] sm:$0xf]
      %v5627 = vld [vmem:[%s3 + $0x10] sm:$0xf]
      %v5628 = vld [vmem:[%s3 + $0x14] sm:$0xf]
      %v5629 = vld [vmem:[%s3 + $0x18] sm:$0xf]
      %v5630 = vld [vmem:[%s3 + $0x1c] sm:$0xf]
      %v5631 = vld [vmem:[%s3 + $0x20] sm:$0xf]
      %v5632 = vld [vmem:[%s4] sm:$0x1]
      %v5634 = vlaneseq
      %v5635 = vshrl.u32 %v5634, 7
      %v5636 = vsub.s32 0, %v5635
      %v5637 = vrot.slane %v5632, %v5636
      %v5648 = vunpack.c.l.b16 %v5623
      %v5649 = vunpack.c.l.b16 %v5624
      %v5650 = vunpack.c.l.b16 %v5625
      %v5651 = vunpack.c.l.b16 %v5626
      %v5652 = vunpack.c.l.b16 %v5627
      %v5653 = vunpack.c.l.b16 %v5628
      %v5654 = vunpack.c.l.b16 %v5629
      %v5655 = vunpack.c.l.b16 %v5630
      %v5656 = vunpack.c.l.b16 %v5631
      %v5657 = vpack.c.b16 %v5649, %v5648
      %v5658 = vpack.c.b16 %v5651, %v5650
      %v5659 = vpack.c.b16 %v5653, %v5652
      %v5660 = vpack.c.b16 %v5655, %v5654
      %v5661 = vpack.c.b16 %v5656, %v5656
      %v5666 = vsel %vm2857, %v5592, 0
      %v5668 = vsel %vm2857, %v5594, 0
      %v5670 = vsel %vm2857, %v5596, 0
      %v5672 = vsel %vm2857, %v5598, 0
      %v5674 = vsel %vm2857, %v5600, 0
      %v5676 = vsel %vm2857, %v5602, 0
      %v5678 = vsel %vm2857, %v5604, 0
      %v5680 = vsel %vm2857, %v5606, 0
      %v5682 = vsel %vm2857, %v5608, 0
      %v5684 = vsel %vm2857, %v5610, 0
      %v5686 = vsel %vm2857, %v5612, 0
      %v5688 = vsel %vm2857, %v5614, 0
      %v5690 = vsel %vm2857, %v5616, 0
      %v5692 = vsel %vm2857, %v5618, 0
      %v5694 = vsel %vm2857, %v5620, 0
      %v5696 = vsel %vm2857, %v5622, 0
      %v5699 = vsel %vm2890, %v5661, 0
      %5701 = vmatprep.subr.bf16.mxu0 0
      %5702 = vmatpush1.bf16.msra.mxu0 %v5657
      %5703 = vmatprep.subr.bf16.mxu0 0
      %5704 = vmatpush1.bf16.msra.mxu0 %v5658
      %5705 = vmatprep.subr.bf16.mxu0 0
      %5706 = vmatpush1.bf16.msra.mxu0 %v5659
      %5707 = vmatprep.subr.bf16.mxu0 0
      %5708 = vmatpush1.bf16.msra.mxu0 %v5660
      %5709 = vmatprep.subr.bf16.mxu0 0
      %5710 = vmatpush1.bf16.msra.mxu0 %v5699
      %5711 = vmatprep.subr.bf16.mxu0 0
      %5712 = vmatpush1.bf16.msra.mxu0 0
      %5713 = vmatprep.subr.bf16.mxu0 0
      %5714 = vmatpush1.bf16.msra.mxu0 0
      %5715 = vmatprep.subr.bf16.mxu0 0
      %5716 = vmatpush1.bf16.msra.mxu0 0
      %5717 = vmatprep.subr.bf16.mxu0 0
      %5718 = vmatpush1.bf16.msra.mxu0 0
      %5719 = vmatprep.subr.bf16.mxu0 0
      %5720 = vmatpush1.bf16.msra.mxu0 0
      %5721 = vmatprep.subr.bf16.mxu0 0
      %5722 = vmatpush1.bf16.msra.mxu0 0
      %5723 = vmatprep.subr.bf16.mxu0 0
      %5724 = vmatpush1.bf16.msra.mxu0 0
      %5725 = vmatprep.subr.bf16.mxu0 0
      %5726 = vmatpush1.bf16.msra.mxu0 0
      %5727 = vmatprep.subr.bf16.mxu0 0
      %5728 = vmatpush1.bf16.msra.mxu0 0
      %5729 = vmatprep.subr.bf16.mxu0 0
      %5730 = vmatpush1.bf16.msra.mxu0 0
      %5731 = vmatprep.subr.bf16.mxu0 0
      %5732 = vmatpush1.bf16.msra.mxu0 0
      %5733 = vmatprep.mubr.bf16.mxu0 0
      %5734 = vmatmul.mubr.bf16.gmra.mrb[0].mxu0 %v5666
      %v5735 = vpop.f32.mrb[0].mxu0
      %v5736 = vadd.f32 %v5637, %v5735
      %v5737 = vpop.f32.mrb[0].mxu0
      %v5738 = vpop.f32.mrb[0].mxu0
      %v5739 = vadd.f32 %v5637, %v5738
      %v5740 = vpop.f32.mrb[0].mxu0
      %5741 = vmatprep.mubr.bf16.mxu0 0
      %5742 = vmatmul.mubr.bf16.gmra.mrb[0].mxu0 %v5668
      %v5743 = vpop.f32.mrb[0].mxu0
      %v5744 = vadd.f32 %v5637, %v5743
      %v5745 = vpop.f32.mrb[0].mxu0
      %v5746 = vpop.f32.mrb[0].mxu0
      %v5747 = vadd.f32 %v5637, %v5746
      %v5748 = vpop.f32.mrb[0].mxu0
      %5749 = vmatprep.mubr.bf16.mxu0 0
      %5750 = vmatmul.mubr.bf16.gmra.mrb[0].mxu0 %v5670
      %v5751 = vpop.f32.mrb[0].mxu0
      %v5752 = vadd.f32 %v5637, %v5751
      %v5753 = vpop.f32.mrb[0].mxu0
      %v5754 = vpop.f32.mrb[0].mxu0
      %v5755 = vadd.f32 %v5637, %v5754
      %v5756 = vpop.f32.mrb[0].mxu0
      %5757 = vmatprep.mubr.bf16.mxu0 0
      %5758 = vmatmul.mubr.bf16.gmra.mrb[0].mxu0 %v5672
      %v5759 = vpop.f32.mrb[0].mxu0
      %v5760 = vadd.f32 %v5637, %v5759
      %v5761 = vpop.f32.mrb[0].mxu0
      %v5762 = vpop.f32.mrb[0].mxu0
      %v5763 = vadd.f32 %v5637, %v5762
      %v5764 = vpop.f32.mrb[0].mxu0
      %5765 = vmatprep.mubr.bf16.mxu0 0
      %5766 = vmatmul.mubr.bf16.gmra.mrb[0].mxu0 %v5674
      %v5767 = vpop.f32.mrb[0].mxu0
      %v5768 = vadd.f32 %v5637, %v5767
      %v5769 = vpop.f32.mrb[0].mxu0
      %v5770 = vpop.f32.mrb[0].mxu0
      %v5771 = vadd.f32 %v5637, %v5770
      %v5772 = vpop.f32.mrb[0].mxu0
      %5773 = vmatprep.mubr.bf16.mxu0 0
      %5774 = vmatmul.mubr.bf16.gmra.mrb[0].mxu0 %v5676
      %v5775 = vpop.f32.mrb[0].mxu0
      %v5776 = vadd.f32 %v5637, %v5775
      %v5777 = vpop.f32.mrb[0].mxu0
      %v5778 = vpop.f32.mrb[0].mxu0
      %v5779 = vadd.f32 %v5637, %v5778
      %v5780 = vpop.f32.mrb[0].mxu0
      %5781 = vmatprep.mubr.bf16.mxu0 0
      %5782 = vmatmul.mubr.bf16.gmra.mrb[0].mxu0 %v5678
      %v5783 = vpop.f32.mrb[0].mxu0
      %v5784 = vadd.f32 %v5637, %v5783
      %v5785 = vpop.f32.mrb[0].mxu0
      %v5786 = vpop.f32.mrb[0].mxu0
      %v5787 = vadd.f32 %v5637, %v5786
      %v5788 = vpop.f32.mrb[0].mxu0
      %5789 = vmatprep.mubr.bf16.mxu0 0
      %5790 = vmatmul.mubr.bf16.gmra.mrb[0].mxu0 %v5680
      %v5791 = vpop.f32.mrb[0].mxu0
      %v5792 = vadd.f32 %v5637, %v5791
      %v5793 = vpop.f32.mrb[0].mxu0
      %v5794 = vpop.f32.mrb[0].mxu0
      %v5795 = vadd.f32 %v5637, %v5794
      %v5796 = vpop.f32.mrb[0].mxu0
      %5797 = vmatprep.mubr.bf16.mxu0 0
      %5798 = vmatmul.mubr.bf16.gmra.mrb[0].mxu0 %v5682
      %v5799 = vpop.f32.mrb[0].mxu0
      %v5800 = vadd.f32 %v5637, %v5799
      %v5801 = vpop.f32.mrb[0].mxu0
      %v5802 = vpop.f32.mrb[0].mxu0
      %v5803 = vadd.f32 %v5637, %v5802
      %v5804 = vpop.f32.mrb[0].mxu0
      %5805 = vmatprep.mubr.bf16.mxu0 0
      %5806 = vmatmul.mubr.bf16.gmra.mrb[0].mxu0 %v5684
      %v5807 = vpop.f32.mrb[0].mxu0
      %v5808 = vadd.f32 %v5637, %v5807
      %v5809 = vpop.f32.mrb[0].mxu0
      %v5810 = vpop.f32.mrb[0].mxu0
      %v5811 = vadd.f32 %v5637, %v5810
      %v5812 = vpop.f32.mrb[0].mxu0
      %5813 = vmatprep.mubr.bf16.mxu0 0
      %5814 = vmatmul.mubr.bf16.gmra.mrb[0].mxu0 %v5686
      %v5815 = vpop.f32.mrb[0].mxu0
      %v5816 = vadd.f32 %v5637, %v5815
      %v5817 = vpop.f32.mrb[0].mxu0
      %v5818 = vpop.f32.mrb[0].mxu0
      %v5819 = vadd.f32 %v5637, %v5818
      %v5820 = vpop.f32.mrb[0].mxu0
      %5821 = vmatprep.mubr.bf16.mxu0 0
      %5822 = vmatmul.mubr.bf16.gmra.mrb[0].mxu0 %v5688
      %v5823 = vpop.f32.mrb[0].mxu0
      %v5824 = vadd.f32 %v5637, %v5823
      %v5825 = vpop.f32.mrb[0].mxu0
      %v5826 = vpop.f32.mrb[0].mxu0
      %v5827 = vadd.f32 %v5637, %v5826
      %v5828 = vpop.f32.mrb[0].mxu0
      %5829 = vmatprep.mubr.bf16.mxu0 0
      %5830 = vmatmul.mubr.bf16.gmra.mrb[0].mxu0 %v5690
      %v5831 = vpop.f32.mrb[0].mxu0
      %v5832 = vadd.f32 %v5637, %v5831
      %v5833 = vpop.f32.mrb[0].mxu0
      %v5834 = vpop.f32.mrb[0].mxu0
      %v5835 = vadd.f32 %v5637, %v5834
      %v5836 = vpop.f32.mrb[0].mxu0
      %5837 = vmatprep.mubr.bf16.mxu0 0
      %5838 = vmatmul.mubr.bf16.gmra.mrb[0].mxu0 %v5692
      %v5839 = vpop.f32.mrb[0].mxu0
      %v5840 = vadd.f32 %v5637, %v5839
      %v5841 = vpop.f32.mrb[0].mxu0
      %v5842 = vpop.f32.mrb[0].mxu0
      %v5843 = vadd.f32 %v5637, %v5842
      %v5844 = vpop.f32.mrb[0].mxu0
      %5845 = vmatprep.mubr.bf16.mxu0 0
      %5846 = vmatmul.mubr.bf16.gmra.mrb[0].mxu0 %v5694
      %v5847 = vpop.f32.mrb[0].mxu0
      %v5848 = vadd.f32 %v5637, %v5847
      %v5849 = vpop.f32.mrb[0].mxu0
      %v5850 = vpop.f32.mrb[0].mxu0
      %v5851 = vadd.f32 %v5637, %v5850
      %v5852 = vpop.f32.mrb[0].mxu0
      %5853 = vmatprep.mubr.bf16.mxu0 0
      %5854 = vmatmul.mubr.bf16.gmra.mrb[0].mxu0 %v5696
      %v5855 = vpop.f32.mrb[0].mxu0
      %v5856 = vadd.f32 %v5637, %v5855
      %v5857 = vpop.f32.mrb[0].mxu0
      %v5858 = vpop.f32.mrb[0].mxu0
      %v5859 = vadd.f32 %v5637, %v5858
      %v5860 = vpop.f32.mrb[0].mxu0
      %5861 = vdwg.mxu0
      %v5862 = vadd.f32 %v5736, %v226
      %v5863 = vadd.f32 %v5739, %v227
      %v5864 = vadd.f32 %v5744, %v228
      %v5865 = vadd.f32 %v5747, %v229
      %v5866 = vadd.f32 %v5752, %v230
      %v5867 = vadd.f32 %v5755, %v231
      %v5868 = vadd.f32 %v5760, %v232
      %v5869 = vadd.f32 %v5763, %v233
      %v5870 = vadd.f32 %v5768, %v234
      %v5871 = vadd.f32 %v5771, %v235
      %v5872 = vadd.f32 %v5776, %v236
      %v5873 = vadd.f32 %v5779, %v237
      %v5874 = vadd.f32 %v5784, %v238
      %v5875 = vadd.f32 %v5787, %v239
      %v5876 = vadd.f32 %v5792, %v240
      %v5877 = vadd.f32 %v5795, %v241
      %v5878 = vadd.f32 %v5800, %v242
      %v5879 = vadd.f32 %v5803, %v243
      %v5880 = vadd.f32 %v5808, %v244
      %v5881 = vadd.f32 %v5811, %v245
      %v5882 = vadd.f32 %v5816, %v246
      %v5883 = vadd.f32 %v5819, %v247
      %v5884 = vadd.f32 %v5824, %v248
      %v5885 = vadd.f32 %v5827, %v249
      %v5886 = vadd.f32 %v5832, %v250
      %v5887 = vadd.f32 %v5835, %v251
      %v5888 = vadd.f32 %v5840, %v252
      %v5889 = vadd.f32 %v5843, %v253
      %v5890 = vadd.f32 %v5848, %v254
      %v5891 = vadd.f32 %v5851, %v255
      %v5892 = vadd.f32 %v5856, %v256
      %v5893 = vadd.f32 %v5859, %v257
      %v5894 = vmax.f32 %v5862, 0.0
      %v5895 = vmax.f32 %v5863, 0.0
      %v5896 = vmax.f32 %v5864, 0.0
      %v5897 = vmax.f32 %v5865, 0.0
      %v5898 = vmax.f32 %v5866, 0.0
      %v5899 = vmax.f32 %v5867, 0.0
      %v5900 = vmax.f32 %v5868, 0.0
      %v5901 = vmax.f32 %v5869, 0.0
      %v5902 = vmax.f32 %v5870, 0.0
      %v5903 = vmax.f32 %v5871, 0.0
      %v5904 = vmax.f32 %v5872, 0.0
      %v5905 = vmax.f32 %v5873, 0.0
      %v5906 = vmax.f32 %v5874, 0.0
      %v5907 = vmax.f32 %v5875, 0.0
      %v5908 = vmax.f32 %v5876, 0.0
      %v5909 = vmax.f32 %v5877, 0.0
      %v5910 = vmax.f32 %v5878, 0.0
      %v5911 = vmax.f32 %v5879, 0.0
      %v5912 = vmax.f32 %v5880, 0.0
      %v5913 = vmax.f32 %v5881, 0.0
      %v5914 = vmax.f32 %v5882, 0.0
      %v5915 = vmax.f32 %v5883, 0.0
      %v5916 = vmax.f32 %v5884, 0.0
      %v5917 = vmax.f32 %v5885, 0.0
      %v5918 = vmax.f32 %v5886, 0.0
      %v5919 = vmax.f32 %v5887, 0.0
      %v5920 = vmax.f32 %v5888, 0.0
      %v5921 = vmax.f32 %v5889, 0.0
      %v5922 = vmax.f32 %v5890, 0.0
      %v5923 = vmax.f32 %v5891, 0.0
      %v5924 = vmax.f32 %v5892, 0.0
      %v5925 = vmax.f32 %v5893, 0.0
      %5926 = vst.msk [vmem:[%s224] sm:$0xff] %vm2550, %v5894
      %5927 = vst.msk [vmem:[%s224 + $0x8] sm:$0xff] %vm2550, %v5895
      %5928 = vst.msk [vmem:[%s224 + $0x10] sm:$0xff] %vm2550, %v5896
      %5929 = vst.msk [vmem:[%s224 + $0x18] sm:$0xff] %vm2550, %v5897
      %5930 = vst.msk [vmem:[%s224 + $0x20] sm:$0xff] %vm2550, %v5898
      %5931 = vst.msk [vmem:[%s224 + $0x28] sm:$0xff] %vm2550, %v5899
      %5932 = vst.msk [vmem:[%s224 + $0x30] sm:$0xff] %vm2550, %v5900
      %5933 = vst.msk [vmem:[%s224 + $0x38] sm:$0xff] %vm2550, %v5901
      %5934 = vst.msk [vmem:[%s224 + $0x40] sm:$0xff] %vm2550, %v5902
      %5935 = vst.msk [vmem:[%s224 + $0x48] sm:$0xff] %vm2550, %v5903
      %5936 = vst.msk [vmem:[%s224 + $0x50] sm:$0xff] %vm2550, %v5904
      %5937 = vst.msk [vmem:[%s224 + $0x58] sm:$0xff] %vm2550, %v5905
      %5938 = vst.msk [vmem:[%s224 + $0x60] sm:$0xff] %vm2550, %v5906
      %5939 = vst.msk [vmem:[%s224 + $0x68] sm:$0xff] %vm2550, %v5907
      %5940 = vst.msk [vmem:[%s224 + $0x70] sm:$0xff] %vm2550, %v5908
      %5941 = vst.msk [vmem:[%s224 + $0x78] sm:$0xff] %vm2550, %v5909
      %5942 = vst.msk [vmem:[%s224 + $0x80] sm:$0xff] %vm2550, %v5910
      %5943 = vst.msk [vmem:[%s224 + $0x88] sm:$0xff] %vm2550, %v5911
      %5944 = vst.msk [vmem:[%s224 + $0x90] sm:$0xff] %vm2550, %v5912
      %5945 = vst.msk [vmem:[%s224 + $0x98] sm:$0xff] %vm2550, %v5913
      %5946 = vst.msk [vmem:[%s224 + $0xa0] sm:$0xff] %vm2550, %v5914
      %5947 = vst.msk [vmem:[%s224 + $0xa8] sm:$0xff] %vm2550, %v5915
      %5948 = vst.msk [vmem:[%s224 + $0xb0] sm:$0xff] %vm2550, %v5916
      %5949 = vst.msk [vmem:[%s224 + $0xb8] sm:$0xff] %vm2550, %v5917
      %5950 = vst.msk [vmem:[%s224 + $0xc0] sm:$0xff] %vm2550, %v5918
      %5951 = vst.msk [vmem:[%s224 + $0xc8] sm:$0xff] %vm2550, %v5919
      %5952 = vst.msk [vmem:[%s224 + $0xd0] sm:$0xff] %vm2550, %v5920
      %5953 = vst.msk [vmem:[%s224 + $0xd8] sm:$0xff] %vm2550, %v5921
      %5954 = vst.msk [vmem:[%s224 + $0xe0] sm:$0xff] %vm2550, %v5922
      %5955 = vst.msk [vmem:[%s224 + $0xe8] sm:$0xff] %vm2550, %v5923
      %5956 = vst.msk [vmem:[%s224 + $0xf0] sm:$0xff] %vm2550, %v5924
      %5957 = vst.msk [vmem:[%s224 + $0xf8] sm:$0xff] %vm2550, %v5925
      %p5958 = scmp.lt.s32.totalorder %s16, 1
      %s5959 = scalar_select %p5958, %s16, 1
      %s5960 = smul.addr %s5959, 32
      %s5961 = smul.addr %s5960, 8
      %s5962 = scalar_lea.vmem %s5, %s5961
      // Predicated region
      $region41: #{tpu_custom_call.1} parent=39 // pred_check
        %p5963 = pneg %p144
      $region42: #{tpu_custom_call.1} parent=39 // pred_check_branch
        %5965 = sbr.rel (%p5963) target = $region44
      $region43: #{tpu_custom_call.1} parent=39 // pred_region
        _
      $region44: #{tpu_custom_call.1} parent=39 // pred_fallthru
        _
    $region40: #{tpu_custom_call.1} parent=5 // pred_fallthru
      _
    %p5966 = scmp.le.s32.totalorder 2, %s11
    // Predicated region
    $region45: #{tpu_custom_call.1} parent=5 // pred_check
      %p5967 = pneg %p5966
    $region46: #{tpu_custom_call.1} parent=5 // pred_check_branch
      %5969 = sbr.rel (%p5967) target = $region48
    $region47: #{tpu_custom_call.1} parent=5 // pred_region
      %s5970 = ssub.s32 %s11, 2
      // Predicated region
      $region49: #{tpu_custom_call.1} parent=47 // pred_check
        %p5971 = pneg %p150
      $region50: #{tpu_custom_call.1} parent=47 // pred_check_branch
        %5973 = sbr.rel (%p5971) target = $region52
      $region51: #{tpu_custom_call.1} parent=47 // pred_region
        %p5974 = scmp.lt.s32.totalorder %s17, 1
        %s5975 = scalar_select %p5974, %s17, 1
        %s5976 = smul.addr %s5975, 32
        %s5977 = smul.addr %s5976, 8
        %s5978 = scalar_lea.vmem %s5, %s5977
      $region52: #{tpu_custom_call.1} parent=47 // pred_fallthru
        _
    $region48: #{tpu_custom_call.1} parent=5 // pred_fallthru
      _
  $region6: #{tpu_custom_call.1} parent=0 // loop_footer
    %s15 = sadd.s32 1, %s11
  $region7: #{tpu_custom_call.1} parent=0 // loop_footer_branch
    %10 = sbr.rel target = $region3
  $region8: #{tpu_custom_call.1} parent=0 // loop_exit
    _

</llo_original>
